<compile_context>
chip_gen: v7x
topology: tpu7x:2x2x1
jax: 0.10.0
libtpu: 0.0.40
codegen_flags: <defaults>
</compile_context>

<pallas_src>
import functools

import jax
import jax.numpy as jnp
from jax import lax
from jax.experimental import pallas as pl
from jax.experimental.pallas import tpu as pltpu


# ----------------------------------------------------------------------------
# Pallas kernel: one fused bidirectional GRU layer (+ optional fc-tanh head)
# ----------------------------------------------------------------------------
def _bigru_layer_kernel(*refs, seq_len, batch, hidden, with_head):
    """Fused bidirectional GRU layer.

    refs (with_head=False):
      x_ref     : (T*B, In)   flattened layer input (row t*B + b  <->  (t, b))
      wif/wib   : (In, 3H)    input weights per direction (gates r|z|n)
      bif/bib   : (1, 3H)     b_ih with b_hr/b_hz pre-folded in
      whhf/whhb : (H, 3H)     hidden weights per direction
      bhnf/bhnb : (1, H)      hidden n-gate bias (must stay in recurrence)
      out_ref   : (T*B, 2H)   output, [:, :H]=fwd hidden, [:, H:]=bwd hidden
      gxf/gxb   : (T*B, 3H)   VMEM scratch for the hoisted input projection
    refs (with_head=True) additionally:
      fcwf/fcwb : (H, D)      fc weight split for fwd/bwd halves of hcat
      fcb       : (1, D)
      hid_ref   : (B, D)      tanh(fc(hcat)) output
    """
    if with_head:
        (x_ref, wif_ref, wib_ref, bif_ref, bib_ref,
         whhf_ref, whhb_ref, bhnf_ref, bhnb_ref,
         fcwf_ref, fcwb_ref, fcb_ref,
         out_ref, hid_ref,
         gxf_scr, gxb_scr) = refs
    else:
        (x_ref, wif_ref, wib_ref, bif_ref, bib_ref,
         whhf_ref, whhb_ref, bhnf_ref, bhnb_ref,
         out_ref,
         gxf_scr, gxb_scr) = refs

    T, B, H = seq_len, batch, hidden

    # --- Phase 1: hoisted input projection (one big matmul per direction).
    x = x_ref[...]                                              # (T*B, In)
    gxf_scr[...] = (jnp.dot(x, wif_ref[...],
                            preferred_element_type=jnp.float32) + bif_ref[...])
    gxb_scr[...] = (jnp.dot(x, wib_ref[...],
                            preferred_element_type=jnp.float32) + bib_ref[...])

    w_hh_f = whhf_ref[...]
    w_hh_b = whhb_ref[...]
    b_hn_f = bhnf_ref[...]
    b_hn_b = bhnb_ref[...]

    def gru_step(gx, h_prev, w_hh, b_hn):
        gh = jnp.dot(h_prev, w_hh, preferred_element_type=jnp.float32)  # (B,3H)
        r = jax.nn.sigmoid(gx[:, 0 * H:1 * H] + gh[:, 0 * H:1 * H])
        z = jax.nn.sigmoid(gx[:, 1 * H:2 * H] + gh[:, 1 * H:2 * H])
        n = jnp.tanh(gx[:, 2 * H:3 * H] + r * (gh[:, 2 * H:3 * H] + b_hn))
        return (1.0 - z) * n + z * h_prev

    h_f = jnp.zeros((B, H), jnp.float32)
    h_b = jnp.zeros((B, H), jnp.float32)

    # --- Phase 2: sequential recurrence, both directions per iteration.
    # T is small & static -> fully unrolled; all slice indices are static and
    # the backward direction reads/writes reversed time without any flips.
    for i in range(T):
        tb = T - 1 - i
        h_f = gru_step(gxf_scr[i * B:(i + 1) * B, :], h_f, w_hh_f, b_hn_f)
        h_b = gru_step(gxb_scr[tb * B:(tb + 1) * B, :], h_b, w_hh_b, b_hn_b)
        out_ref[i * B:(i + 1) * B, 0:H] = h_f
        out_ref[tb * B:(tb + 1) * B, H:2 * H] = h_b
    # TODO(synk): for long sequences, chunk T on a grid axis with a
    # lax.fori_loop inside the chunk and carry h in VMEM scratch; on v7x the
    # two directions could additionally be split across the 2 TensorCores.

    # --- Phase 3 (last layer only): hidden = tanh(cat(h_f, h_b) @ fc_w + b),
    # done as two matmuls on the already-split fc weights (no concat needed).
    if with_head:
        hid = (jnp.dot(h_f, fcwf_ref[...], preferred_element_type=jnp.float32)
               + jnp.dot(h_b, fcwb_ref[...], preferred_element_type=jnp.float32)
               + fcb_ref[...])
        hid_ref[...] = jnp.tanh(hid)


# ----------------------------------------------------------------------------
# Wrappers
# ----------------------------------------------------------------------------
def bigru_layer(x2d, layer_params, *, seq_len, batch, head=None):
    """Run one fused bidirectional GRU layer.

    x2d: (T*B, In) float32 (row t*B + b  <->  timestep t, batch b).
    Returns (T*B, 2H), plus (B, D) head output if `head=(fc_w, fc_b)` given.
    """
    w_ih_f, w_hh_f, b_ih_f, b_hh_f = layer_params["fwd"]
    w_ih_b, w_hh_b, b_ih_b, b_hh_b = layer_params["bwd"]
    H = w_hh_f.shape[0]
    TB = x2d.shape[0]

    # Pre-fold the hidden-side r/z biases into the projection bias; only the
    # n-gate hidden bias must remain inside the recurrence (PyTorch formula).
    bif = b_ih_f.at[:, :2 * H].add(b_hh_f[:, :2 * H])
    bib = b_ih_b.at[:, :2 * H].add(b_hh_b[:, :2 * H])
    bhn_f = b_hh_f[:, 2 * H:]
    bhn_b = b_hh_b[:, 2 * H:]

    inputs = [x2d, w_ih_f, w_ih_b, bif, bib, w_hh_f, w_hh_b, bhn_f, bhn_b]
    out_shape = jax.ShapeDtypeStruct((TB, 2 * H), jnp.float32)
    with_head = head is not None
    if with_head:
        fc_w, fc_b = head
        D = fc_w.shape[1]
        inputs += [fc_w[:H, :], fc_w[H:, :], fc_b]
        out_shape = (out_shape, jax.ShapeDtypeStruct((batch, D), jnp.float32))

    vspec = pl.BlockSpec(memory_space=pltpu.MemorySpace.VMEM)
    kernel = functools.partial(_bigru_layer_kernel, seq_len=seq_len,
                               batch=batch, hidden=H, with_head=with_head)
    return pl.pallas_call(
        kernel,
        out_shape=out_shape,
        in_specs=[vspec] * len(inputs),
        out_specs=(vspec, vspec) if with_head else vspec,
        scratch_shapes=[pltpu.VMEM((TB, 3 * H), jnp.float32),
                        pltpu.VMEM((TB, 3 * H), jnp.float32)],
    )(*inputs)


def encoder_bigru_forward(params, x, num_layers):
    """Pallas implementation of EncoderBiGRU.forward.

    x: (T, B, input_size).  Returns (outputs (T,B,2H), hidden (B,dec_hidden)).
    """
    T, B, In = x.shape
    Bp = ((B + 7) // 8) * 8            # pad batch to f32 sublane multiple (8)
    if Bp != B:
        x = jnp.pad(x, ((0, 0), (0, Bp - B), (0, 0)))
    x2d = x.reshape(T * Bp, In)

    hidden_p = None
    for l in range(num_layers):
        is_last = l == num_layers - 1
        head = (params["fc_w"], params["fc_b"]) if is_last else None
        res = bigru_layer(x2d, params["layers"][l], seq_len=T, batch=Bp,
                          head=head)
        if is_last:
            x2d, hidden_p = res
        else:
            x2d = res
        # TODO(synk): nn.GRU inter-layer dropout applies only in training mode;
        # omitted here (eval semantics, dropout is identity).

    H2 = x2d.shape[-1]
    outputs = x2d.reshape(T, Bp, H2)[:, :B, :]   # (T, B, 2H), fwd || bwd
    hidden = hidden_p[:B, :]                     # (B, dec_hidden)
    return outputs, hidden


# ----------------------------------------------------------------------------
# Deterministic parameter init (shapes per nn.GRU / nn.Linear, transposed)
# ----------------------------------------------------------------------------
def init_params(key, input_size, hidden_size, num_layers, dec_hidden_size):
    scale = 1.0 / float(hidden_size) ** 0.5
    keys = iter(jax.random.split(key, num_layers * 2 * 4 + 2))

    def u(shape):
        return jax.random.uniform(next(keys), shape, jnp.float32, -scale, scale)

    layers = []
    for l in range(num_layers):
        in_dim = input_size if l == 0 else 2 * hidden_size
        layer = {}
        for d in ("fwd", "bwd"):
            w_ih = u((in_dim, 3 * hidden_size))       # stored transposed
            w_hh = u((hidden_size, 3 * hidden_size))  # stored transposed
            b_ih = u((1, 3 * hidden_size))
            b_hh = u((1, 3 * hidden_size))
            layer[d] = (w_ih, w_hh, b_ih, b_hh)
        layers.append(layer)

    fc_w = u((2 * hidden_size, dec_hidden_size))      # stored transposed
    fc_b = u((1, dec_hidden_size))
    return {"layers": layers, "fc_w": fc_w, "fc_b": fc_b}


# ----------------------------------------------------------------------------
# Pure-JAX reference (same math) for a correctness check
# ----------------------------------------------------------------------------
def _gru_dir_ref(x, w_ih, w_hh, b_ih, b_hh):
    T, B, _ = x.shape
    H = w_hh.shape[0]

    def step(h, x_t):
        gx = x_t @ w_ih + b_ih[0]
        gh = h @ w_hh + b_hh[0]
        r = jax.nn.sigmoid(gx[:, :H] + gh[:, :H])
        z = jax.nn.sigmoid(gx[:, H:2 * H] + gh[:, H:2 * H])
        n = jnp.tanh(gx[:, 2 * H:] + r * gh[:, 2 * H:])
        h_new = (1.0 - z) * n + z * h
        return h_new, h_new

    _, ys = lax.scan(step, jnp.zeros((B, H), jnp.float32), x)
    return ys


def encoder_bigru_ref(params, x, num_layers):
    layer_in = x
    out_f = out_b = None
    for l in range(num_layers):
        out_f = _gru_dir_ref(layer_in, *params["layers"][l]["fwd"])
        out_b = jnp.flip(_gru_dir_ref(jnp.flip(layer_in, 0),
                                      *params["layers"][l]["bwd"]), 0)
        layer_in = jnp.concatenate([out_f, out_b], axis=-1)
    hcat = jnp.concatenate([out_f[-1], out_b[0]], axis=-1)
    hidden = jnp.tanh(hcat @ params["fc_w"] + params["fc_b"][0])
    return layer_in, hidden


# ----------------------------------------------------------------------------
if __name__ == "__main__":
    config = {"input_size": 16, "hidden_size": 32, "num_layers": 2,
              "dropout": 0.1}
    dec_hidden_size = 32
    T, B = 8, 2

    key = jax.random.PRNGKey(0)
    k_param, k_x = jax.random.split(key)
    params = init_params(k_param, config["input_size"], config["hidden_size"],
                         config["num_layers"], dec_hidden_size)
    x = jax.random.normal(k_x, (T, B, config["input_size"]), jnp.float32)

    fwd = jax.jit(functools.partial(encoder_bigru_forward,
                                    num_layers=config["num_layers"]))
    outputs, hidden = fwd(params, x)
    jax.block_until_ready((outputs, hidden))

    # Sanity check against the pure-JAX reference.
    ref_outputs, ref_hidden = encoder_bigru_ref(params, x,
                                                config["num_layers"])
    assert outputs.shape == (T, B, 2 * config["hidden_size"])
    assert hidden.shape == (B, dec_hidden_size)
    assert jnp.allclose(outputs, ref_outputs, atol=1e-3, rtol=1e-3)
    assert jnp.allclose(hidden, ref_hidden, atol=1e-3, rtol=1e-3)

    print("KERNEL_OK")
</pallas_src>

<mosaic_0001>
module attributes {stable_mosaic.version = 11 : i64} {
  func.func @_bigru_layer_kernel(%arg0: memref<64x16xf32, #tpu.memory_space<vmem>>, %arg1: memref<16x96xf32, #tpu.memory_space<vmem>>, %arg2: memref<16x96xf32, #tpu.memory_space<vmem>>, %arg3: memref<1x96xf32, #tpu.memory_space<vmem>>, %arg4: memref<1x96xf32, #tpu.memory_space<vmem>>, %arg5: memref<32x96xf32, #tpu.memory_space<vmem>>, %arg6: memref<32x96xf32, #tpu.memory_space<vmem>>, %arg7: memref<1x32xf32, #tpu.memory_space<vmem>>, %arg8: memref<1x32xf32, #tpu.memory_space<vmem>>, %arg9: memref<64x64xf32, #tpu.memory_space<vmem>>, %arg10: memref<64x96xf32, #tpu.memory_space<vmem>>, %arg11: memref<64x96xf32, #tpu.memory_space<vmem>>) attributes {dimension_semantics = [], scalar_prefetch = 0 : i64, scratch_operands = 2 : i64, tpu.core_type = #tpu.core_type<tc>} {
    %c0 = arith.constant 0 : index
    %c0_0 = arith.constant 0 : index
    %0 = vector.load %arg0[%c0, %c0_0] : memref<64x16xf32, #tpu.memory_space<vmem>>, vector<64x16xf32>
    %c0_1 = arith.constant 0 : index
    %c0_2 = arith.constant 0 : index
    %1 = vector.load %arg1[%c0_1, %c0_2] : memref<16x96xf32, #tpu.memory_space<vmem>>, vector<16x96xf32>
    %cst = arith.constant dense<0.000000e+00> : vector<64x96xf32>
    %2 = tpu.matmul %0, %1, %cst {dimension_numbers = #tpu.dot_dimension_numbers<[1], [0], [0], [1], [0, 0, 1, 1], [], []>} : vector<64x16xf32>, vector<16x96xf32>, vector<64x96xf32> -> vector<64x96xf32>
    %c0_3 = arith.constant 0 : index
    %c0_4 = arith.constant 0 : index
    %3 = vector.load %arg3[%c0_3, %c0_4] : memref<1x96xf32, #tpu.memory_space<vmem>>, vector<1x96xf32>
    %4 = vector.broadcast %3 : vector<1x96xf32> to vector<64x96xf32>
    %5 = arith.addf %2, %4 : vector<64x96xf32>
    %c0_5 = arith.constant 0 : index
    %c0_6 = arith.constant 0 : index
    %6 = vector.load %arg10[%c0_5, %c0_6] : memref<64x96xf32, #tpu.memory_space<vmem>>, vector<64x96xf32>
    tpu.vector_store %arg10[%c0_5, %c0_6], %5 {strides = array<i32>} : memref<64x96xf32, #tpu.memory_space<vmem>>, vector<64x96xf32>,
    %c0_7 = arith.constant 0 : index
    %c0_8 = arith.constant 0 : index
    %7 = vector.load %arg2[%c0_7, %c0_8] : memref<16x96xf32, #tpu.memory_space<vmem>>, vector<16x96xf32>
    %cst_9 = arith.constant dense<0.000000e+00> : vector<64x96xf32>
    %8 = tpu.matmul %0, %7, %cst_9 {dimension_numbers = #tpu.dot_dimension_numbers<[1], [0], [0], [1], [0, 0, 1, 1], [], []>} : vector<64x16xf32>, vector<16x96xf32>, vector<64x96xf32> -> vector<64x96xf32>
    %c0_10 = arith.constant 0 : index
    %c0_11 = arith.constant 0 : index
    %9 = vector.load %arg4[%c0_10, %c0_11] : memref<1x96xf32, #tpu.memory_space<vmem>>, vector<1x96xf32>
    %10 = vector.broadcast %9 : vector<1x96xf32> to vector<64x96xf32>
    %11 = arith.addf %8, %10 : vector<64x96xf32>
    %c0_12 = arith.constant 0 : index
    %c0_13 = arith.constant 0 : index
    %12 = vector.load %arg11[%c0_12, %c0_13] : memref<64x96xf32, #tpu.memory_space<vmem>>, vector<64x96xf32>
    tpu.vector_store %arg11[%c0_12, %c0_13], %11 {strides = array<i32>} : memref<64x96xf32, #tpu.memory_space<vmem>>, vector<64x96xf32>,
    %c0_14 = arith.constant 0 : index
    %c0_15 = arith.constant 0 : index
    %13 = vector.load %arg5[%c0_14, %c0_15] : memref<32x96xf32, #tpu.memory_space<vmem>>, vector<32x96xf32>
    %c0_16 = arith.constant 0 : index
    %c0_17 = arith.constant 0 : index
    %14 = vector.load %arg6[%c0_16, %c0_17] : memref<32x96xf32, #tpu.memory_space<vmem>>, vector<32x96xf32>
    %c0_18 = arith.constant 0 : index
    %c0_19 = arith.constant 0 : index
    %15 = vector.load %arg7[%c0_18, %c0_19] : memref<1x32xf32, #tpu.memory_space<vmem>>, vector<1x32xf32>
    %c0_20 = arith.constant 0 : index
    %c0_21 = arith.constant 0 : index
    %16 = vector.load %arg8[%c0_20, %c0_21] : memref<1x32xf32, #tpu.memory_space<vmem>>, vector<1x32xf32>
    %cst_22 = arith.constant 0.000000e+00 : f32
    %17 = vector.broadcast %cst_22 : f32 to vector<8x32xf32>
    %cst_23 = arith.constant 0.000000e+00 : f32
    %18 = vector.broadcast %cst_23 : f32 to vector<8x32xf32>
    %c0_24 = arith.constant 0 : index
    %c0_25 = arith.constant 0 : index
    %19 = vector.load %arg10[%c0_24, %c0_25] : memref<64x96xf32, #tpu.memory_space<vmem>>, vector<8x96xf32>
    %cst_26 = arith.constant dense<0.000000e+00> : vector<8x96xf32>
    %20 = tpu.matmul %17, %13, %cst_26 {dimension_numbers = #tpu.dot_dimension_numbers<[1], [0], [0], [1], [0, 0, 1, 1], [], []>} : vector<8x32xf32>, vector<32x96xf32>, vector<8x96xf32> -> vector<8x96xf32>
    %21 = vector.extract_strided_slice %19 {offsets = [0, 0], sizes = [8, 32], strides = [1, 1]} : vector<8x96xf32> to vector<8x32xf32>
    %22 = vector.extract_strided_slice %20 {offsets = [0, 0], sizes = [8, 32], strides = [1, 1]} : vector<8x96xf32> to vector<8x32xf32>
    %23 = arith.addf %21, %22 : vector<8x32xf32>
    %24 = arith.negf %23 : vector<8x32xf32>
    %25 = math.exp %24 : vector<8x32xf32>
    %cst_27 = arith.constant 1.000000e+00 : f32
    %26 = vector.broadcast %cst_27 : f32 to vector<8x32xf32>
    %27 = arith.addf %26, %25 : vector<8x32xf32>
    %28 = arith.divf %26, %27 : vector<8x32xf32>
    %29 = vector.extract_strided_slice %19 {offsets = [0, 32], sizes = [8, 32], strides = [1, 1]} : vector<8x96xf32> to vector<8x32xf32>
    %30 = vector.extract_strided_slice %20 {offsets = [0, 32], sizes = [8, 32], strides = [1, 1]} : vector<8x96xf32> to vector<8x32xf32>
    %31 = arith.addf %29, %30 : vector<8x32xf32>
    %32 = arith.negf %31 : vector<8x32xf32>
    %33 = math.exp %32 : vector<8x32xf32>
    %cst_28 = arith.constant 1.000000e+00 : f32
    %34 = vector.broadcast %cst_28 : f32 to vector<8x32xf32>
    %35 = arith.addf %34, %33 : vector<8x32xf32>
    %36 = arith.divf %34, %35 : vector<8x32xf32>
    %37 = vector.extract_strided_slice %19 {offsets = [0, 64], sizes = [8, 32], strides = [1, 1]} : vector<8x96xf32> to vector<8x32xf32>
    %38 = vector.extract_strided_slice %20 {offsets = [0, 64], sizes = [8, 32], strides = [1, 1]} : vector<8x96xf32> to vector<8x32xf32>
    %39 = vector.broadcast %15 : vector<1x32xf32> to vector<8x32xf32>
    %40 = arith.addf %38, %39 : vector<8x32xf32>
    %41 = arith.mulf %28, %40 : vector<8x32xf32>
    %42 = arith.addf %37, %41 : vector<8x32xf32>
    %43 = math.tanh %42 : vector<8x32xf32>
    %cst_29 = arith.constant 1.000000e+00 : f32
    %44 = vector.broadcast %cst_29 : f32 to vector<8x32xf32>
    %45 = arith.subf %44, %36 : vector<8x32xf32>
    %46 = arith.mulf %45, %43 : vector<8x32xf32>
    %47 = arith.mulf %36, %17 : vector<8x32xf32>
    %48 = arith.addf %46, %47 : vector<8x32xf32>
    %c56 = arith.constant 56 : index
    %c0_30 = arith.constant 0 : index
    %49 = vector.load %arg11[%c56, %c0_30] : memref<64x96xf32, #tpu.memory_space<vmem>>, vector<8x96xf32>
    %cst_31 = arith.constant dense<0.000000e+00> : vector<8x96xf32>
    %50 = tpu.matmul %18, %14, %cst_31 {dimension_numbers = #tpu.dot_dimension_numbers<[1], [0], [0], [1], [0, 0, 1, 1], [], []>} : vector<8x32xf32>, vector<32x96xf32>, vector<8x96xf32> -> vector<8x96xf32>
    %51 = vector.extract_strided_slice %49 {offsets = [0, 0], sizes = [8, 32], strides = [1, 1]} : vector<8x96xf32> to vector<8x32xf32>
    %52 = vector.extract_strided_slice %50 {offsets = [0, 0], sizes = [8, 32], strides = [1, 1]} : vector<8x96xf32> to vector<8x32xf32>
    %53 = arith.addf %51, %52 : vector<8x32xf32>
    %54 = arith.negf %53 : vector<8x32xf32>
    %55 = math.exp %54 : vector<8x32xf32>
    %cst_32 = arith.constant 1.000000e+00 : f32
    %56 = vector.broadcast %cst_32 : f32 to vector<8x32xf32>
    %57 = arith.addf %56, %55 : vector<8x32xf32>
    %58 = arith.divf %56, %57 : vector<8x32xf32>
    %59 = vector.extract_strided_slice %49 {offsets = [0, 32], sizes = [8, 32], strides = [1, 1]} : vector<8x96xf32> to vector<8x32xf32>
    %60 = vector.extract_strided_slice %50 {offsets = [0, 32], sizes = [8, 32], strides = [1, 1]} : vector<8x96xf32> to vector<8x32xf32>
    %61 = arith.addf %59, %60 : vector<8x32xf32>
    %62 = arith.negf %61 : vector<8x32xf32>
    %63 = math.exp %62 : vector<8x32xf32>
    %cst_33 = arith.constant 1.000000e+00 : f32
    %64 = vector.broadcast %cst_33 : f32 to vector<8x32xf32>
    %65 = arith.addf %64, %63 : vector<8x32xf32>
    %66 = arith.divf %64, %65 : vector<8x32xf32>
    %67 = vector.extract_strided_slice %49 {offsets = [0, 64], sizes = [8, 32], strides = [1, 1]} : vector<8x96xf32> to vector<8x32xf32>
    %68 = vector.extract_strided_slice %50 {offsets = [0, 64], sizes = [8, 32], strides = [1, 1]} : vector<8x96xf32> to vector<8x32xf32>
    %69 = vector.broadcast %16 : vector<1x32xf32> to vector<8x32xf32>
    %70 = arith.addf %68, %69 : vector<8x32xf32>
    %71 = arith.mulf %58, %70 : vector<8x32xf32>
    %72 = arith.addf %67, %71 : vector<8x32xf32>
    %73 = math.tanh %72 : vector<8x32xf32>
    %cst_34 = arith.constant 1.000000e+00 : f32
    %74 = vector.broadcast %cst_34 : f32 to vector<8x32xf32>
    %75 = arith.subf %74, %66 : vector<8x32xf32>
    %76 = arith.mulf %75, %73 : vector<8x32xf32>
    %77 = arith.mulf %66, %18 : vector<8x32xf32>
    %78 = arith.addf %76, %77 : vector<8x32xf32>
    %c0_35 = arith.constant 0 : index
    %c0_36 = arith.constant 0 : index
    %79 = vector.load %arg9[%c0_35, %c0_36] : memref<64x64xf32, #tpu.memory_space<vmem>>, vector<8x32xf32>
    tpu.vector_store %arg9[%c0_35, %c0_36], %48 {strides = array<i32>} : memref<64x64xf32, #tpu.memory_space<vmem>>, vector<8x32xf32>,
    %c56_37 = arith.constant 56 : index
    %c32 = arith.constant 32 : index
    %80 = vector.load %arg9[%c56_37, %c32] : memref<64x64xf32, #tpu.memory_space<vmem>>, vector<8x32xf32>
    tpu.vector_store %arg9[%c56_37, %c32], %78 {strides = array<i32>} : memref<64x64xf32, #tpu.memory_space<vmem>>, vector<8x32xf32>,
    %c8 = arith.constant 8 : index
    %c0_38 = arith.constant 0 : index
    %81 = vector.load %arg10[%c8, %c0_38] : memref<64x96xf32, #tpu.memory_space<vmem>>, vector<8x96xf32>
    %cst_39 = arith.constant dense<0.000000e+00> : vector<8x96xf32>
    %82 = tpu.matmul %48, %13, %cst_39 {dimension_numbers = #tpu.dot_dimension_numbers<[1], [0], [0], [1], [0, 0, 1, 1], [], []>} : vector<8x32xf32>, vector<32x96xf32>, vector<8x96xf32> -> vector<8x96xf32>
    %83 = vector.extract_strided_slice %81 {offsets = [0, 0], sizes = [8, 32], strides = [1, 1]} : vector<8x96xf32> to vector<8x32xf32>
    %84 = vector.extract_strided_slice %82 {offsets = [0, 0], sizes = [8, 32], strides = [1, 1]} : vector<8x96xf32> to vector<8x32xf32>
    %85 = arith.addf %83, %84 : vector<8x32xf32>
    %86 = arith.negf %85 : vector<8x32xf32>
    %87 = math.exp %86 : vector<8x32xf32>
    %cst_40 = arith.constant 1.000000e+00 : f32
    %88 = vector.broadcast %cst_40 : f32 to vector<8x32xf32>
    %89 = arith.addf %88, %87 : vector<8x32xf32>
    %90 = arith.divf %88, %89 : vector<8x32xf32>
    %91 = vector.extract_strided_slice %81 {offsets = [0, 32], sizes = [8, 32], strides = [1, 1]} : vector<8x96xf32> to vector<8x32xf32>
    %92 = vector.extract_strided_slice %82 {offsets = [0, 32], sizes = [8, 32], strides = [1, 1]} : vector<8x96xf32> to vector<8x32xf32>
    %93 = arith.addf %91, %92 : vector<8x32xf32>
    %94 = arith.negf %93 : vector<8x32xf32>
    %95 = math.exp %94 : vector<8x32xf32>
    %cst_41 = arith.constant 1.000000e+00 : f32
    %96 = vector.broadcast %cst_41 : f32 to vector<8x32xf32>
    %97 = arith.addf %96, %95 : vector<8x32xf32>
    %98 = arith.divf %96, %97 : vector<8x32xf32>
    %99 = vector.extract_strided_slice %81 {offsets = [0, 64], sizes = [8, 32], strides = [1, 1]} : vector<8x96xf32> to vector<8x32xf32>
    %100 = vector.extract_strided_slice %82 {offsets = [0, 64], sizes = [8, 32], strides = [1, 1]} : vector<8x96xf32> to vector<8x32xf32>
    %101 = vector.broadcast %15 : vector<1x32xf32> to vector<8x32xf32>
    %102 = arith.addf %100, %101 : vector<8x32xf32>
    %103 = arith.mulf %90, %102 : vector<8x32xf32>
    %104 = arith.addf %99, %103 : vector<8x32xf32>
    %105 = math.tanh %104 : vector<8x32xf32>
    %cst_42 = arith.constant 1.000000e+00 : f32
    %106 = vector.broadcast %cst_42 : f32 to vector<8x32xf32>
    %107 = arith.subf %106, %98 : vector<8x32xf32>
    %108 = arith.mulf %107, %105 : vector<8x32xf32>
    %109 = arith.mulf %98, %48 : vector<8x32xf32>
    %110 = arith.addf %108, %109 : vector<8x32xf32>
    %c48 = arith.constant 48 : index
    %c0_43 = arith.constant 0 : index
    %111 = vector.load %arg11[%c48, %c0_43] : memref<64x96xf32, #tpu.memory_space<vmem>>, vector<8x96xf32>
    %cst_44 = arith.constant dense<0.000000e+00> : vector<8x96xf32>
    %112 = tpu.matmul %78, %14, %cst_44 {dimension_numbers = #tpu.dot_dimension_numbers<[1], [0], [0], [1], [0, 0, 1, 1], [], []>} : vector<8x32xf32>, vector<32x96xf32>, vector<8x96xf32> -> vector<8x96xf32>
    %113 = vector.extract_strided_slice %111 {offsets = [0, 0], sizes = [8, 32], strides = [1, 1]} : vector<8x96xf32> to vector<8x32xf32>
    %114 = vector.extract_strided_slice %112 {offsets = [0, 0], sizes = [8, 32], strides = [1, 1]} : vector<8x96xf32> to vector<8x32xf32>
    %115 = arith.addf %113, %114 : vector<8x32xf32>
    %116 = arith.negf %115 : vector<8x32xf32>
    %117 = math.exp %116 : vector<8x32xf32>
    %cst_45 = arith.constant 1.000000e+00 : f32
    %118 = vector.broadcast %cst_45 : f32 to vector<8x32xf32>
    %119 = arith.addf %118, %117 : vector<8x32xf32>
    %120 = arith.divf %118, %119 : vector<8x32xf32>
    %121 = vector.extract_strided_slice %111 {offsets = [0, 32], sizes = [8, 32], strides = [1, 1]} : vector<8x96xf32> to vector<8x32xf32>
    %122 = vector.extract_strided_slice %112 {offsets = [0, 32], sizes = [8, 32], strides = [1, 1]} : vector<8x96xf32> to vector<8x32xf32>
    %123 = arith.addf %121, %122 : vector<8x32xf32>
    %124 = arith.negf %123 : vector<8x32xf32>
    %125 = math.exp %124 : vector<8x32xf32>
    %cst_46 = arith.constant 1.000000e+00 : f32
    %126 = vector.broadcast %cst_46 : f32 to vector<8x32xf32>
    %127 = arith.addf %126, %125 : vector<8x32xf32>
    %128 = arith.divf %126, %127 : vector<8x32xf32>
    %129 = vector.extract_strided_slice %111 {offsets = [0, 64], sizes = [8, 32], strides = [1, 1]} : vector<8x96xf32> to vector<8x32xf32>
    %130 = vector.extract_strided_slice %112 {offsets = [0, 64], sizes = [8, 32], strides = [1, 1]} : vector<8x96xf32> to vector<8x32xf32>
    %131 = vector.broadcast %16 : vector<1x32xf32> to vector<8x32xf32>
    %132 = arith.addf %130, %131 : vector<8x32xf32>
    %133 = arith.mulf %120, %132 : vector<8x32xf32>
    %134 = arith.addf %129, %133 : vector<8x32xf32>
    %135 = math.tanh %134 : vector<8x32xf32>
    %cst_47 = arith.constant 1.000000e+00 : f32
    %136 = vector.broadcast %cst_47 : f32 to vector<8x32xf32>
    %137 = arith.subf %136, %128 : vector<8x32xf32>
    %138 = arith.mulf %137, %135 : vector<8x32xf32>
    %139 = arith.mulf %128, %78 : vector<8x32xf32>
    %140 = arith.addf %138, %139 : vector<8x32xf32>
    %c8_48 = arith.constant 8 : index
    %c0_49 = arith.constant 0 : index
    %141 = vector.load %arg9[%c8_48, %c0_49] : memref<64x64xf32, #tpu.memory_space<vmem>>, vector<8x32xf32>
    tpu.vector_store %arg9[%c8_48, %c0_49], %110 {strides = array<i32>} : memref<64x64xf32, #tpu.memory_space<vmem>>, vector<8x32xf32>,
    %c48_50 = arith.constant 48 : index
    %c32_51 = arith.constant 32 : index
    %142 = vector.load %arg9[%c48_50, %c32_51] : memref<64x64xf32, #tpu.memory_space<vmem>>, vector<8x32xf32>
    tpu.vector_store %arg9[%c48_50, %c32_51], %140 {strides = array<i32>} : memref<64x64xf32, #tpu.memory_space<vmem>>, vector<8x32xf32>,
    %c16 = arith.constant 16 : index
    %c0_52 = arith.constant 0 : index
    %143 = vector.load %arg10[%c16, %c0_52] : memref<64x96xf32, #tpu.memory_space<vmem>>, vector<8x96xf32>
    %cst_53 = arith.constant dense<0.000000e+00> : vector<8x96xf32>
    %144 = tpu.matmul %110, %13, %cst_53 {dimension_numbers = #tpu.dot_dimension_numbers<[1], [0], [0], [1], [0, 0, 1, 1], [], []>} : vector<8x32xf32>, vector<32x96xf32>, vector<8x96xf32> -> vector<8x96xf32>
    %145 = vector.extract_strided_slice %143 {offsets = [0, 0], sizes = [8, 32], strides = [1, 1]} : vector<8x96xf32> to vector<8x32xf32>
    %146 = vector.extract_strided_slice %144 {offsets = [0, 0], sizes = [8, 32], strides = [1, 1]} : vector<8x96xf32> to vector<8x32xf32>
    %147 = arith.addf %145, %146 : vector<8x32xf32>
    %148 = arith.negf %147 : vector<8x32xf32>
    %149 = math.exp %148 : vector<8x32xf32>
    %cst_54 = arith.constant 1.000000e+00 : f32
    %150 = vector.broadcast %cst_54 : f32 to vector<8x32xf32>
    %151 = arith.addf %150, %149 : vector<8x32xf32>
    %152 = arith.divf %150, %151 : vector<8x32xf32>
    %153 = vector.extract_strided_slice %143 {offsets = [0, 32], sizes = [8, 32], strides = [1, 1]} : vector<8x96xf32> to vector<8x32xf32>
    %154 = vector.extract_strided_slice %144 {offsets = [0, 32], sizes = [8, 32], strides = [1, 1]} : vector<8x96xf32> to vector<8x32xf32>
    %155 = arith.addf %153, %154 : vector<8x32xf32>
    %156 = arith.negf %155 : vector<8x32xf32>
    %157 = math.exp %156 : vector<8x32xf32>
    %cst_55 = arith.constant 1.000000e+00 : f32
    %158 = vector.broadcast %cst_55 : f32 to vector<8x32xf32>
    %159 = arith.addf %158, %157 : vector<8x32xf32>
    %160 = arith.divf %158, %159 : vector<8x32xf32>
    %161 = vector.extract_strided_slice %143 {offsets = [0, 64], sizes = [8, 32], strides = [1, 1]} : vector<8x96xf32> to vector<8x32xf32>
    %162 = vector.extract_strided_slice %144 {offsets = [0, 64], sizes = [8, 32], strides = [1, 1]} : vector<8x96xf32> to vector<8x32xf32>
    %163 = vector.broadcast %15 : vector<1x32xf32> to vector<8x32xf32>
    %164 = arith.addf %162, %163 : vector<8x32xf32>
    %165 = arith.mulf %152, %164 : vector<8x32xf32>
    %166 = arith.addf %161, %165 : vector<8x32xf32>
    %167 = math.tanh %166 : vector<8x32xf32>
    %cst_56 = arith.constant 1.000000e+00 : f32
    %168 = vector.broadcast %cst_56 : f32 to vector<8x32xf32>
    %169 = arith.subf %168, %160 : vector<8x32xf32>
    %170 = arith.mulf %169, %167 : vector<8x32xf32>
    %171 = arith.mulf %160, %110 : vector<8x32xf32>
    %172 = arith.addf %170, %171 : vector<8x32xf32>
    %c40 = arith.constant 40 : index
    %c0_57 = arith.constant 0 : index
    %173 = vector.load %arg11[%c40, %c0_57] : memref<64x96xf32, #tpu.memory_space<vmem>>, vector<8x96xf32>
    %cst_58 = arith.constant dense<0.000000e+00> : vector<8x96xf32>
    %174 = tpu.matmul %140, %14, %cst_58 {dimension_numbers = #tpu.dot_dimension_numbers<[1], [0], [0], [1], [0, 0, 1, 1], [], []>} : vector<8x32xf32>, vector<32x96xf32>, vector<8x96xf32> -> vector<8x96xf32>
    %175 = vector.extract_strided_slice %173 {offsets = [0, 0], sizes = [8, 32], strides = [1, 1]} : vector<8x96xf32> to vector<8x32xf32>
    %176 = vector.extract_strided_slice %174 {offsets = [0, 0], sizes = [8, 32], strides = [1, 1]} : vector<8x96xf32> to vector<8x32xf32>
    %177 = arith.addf %175, %176 : vector<8x32xf32>
    %178 = arith.negf %177 : vector<8x32xf32>
    %179 = math.exp %178 : vector<8x32xf32>
    %cst_59 = arith.constant 1.000000e+00 : f32
    %180 = vector.broadcast %cst_59 : f32 to vector<8x32xf32>
    %181 = arith.addf %180, %179 : vector<8x32xf32>
    %182 = arith.divf %180, %181 : vector<8x32xf32>
    %183 = vector.extract_strided_slice %173 {offsets = [0, 32], sizes = [8, 32], strides = [1, 1]} : vector<8x96xf32> to vector<8x32xf32>
    %184 = vector.extract_strided_slice %174 {offsets = [0, 32], sizes = [8, 32], strides = [1, 1]} : vector<8x96xf32> to vector<8x32xf32>
    %185 = arith.addf %183, %184 : vector<8x32xf32>
    %186 = arith.negf %185 : vector<8x32xf32>
    %187 = math.exp %186 : vector<8x32xf32>
    %cst_60 = arith.constant 1.000000e+00 : f32
    %188 = vector.broadcast %cst_60 : f32 to vector<8x32xf32>
    %189 = arith.addf %188, %187 : vector<8x32xf32>
    %190 = arith.divf %188, %189 : vector<8x32xf32>
    %191 = vector.extract_strided_slice %173 {offsets = [0, 64], sizes = [8, 32], strides = [1, 1]} : vector<8x96xf32> to vector<8x32xf32>
    %192 = vector.extract_strided_slice %174 {offsets = [0, 64], sizes = [8, 32], strides = [1, 1]} : vector<8x96xf32> to vector<8x32xf32>
    %193 = vector.broadcast %16 : vector<1x32xf32> to vector<8x32xf32>
    %194 = arith.addf %192, %193 : vector<8x32xf32>
    %195 = arith.mulf %182, %194 : vector<8x32xf32>
    %196 = arith.addf %191, %195 : vector<8x32xf32>
    %197 = math.tanh %196 : vector<8x32xf32>
    %cst_61 = arith.constant 1.000000e+00 : f32
    %198 = vector.broadcast %cst_61 : f32 to vector<8x32xf32>
    %199 = arith.subf %198, %190 : vector<8x32xf32>
    %200 = arith.mulf %199, %197 : vector<8x32xf32>
    %201 = arith.mulf %190, %140 : vector<8x32xf32>
    %202 = arith.addf %200, %201 : vector<8x32xf32>
    %c16_62 = arith.constant 16 : index
    %c0_63 = arith.constant 0 : index
    %203 = vector.load %arg9[%c16_62, %c0_63] : memref<64x64xf32, #tpu.memory_space<vmem>>, vector<8x32xf32>
    tpu.vector_store %arg9[%c16_62, %c0_63], %172 {strides = array<i32>} : memref<64x64xf32, #tpu.memory_space<vmem>>, vector<8x32xf32>,
    %c40_64 = arith.constant 40 : index
    %c32_65 = arith.constant 32 : index
    %204 = vector.load %arg9[%c40_64, %c32_65] : memref<64x64xf32, #tpu.memory_space<vmem>>, vector<8x32xf32>
    tpu.vector_store %arg9[%c40_64, %c32_65], %202 {strides = array<i32>} : memref<64x64xf32, #tpu.memory_space<vmem>>, vector<8x32xf32>,
    %c24 = arith.constant 24 : index
    %c0_66 = arith.constant 0 : index
    %205 = vector.load %arg10[%c24, %c0_66] : memref<64x96xf32, #tpu.memory_space<vmem>>, vector<8x96xf32>
    %cst_67 = arith.constant dense<0.000000e+00> : vector<8x96xf32>
    %206 = tpu.matmul %172, %13, %cst_67 {dimension_numbers = #tpu.dot_dimension_numbers<[1], [0], [0], [1], [0, 0, 1, 1], [], []>} : vector<8x32xf32>, vector<32x96xf32>, vector<8x96xf32> -> vector<8x96xf32>
    %207 = vector.extract_strided_slice %205 {offsets = [0, 0], sizes = [8, 32], strides = [1, 1]} : vector<8x96xf32> to vector<8x32xf32>
    %208 = vector.extract_strided_slice %206 {offsets = [0, 0], sizes = [8, 32], strides = [1, 1]} : vector<8x96xf32> to vector<8x32xf32>
    %209 = arith.addf %207, %208 : vector<8x32xf32>
    %210 = arith.negf %209 : vector<8x32xf32>
    %211 = math.exp %210 : vector<8x32xf32>
    %cst_68 = arith.constant 1.000000e+00 : f32
    %212 = vector.broadcast %cst_68 : f32 to vector<8x32xf32>
    %213 = arith.addf %212, %211 : vector<8x32xf32>
    %214 = arith.divf %212, %213 : vector<8x32xf32>
    %215 = vector.extract_strided_slice %205 {offsets = [0, 32], sizes = [8, 32], strides = [1, 1]} : vector<8x96xf32> to vector<8x32xf32>
    %216 = vector.extract_strided_slice %206 {offsets = [0, 32], sizes = [8, 32], strides = [1, 1]} : vector<8x96xf32> to vector<8x32xf32>
    %217 = arith.addf %215, %216 : vector<8x32xf32>
    %218 = arith.negf %217 : vector<8x32xf32>
    %219 = math.exp %218 : vector<8x32xf32>
    %cst_69 = arith.constant 1.000000e+00 : f32
    %220 = vector.broadcast %cst_69 : f32 to vector<8x32xf32>
    %221 = arith.addf %220, %219 : vector<8x32xf32>
    %222 = arith.divf %220, %221 : vector<8x32xf32>
    %223 = vector.extract_strided_slice %205 {offsets = [0, 64], sizes = [8, 32], strides = [1, 1]} : vector<8x96xf32> to vector<8x32xf32>
    %224 = vector.extract_strided_slice %206 {offsets = [0, 64], sizes = [8, 32], strides = [1, 1]} : vector<8x96xf32> to vector<8x32xf32>
    %225 = vector.broadcast %15 : vector<1x32xf32> to vector<8x32xf32>
    %226 = arith.addf %224, %225 : vector<8x32xf32>
    %227 = arith.mulf %214, %226 : vector<8x32xf32>
    %228 = arith.addf %223, %227 : vector<8x32xf32>
    %229 = math.tanh %228 : vector<8x32xf32>
    %cst_70 = arith.constant 1.000000e+00 : f32
    %230 = vector.broadcast %cst_70 : f32 to vector<8x32xf32>
    %231 = arith.subf %230, %222 : vector<8x32xf32>
    %232 = arith.mulf %231, %229 : vector<8x32xf32>
    %233 = arith.mulf %222, %172 : vector<8x32xf32>
    %234 = arith.addf %232, %233 : vector<8x32xf32>
    %c32_71 = arith.constant 32 : index
    %c0_72 = arith.constant 0 : index
    %235 = vector.load %arg11[%c32_71, %c0_72] : memref<64x96xf32, #tpu.memory_space<vmem>>, vector<8x96xf32>
    %cst_73 = arith.constant dense<0.000000e+00> : vector<8x96xf32>
    %236 = tpu.matmul %202, %14, %cst_73 {dimension_numbers = #tpu.dot_dimension_numbers<[1], [0], [0], [1], [0, 0, 1, 1], [], []>} : vector<8x32xf32>, vector<32x96xf32>, vector<8x96xf32> -> vector<8x96xf32>
    %237 = vector.extract_strided_slice %235 {offsets = [0, 0], sizes = [8, 32], strides = [1, 1]} : vector<8x96xf32> to vector<8x32xf32>
    %238 = vector.extract_strided_slice %236 {offsets = [0, 0], sizes = [8, 32], strides = [1, 1]} : vector<8x96xf32> to vector<8x32xf32>
    %239 = arith.addf %237, %238 : vector<8x32xf32>
    %240 = arith.negf %239 : vector<8x32xf32>
    %241 = math.exp %240 : vector<8x32xf32>
    %cst_74 = arith.constant 1.000000e+00 : f32
    %242 = vector.broadcast %cst_74 : f32 to vector<8x32xf32>
    %243 = arith.addf %242, %241 : vector<8x32xf32>
    %244 = arith.divf %242, %243 : vector<8x32xf32>
    %245 = vector.extract_strided_slice %235 {offsets = [0, 32], sizes = [8, 32], strides = [1, 1]} : vector<8x96xf32> to vector<8x32xf32>
    %246 = vector.extract_strided_slice %236 {offsets = [0, 32], sizes = [8, 32], strides = [1, 1]} : vector<8x96xf32> to vector<8x32xf32>
    %247 = arith.addf %245, %246 : vector<8x32xf32>
    %248 = arith.negf %247 : vector<8x32xf32>
    %249 = math.exp %248 : vector<8x32xf32>
    %cst_75 = arith.constant 1.000000e+00 : f32
    %250 = vector.broadcast %cst_75 : f32 to vector<8x32xf32>
    %251 = arith.addf %250, %249 : vector<8x32xf32>
    %252 = arith.divf %250, %251 : vector<8x32xf32>
    %253 = vector.extract_strided_slice %235 {offsets = [0, 64], sizes = [8, 32], strides = [1, 1]} : vector<8x96xf32> to vector<8x32xf32>
    %254 = vector.extract_strided_slice %236 {offsets = [0, 64], sizes = [8, 32], strides = [1, 1]} : vector<8x96xf32> to vector<8x32xf32>
    %255 = vector.broadcast %16 : vector<1x32xf32> to vector<8x32xf32>
    %256 = arith.addf %254, %255 : vector<8x32xf32>
    %257 = arith.mulf %244, %256 : vector<8x32xf32>
    %258 = arith.addf %253, %257 : vector<8x32xf32>
    %259 = math.tanh %258 : vector<8x32xf32>
    %cst_76 = arith.constant 1.000000e+00 : f32
    %260 = vector.broadcast %cst_76 : f32 to vector<8x32xf32>
    %261 = arith.subf %260, %252 : vector<8x32xf32>
    %262 = arith.mulf %261, %259 : vector<8x32xf32>
    %263 = arith.mulf %252, %202 : vector<8x32xf32>
    %264 = arith.addf %262, %263 : vector<8x32xf32>
    %c24_77 = arith.constant 24 : index
    %c0_78 = arith.constant 0 : index
    %265 = vector.load %arg9[%c24_77, %c0_78] : memref<64x64xf32, #tpu.memory_space<vmem>>, vector<8x32xf32>
    tpu.vector_store %arg9[%c24_77, %c0_78], %234 {strides = array<i32>} : memref<64x64xf32, #tpu.memory_space<vmem>>, vector<8x32xf32>,
    %c32_79 = arith.constant 32 : index
    %c32_80 = arith.constant 32 : index
    %266 = vector.load %arg9[%c32_79, %c32_80] : memref<64x64xf32, #tpu.memory_space<vmem>>, vector<8x32xf32>
    tpu.vector_store %arg9[%c32_79, %c32_80], %264 {strides = array<i32>} : memref<64x64xf32, #tpu.memory_space<vmem>>, vector<8x32xf32>,
    %c32_81 = arith.constant 32 : index
    %c0_82 = arith.constant 0 : index
    %267 = vector.load %arg10[%c32_81, %c0_82] : memref<64x96xf32, #tpu.memory_space<vmem>>, vector<8x96xf32>
    %cst_83 = arith.constant dense<0.000000e+00> : vector<8x96xf32>
    %268 = tpu.matmul %234, %13, %cst_83 {dimension_numbers = #tpu.dot_dimension_numbers<[1], [0], [0], [1], [0, 0, 1, 1], [], []>} : vector<8x32xf32>, vector<32x96xf32>, vector<8x96xf32> -> vector<8x96xf32>
    %269 = vector.extract_strided_slice %267 {offsets = [0, 0], sizes = [8, 32], strides = [1, 1]} : vector<8x96xf32> to vector<8x32xf32>
    %270 = vector.extract_strided_slice %268 {offsets = [0, 0], sizes = [8, 32], strides = [1, 1]} : vector<8x96xf32> to vector<8x32xf32>
    %271 = arith.addf %269, %270 : vector<8x32xf32>
    %272 = arith.negf %271 : vector<8x32xf32>
    %273 = math.exp %272 : vector<8x32xf32>
    %cst_84 = arith.constant 1.000000e+00 : f32
    %274 = vector.broadcast %cst_84 : f32 to vector<8x32xf32>
    %275 = arith.addf %274, %273 : vector<8x32xf32>
    %276 = arith.divf %274, %275 : vector<8x32xf32>
    %277 = vector.extract_strided_slice %267 {offsets = [0, 32], sizes = [8, 32], strides = [1, 1]} : vector<8x96xf32> to vector<8x32xf32>
    %278 = vector.extract_strided_slice %268 {offsets = [0, 32], sizes = [8, 32], strides = [1, 1]} : vector<8x96xf32> to vector<8x32xf32>
    %279 = arith.addf %277, %278 : vector<8x32xf32>
    %280 = arith.negf %279 : vector<8x32xf32>
    %281 = math.exp %280 : vector<8x32xf32>
    %cst_85 = arith.constant 1.000000e+00 : f32
    %282 = vector.broadcast %cst_85 : f32 to vector<8x32xf32>
    %283 = arith.addf %282, %281 : vector<8x32xf32>
    %284 = arith.divf %282, %283 : vector<8x32xf32>
    %285 = vector.extract_strided_slice %267 {offsets = [0, 64], sizes = [8, 32], strides = [1, 1]} : vector<8x96xf32> to vector<8x32xf32>
    %286 = vector.extract_strided_slice %268 {offsets = [0, 64], sizes = [8, 32], strides = [1, 1]} : vector<8x96xf32> to vector<8x32xf32>
    %287 = vector.broadcast %15 : vector<1x32xf32> to vector<8x32xf32>
    %288 = arith.addf %286, %287 : vector<8x32xf32>
    %289 = arith.mulf %276, %288 : vector<8x32xf32>
    %290 = arith.addf %285, %289 : vector<8x32xf32>
    %291 = math.tanh %290 : vector<8x32xf32>
    %cst_86 = arith.constant 1.000000e+00 : f32
    %292 = vector.broadcast %cst_86 : f32 to vector<8x32xf32>
    %293 = arith.subf %292, %284 : vector<8x32xf32>
    %294 = arith.mulf %293, %291 : vector<8x32xf32>
    %295 = arith.mulf %284, %234 : vector<8x32xf32>
    %296 = arith.addf %294, %295 : vector<8x32xf32>
    %c24_87 = arith.constant 24 : index
    %c0_88 = arith.constant 0 : index
    %297 = vector.load %arg11[%c24_87, %c0_88] : memref<64x96xf32, #tpu.memory_space<vmem>>, vector<8x96xf32>
    %cst_89 = arith.constant dense<0.000000e+00> : vector<8x96xf32>
    %298 = tpu.matmul %264, %14, %cst_89 {dimension_numbers = #tpu.dot_dimension_numbers<[1], [0], [0], [1], [0, 0, 1, 1], [], []>} : vector<8x32xf32>, vector<32x96xf32>, vector<8x96xf32> -> vector<8x96xf32>
    %299 = vector.extract_strided_slice %297 {offsets = [0, 0], sizes = [8, 32], strides = [1, 1]} : vector<8x96xf32> to vector<8x32xf32>
    %300 = vector.extract_strided_slice %298 {offsets = [0, 0], sizes = [8, 32], strides = [1, 1]} : vector<8x96xf32> to vector<8x32xf32>
    %301 = arith.addf %299, %300 : vector<8x32xf32>
    %302 = arith.negf %301 : vector<8x32xf32>
    %303 = math.exp %302 : vector<8x32xf32>
    %cst_90 = arith.constant 1.000000e+00 : f32
    %304 = vector.broadcast %cst_90 : f32 to vector<8x32xf32>
    %305 = arith.addf %304, %303 : vector<8x32xf32>
    %306 = arith.divf %304, %305 : vector<8x32xf32>
    %307 = vector.extract_strided_slice %297 {offsets = [0, 32], sizes = [8, 32], strides = [1, 1]} : vector<8x96xf32> to vector<8x32xf32>
    %308 = vector.extract_strided_slice %298 {offsets = [0, 32], sizes = [8, 32], strides = [1, 1]} : vector<8x96xf32> to vector<8x32xf32>
    %309 = arith.addf %307, %308 : vector<8x32xf32>
    %310 = arith.negf %309 : vector<8x32xf32>
    %311 = math.exp %310 : vector<8x32xf32>
    %cst_91 = arith.constant 1.000000e+00 : f32
    %312 = vector.broadcast %cst_91 : f32 to vector<8x32xf32>
    %313 = arith.addf %312, %311 : vector<8x32xf32>
    %314 = arith.divf %312, %313 : vector<8x32xf32>
    %315 = vector.extract_strided_slice %297 {offsets = [0, 64], sizes = [8, 32], strides = [1, 1]} : vector<8x96xf32> to vector<8x32xf32>
    %316 = vector.extract_strided_slice %298 {offsets = [0, 64], sizes = [8, 32], strides = [1, 1]} : vector<8x96xf32> to vector<8x32xf32>
    %317 = vector.broadcast %16 : vector<1x32xf32> to vector<8x32xf32>
    %318 = arith.addf %316, %317 : vector<8x32xf32>
    %319 = arith.mulf %306, %318 : vector<8x32xf32>
    %320 = arith.addf %315, %319 : vector<8x32xf32>
    %321 = math.tanh %320 : vector<8x32xf32>
    %cst_92 = arith.constant 1.000000e+00 : f32
    %322 = vector.broadcast %cst_92 : f32 to vector<8x32xf32>
    %323 = arith.subf %322, %314 : vector<8x32xf32>
    %324 = arith.mulf %323, %321 : vector<8x32xf32>
    %325 = arith.mulf %314, %264 : vector<8x32xf32>
    %326 = arith.addf %324, %325 : vector<8x32xf32>
    %c32_93 = arith.constant 32 : index
    %c0_94 = arith.constant 0 : index
    %327 = vector.load %arg9[%c32_93, %c0_94] : memref<64x64xf32, #tpu.memory_space<vmem>>, vector<8x32xf32>
    tpu.vector_store %arg9[%c32_93, %c0_94], %296 {strides = array<i32>} : memref<64x64xf32, #tpu.memory_space<vmem>>, vector<8x32xf32>,
    %c24_95 = arith.constant 24 : index
    %c32_96 = arith.constant 32 : index
    %328 = vector.load %arg9[%c24_95, %c32_96] : memref<64x64xf32, #tpu.memory_space<vmem>>, vector<8x32xf32>
    tpu.vector_store %arg9[%c24_95, %c32_96], %326 {strides = array<i32>} : memref<64x64xf32, #tpu.memory_space<vmem>>, vector<8x32xf32>,
    %c40_97 = arith.constant 40 : index
    %c0_98 = arith.constant 0 : index
    %329 = vector.load %arg10[%c40_97, %c0_98] : memref<64x96xf32, #tpu.memory_space<vmem>>, vector<8x96xf32>
    %cst_99 = arith.constant dense<0.000000e+00> : vector<8x96xf32>
    %330 = tpu.matmul %296, %13, %cst_99 {dimension_numbers = #tpu.dot_dimension_numbers<[1], [0], [0], [1], [0, 0, 1, 1], [], []>} : vector<8x32xf32>, vector<32x96xf32>, vector<8x96xf32> -> vector<8x96xf32>
    %331 = vector.extract_strided_slice %329 {offsets = [0, 0], sizes = [8, 32], strides = [1, 1]} : vector<8x96xf32> to vector<8x32xf32>
    %332 = vector.extract_strided_slice %330 {offsets = [0, 0], sizes = [8, 32], strides = [1, 1]} : vector<8x96xf32> to vector<8x32xf32>
    %333 = arith.addf %331, %332 : vector<8x32xf32>
    %334 = arith.negf %333 : vector<8x32xf32>
    %335 = math.exp %334 : vector<8x32xf32>
    %cst_100 = arith.constant 1.000000e+00 : f32
    %336 = vector.broadcast %cst_100 : f32 to vector<8x32xf32>
    %337 = arith.addf %336, %335 : vector<8x32xf32>
    %338 = arith.divf %336, %337 : vector<8x32xf32>
    %339 = vector.extract_strided_slice %329 {offsets = [0, 32], sizes = [8, 32], strides = [1, 1]} : vector<8x96xf32> to vector<8x32xf32>
    %340 = vector.extract_strided_slice %330 {offsets = [0, 32], sizes = [8, 32], strides = [1, 1]} : vector<8x96xf32> to vector<8x32xf32>
    %341 = arith.addf %339, %340 : vector<8x32xf32>
    %342 = arith.negf %341 : vector<8x32xf32>
    %343 = math.exp %342 : vector<8x32xf32>
    %cst_101 = arith.constant 1.000000e+00 : f32
    %344 = vector.broadcast %cst_101 : f32 to vector<8x32xf32>
    %345 = arith.addf %344, %343 : vector<8x32xf32>
    %346 = arith.divf %344, %345 : vector<8x32xf32>
    %347 = vector.extract_strided_slice %329 {offsets = [0, 64], sizes = [8, 32], strides = [1, 1]} : vector<8x96xf32> to vector<8x32xf32>
    %348 = vector.extract_strided_slice %330 {offsets = [0, 64], sizes = [8, 32], strides = [1, 1]} : vector<8x96xf32> to vector<8x32xf32>
    %349 = vector.broadcast %15 : vector<1x32xf32> to vector<8x32xf32>
    %350 = arith.addf %348, %349 : vector<8x32xf32>
    %351 = arith.mulf %338, %350 : vector<8x32xf32>
    %352 = arith.addf %347, %351 : vector<8x32xf32>
    %353 = math.tanh %352 : vector<8x32xf32>
    %cst_102 = arith.constant 1.000000e+00 : f32
    %354 = vector.broadcast %cst_102 : f32 to vector<8x32xf32>
    %355 = arith.subf %354, %346 : vector<8x32xf32>
    %356 = arith.mulf %355, %353 : vector<8x32xf32>
    %357 = arith.mulf %346, %296 : vector<8x32xf32>
    %358 = arith.addf %356, %357 : vector<8x32xf32>
    %c16_103 = arith.constant 16 : index
    %c0_104 = arith.constant 0 : index
    %359 = vector.load %arg11[%c16_103, %c0_104] : memref<64x96xf32, #tpu.memory_space<vmem>>, vector<8x96xf32>
    %cst_105 = arith.constant dense<0.000000e+00> : vector<8x96xf32>
    %360 = tpu.matmul %326, %14, %cst_105 {dimension_numbers = #tpu.dot_dimension_numbers<[1], [0], [0], [1], [0, 0, 1, 1], [], []>} : vector<8x32xf32>, vector<32x96xf32>, vector<8x96xf32> -> vector<8x96xf32>
    %361 = vector.extract_strided_slice %359 {offsets = [0, 0], sizes = [8, 32], strides = [1, 1]} : vector<8x96xf32> to vector<8x32xf32>
    %362 = vector.extract_strided_slice %360 {offsets = [0, 0], sizes = [8, 32], strides = [1, 1]} : vector<8x96xf32> to vector<8x32xf32>
    %363 = arith.addf %361, %362 : vector<8x32xf32>
    %364 = arith.negf %363 : vector<8x32xf32>
    %365 = math.exp %364 : vector<8x32xf32>
    %cst_106 = arith.constant 1.000000e+00 : f32
    %366 = vector.broadcast %cst_106 : f32 to vector<8x32xf32>
    %367 = arith.addf %366, %365 : vector<8x32xf32>
    %368 = arith.divf %366, %367 : vector<8x32xf32>
    %369 = vector.extract_strided_slice %359 {offsets = [0, 32], sizes = [8, 32], strides = [1, 1]} : vector<8x96xf32> to vector<8x32xf32>
    %370 = vector.extract_strided_slice %360 {offsets = [0, 32], sizes = [8, 32], strides = [1, 1]} : vector<8x96xf32> to vector<8x32xf32>
    %371 = arith.addf %369, %370 : vector<8x32xf32>
    %372 = arith.negf %371 : vector<8x32xf32>
    %373 = math.exp %372 : vector<8x32xf32>
    %cst_107 = arith.constant 1.000000e+00 : f32
    %374 = vector.broadcast %cst_107 : f32 to vector<8x32xf32>
    %375 = arith.addf %374, %373 : vector<8x32xf32>
    %376 = arith.divf %374, %375 : vector<8x32xf32>
    %377 = vector.extract_strided_slice %359 {offsets = [0, 64], sizes = [8, 32], strides = [1, 1]} : vector<8x96xf32> to vector<8x32xf32>
    %378 = vector.extract_strided_slice %360 {offsets = [0, 64], sizes = [8, 32], strides = [1, 1]} : vector<8x96xf32> to vector<8x32xf32>
    %379 = vector.broadcast %16 : vector<1x32xf32> to vector<8x32xf32>
    %380 = arith.addf %378, %379 : vector<8x32xf32>
    %381 = arith.mulf %368, %380 : vector<8x32xf32>
    %382 = arith.addf %377, %381 : vector<8x32xf32>
    %383 = math.tanh %382 : vector<8x32xf32>
    %cst_108 = arith.constant 1.000000e+00 : f32
    %384 = vector.broadcast %cst_108 : f32 to vector<8x32xf32>
    %385 = arith.subf %384, %376 : vector<8x32xf32>
    %386 = arith.mulf %385, %383 : vector<8x32xf32>
    %387 = arith.mulf %376, %326 : vector<8x32xf32>
    %388 = arith.addf %386, %387 : vector<8x32xf32>
    %c40_109 = arith.constant 40 : index
    %c0_110 = arith.constant 0 : index
    %389 = vector.load %arg9[%c40_109, %c0_110] : memref<64x64xf32, #tpu.memory_space<vmem>>, vector<8x32xf32>
    tpu.vector_store %arg9[%c40_109, %c0_110], %358 {strides = array<i32>} : memref<64x64xf32, #tpu.memory_space<vmem>>, vector<8x32xf32>,
    %c16_111 = arith.constant 16 : index
    %c32_112 = arith.constant 32 : index
    %390 = vector.load %arg9[%c16_111, %c32_112] : memref<64x64xf32, #tpu.memory_space<vmem>>, vector<8x32xf32>
    tpu.vector_store %arg9[%c16_111, %c32_112], %388 {strides = array<i32>} : memref<64x64xf32, #tpu.memory_space<vmem>>, vector<8x32xf32>,
    %c48_113 = arith.constant 48 : index
    %c0_114 = arith.constant 0 : index
    %391 = vector.load %arg10[%c48_113, %c0_114] : memref<64x96xf32, #tpu.memory_space<vmem>>, vector<8x96xf32>
    %cst_115 = arith.constant dense<0.000000e+00> : vector<8x96xf32>
    %392 = tpu.matmul %358, %13, %cst_115 {dimension_numbers = #tpu.dot_dimension_numbers<[1], [0], [0], [1], [0, 0, 1, 1], [], []>} : vector<8x32xf32>, vector<32x96xf32>, vector<8x96xf32> -> vector<8x96xf32>
    %393 = vector.extract_strided_slice %391 {offsets = [0, 0], sizes = [8, 32], strides = [1, 1]} : vector<8x96xf32> to vector<8x32xf32>
    %394 = vector.extract_strided_slice %392 {offsets = [0, 0], sizes = [8, 32], strides = [1, 1]} : vector<8x96xf32> to vector<8x32xf32>
    %395 = arith.addf %393, %394 : vector<8x32xf32>
    %396 = arith.negf %395 : vector<8x32xf32>
    %397 = math.exp %396 : vector<8x32xf32>
    %cst_116 = arith.constant 1.000000e+00 : f32
    %398 = vector.broadcast %cst_116 : f32 to vector<8x32xf32>
    %399 = arith.addf %398, %397 : vector<8x32xf32>
    %400 = arith.divf %398, %399 : vector<8x32xf32>
    %401 = vector.extract_strided_slice %391 {offsets = [0, 32], sizes = [8, 32], strides = [1, 1]} : vector<8x96xf32> to vector<8x32xf32>
    %402 = vector.extract_strided_slice %392 {offsets = [0, 32], sizes = [8, 32], strides = [1, 1]} : vector<8x96xf32> to vector<8x32xf32>
    %403 = arith.addf %401, %402 : vector<8x32xf32>
    %404 = arith.negf %403 : vector<8x32xf32>
    %405 = math.exp %404 : vector<8x32xf32>
    %cst_117 = arith.constant 1.000000e+00 : f32
    %406 = vector.broadcast %cst_117 : f32 to vector<8x32xf32>
    %407 = arith.addf %406, %405 : vector<8x32xf32>
    %408 = arith.divf %406, %407 : vector<8x32xf32>
    %409 = vector.extract_strided_slice %391 {offsets = [0, 64], sizes = [8, 32], strides = [1, 1]} : vector<8x96xf32> to vector<8x32xf32>
    %410 = vector.extract_strided_slice %392 {offsets = [0, 64], sizes = [8, 32], strides = [1, 1]} : vector<8x96xf32> to vector<8x32xf32>
    %411 = vector.broadcast %15 : vector<1x32xf32> to vector<8x32xf32>
    %412 = arith.addf %410, %411 : vector<8x32xf32>
    %413 = arith.mulf %400, %412 : vector<8x32xf32>
    %414 = arith.addf %409, %413 : vector<8x32xf32>
    %415 = math.tanh %414 : vector<8x32xf32>
    %cst_118 = arith.constant 1.000000e+00 : f32
    %416 = vector.broadcast %cst_118 : f32 to vector<8x32xf32>
    %417 = arith.subf %416, %408 : vector<8x32xf32>
    %418 = arith.mulf %417, %415 : vector<8x32xf32>
    %419 = arith.mulf %408, %358 : vector<8x32xf32>
    %420 = arith.addf %418, %419 : vector<8x32xf32>
    %c8_119 = arith.constant 8 : index
    %c0_120 = arith.constant 0 : index
    %421 = vector.load %arg11[%c8_119, %c0_120] : memref<64x96xf32, #tpu.memory_space<vmem>>, vector<8x96xf32>
    %cst_121 = arith.constant dense<0.000000e+00> : vector<8x96xf32>
    %422 = tpu.matmul %388, %14, %cst_121 {dimension_numbers = #tpu.dot_dimension_numbers<[1], [0], [0], [1], [0, 0, 1, 1], [], []>} : vector<8x32xf32>, vector<32x96xf32>, vector<8x96xf32> -> vector<8x96xf32>
    %423 = vector.extract_strided_slice %421 {offsets = [0, 0], sizes = [8, 32], strides = [1, 1]} : vector<8x96xf32> to vector<8x32xf32>
    %424 = vector.extract_strided_slice %422 {offsets = [0, 0], sizes = [8, 32], strides = [1, 1]} : vector<8x96xf32> to vector<8x32xf32>
    %425 = arith.addf %423, %424 : vector<8x32xf32>
    %426 = arith.negf %425 : vector<8x32xf32>
    %427 = math.exp %426 : vector<8x32xf32>
    %cst_122 = arith.constant 1.000000e+00 : f32
    %428 = vector.broadcast %cst_122 : f32 to vector<8x32xf32>
    %429 = arith.addf %428, %427 : vector<8x32xf32>
    %430 = arith.divf %428, %429 : vector<8x32xf32>
    %431 = vector.extract_strided_slice %421 {offsets = [0, 32], sizes = [8, 32], strides = [1, 1]} : vector<8x96xf32> to vector<8x32xf32>
    %432 = vector.extract_strided_slice %422 {offsets = [0, 32], sizes = [8, 32], strides = [1, 1]} : vector<8x96xf32> to vector<8x32xf32>
    %433 = arith.addf %431, %432 : vector<8x32xf32>
    %434 = arith.negf %433 : vector<8x32xf32>
    %435 = math.exp %434 : vector<8x32xf32>
    %cst_123 = arith.constant 1.000000e+00 : f32
    %436 = vector.broadcast %cst_123 : f32 to vector<8x32xf32>
    %437 = arith.addf %436, %435 : vector<8x32xf32>
    %438 = arith.divf %436, %437 : vector<8x32xf32>
    %439 = vector.extract_strided_slice %421 {offsets = [0, 64], sizes = [8, 32], strides = [1, 1]} : vector<8x96xf32> to vector<8x32xf32>
    %440 = vector.extract_strided_slice %422 {offsets = [0, 64], sizes = [8, 32], strides = [1, 1]} : vector<8x96xf32> to vector<8x32xf32>
    %441 = vector.broadcast %16 : vector<1x32xf32> to vector<8x32xf32>
    %442 = arith.addf %440, %441 : vector<8x32xf32>
    %443 = arith.mulf %430, %442 : vector<8x32xf32>
    %444 = arith.addf %439, %443 : vector<8x32xf32>
    %445 = math.tanh %444 : vector<8x32xf32>
    %cst_124 = arith.constant 1.000000e+00 : f32
    %446 = vector.broadcast %cst_124 : f32 to vector<8x32xf32>
    %447 = arith.subf %446, %438 : vector<8x32xf32>
    %448 = arith.mulf %447, %445 : vector<8x32xf32>
    %449 = arith.mulf %438, %388 : vector<8x32xf32>
    %450 = arith.addf %448, %449 : vector<8x32xf32>
    %c48_125 = arith.constant 48 : index
    %c0_126 = arith.constant 0 : index
    %451 = vector.load %arg9[%c48_125, %c0_126] : memref<64x64xf32, #tpu.memory_space<vmem>>, vector<8x32xf32>
    tpu.vector_store %arg9[%c48_125, %c0_126], %420 {strides = array<i32>} : memref<64x64xf32, #tpu.memory_space<vmem>>, vector<8x32xf32>,
    %c8_127 = arith.constant 8 : index
    %c32_128 = arith.constant 32 : index
    %452 = vector.load %arg9[%c8_127, %c32_128] : memref<64x64xf32, #tpu.memory_space<vmem>>, vector<8x32xf32>
    tpu.vector_store %arg9[%c8_127, %c32_128], %450 {strides = array<i32>} : memref<64x64xf32, #tpu.memory_space<vmem>>, vector<8x32xf32>,
    %c56_129 = arith.constant 56 : index
    %c0_130 = arith.constant 0 : index
    %453 = vector.load %arg10[%c56_129, %c0_130] : memref<64x96xf32, #tpu.memory_space<vmem>>, vector<8x96xf32>
    %cst_131 = arith.constant dense<0.000000e+00> : vector<8x96xf32>
    %454 = tpu.matmul %420, %13, %cst_131 {dimension_numbers = #tpu.dot_dimension_numbers<[1], [0], [0], [1], [0, 0, 1, 1], [], []>} : vector<8x32xf32>, vector<32x96xf32>, vector<8x96xf32> -> vector<8x96xf32>
    %455 = vector.extract_strided_slice %453 {offsets = [0, 0], sizes = [8, 32], strides = [1, 1]} : vector<8x96xf32> to vector<8x32xf32>
    %456 = vector.extract_strided_slice %454 {offsets = [0, 0], sizes = [8, 32], strides = [1, 1]} : vector<8x96xf32> to vector<8x32xf32>
    %457 = arith.addf %455, %456 : vector<8x32xf32>
    %458 = arith.negf %457 : vector<8x32xf32>
    %459 = math.exp %458 : vector<8x32xf32>
    %cst_132 = arith.constant 1.000000e+00 : f32
    %460 = vector.broadcast %cst_132 : f32 to vector<8x32xf32>
    %461 = arith.addf %460, %459 : vector<8x32xf32>
    %462 = arith.divf %460, %461 : vector<8x32xf32>
    %463 = vector.extract_strided_slice %453 {offsets = [0, 32], sizes = [8, 32], strides = [1, 1]} : vector<8x96xf32> to vector<8x32xf32>
    %464 = vector.extract_strided_slice %454 {offsets = [0, 32], sizes = [8, 32], strides = [1, 1]} : vector<8x96xf32> to vector<8x32xf32>
    %465 = arith.addf %463, %464 : vector<8x32xf32>
    %466 = arith.negf %465 : vector<8x32xf32>
    %467 = math.exp %466 : vector<8x32xf32>
    %cst_133 = arith.constant 1.000000e+00 : f32
    %468 = vector.broadcast %cst_133 : f32 to vector<8x32xf32>
    %469 = arith.addf %468, %467 : vector<8x32xf32>
    %470 = arith.divf %468, %469 : vector<8x32xf32>
    %471 = vector.extract_strided_slice %453 {offsets = [0, 64], sizes = [8, 32], strides = [1, 1]} : vector<8x96xf32> to vector<8x32xf32>
    %472 = vector.extract_strided_slice %454 {offsets = [0, 64], sizes = [8, 32], strides = [1, 1]} : vector<8x96xf32> to vector<8x32xf32>
    %473 = vector.broadcast %15 : vector<1x32xf32> to vector<8x32xf32>
    %474 = arith.addf %472, %473 : vector<8x32xf32>
    %475 = arith.mulf %462, %474 : vector<8x32xf32>
    %476 = arith.addf %471, %475 : vector<8x32xf32>
    %477 = math.tanh %476 : vector<8x32xf32>
    %cst_134 = arith.constant 1.000000e+00 : f32
    %478 = vector.broadcast %cst_134 : f32 to vector<8x32xf32>
    %479 = arith.subf %478, %470 : vector<8x32xf32>
    %480 = arith.mulf %479, %477 : vector<8x32xf32>
    %481 = arith.mulf %470, %420 : vector<8x32xf32>
    %482 = arith.addf %480, %481 : vector<8x32xf32>
    %c0_135 = arith.constant 0 : index
    %c0_136 = arith.constant 0 : index
    %483 = vector.load %arg11[%c0_135, %c0_136] : memref<64x96xf32, #tpu.memory_space<vmem>>, vector<8x96xf32>
    %cst_137 = arith.constant dense<0.000000e+00> : vector<8x96xf32>
    %484 = tpu.matmul %450, %14, %cst_137 {dimension_numbers = #tpu.dot_dimension_numbers<[1], [0], [0], [1], [0, 0, 1, 1], [], []>} : vector<8x32xf32>, vector<32x96xf32>, vector<8x96xf32> -> vector<8x96xf32>
    %485 = vector.extract_strided_slice %483 {offsets = [0, 0], sizes = [8, 32], strides = [1, 1]} : vector<8x96xf32> to vector<8x32xf32>
    %486 = vector.extract_strided_slice %484 {offsets = [0, 0], sizes = [8, 32], strides = [1, 1]} : vector<8x96xf32> to vector<8x32xf32>
    %487 = arith.addf %485, %486 : vector<8x32xf32>
    %488 = arith.negf %487 : vector<8x32xf32>
    %489 = math.exp %488 : vector<8x32xf32>
    %cst_138 = arith.constant 1.000000e+00 : f32
    %490 = vector.broadcast %cst_138 : f32 to vector<8x32xf32>
    %491 = arith.addf %490, %489 : vector<8x32xf32>
    %492 = arith.divf %490, %491 : vector<8x32xf32>
    %493 = vector.extract_strided_slice %483 {offsets = [0, 32], sizes = [8, 32], strides = [1, 1]} : vector<8x96xf32> to vector<8x32xf32>
    %494 = vector.extract_strided_slice %484 {offsets = [0, 32], sizes = [8, 32], strides = [1, 1]} : vector<8x96xf32> to vector<8x32xf32>
    %495 = arith.addf %493, %494 : vector<8x32xf32>
    %496 = arith.negf %495 : vector<8x32xf32>
    %497 = math.exp %496 : vector<8x32xf32>
    %cst_139 = arith.constant 1.000000e+00 : f32
    %498 = vector.broadcast %cst_139 : f32 to vector<8x32xf32>
    %499 = arith.addf %498, %497 : vector<8x32xf32>
    %500 = arith.divf %498, %499 : vector<8x32xf32>
    %501 = vector.extract_strided_slice %483 {offsets = [0, 64], sizes = [8, 32], strides = [1, 1]} : vector<8x96xf32> to vector<8x32xf32>
    %502 = vector.extract_strided_slice %484 {offsets = [0, 64], sizes = [8, 32], strides = [1, 1]} : vector<8x96xf32> to vector<8x32xf32>
    %503 = vector.broadcast %16 : vector<1x32xf32> to vector<8x32xf32>
    %504 = arith.addf %502, %503 : vector<8x32xf32>
    %505 = arith.mulf %492, %504 : vector<8x32xf32>
    %506 = arith.addf %501, %505 : vector<8x32xf32>
    %507 = math.tanh %506 : vector<8x32xf32>
    %cst_140 = arith.constant 1.000000e+00 : f32
    %508 = vector.broadcast %cst_140 : f32 to vector<8x32xf32>
    %509 = arith.subf %508, %500 : vector<8x32xf32>
    %510 = arith.mulf %509, %507 : vector<8x32xf32>
    %511 = arith.mulf %500, %450 : vector<8x32xf32>
    %512 = arith.addf %510, %511 : vector<8x32xf32>
    %c56_141 = arith.constant 56 : index
    %c0_142 = arith.constant 0 : index
    %513 = vector.load %arg9[%c56_141, %c0_142] : memref<64x64xf32, #tpu.memory_space<vmem>>, vector<8x32xf32>
    tpu.vector_store %arg9[%c56_141, %c0_142], %482 {strides = array<i32>} : memref<64x64xf32, #tpu.memory_space<vmem>>, vector<8x32xf32>,
    %c0_143 = arith.constant 0 : index
    %c32_144 = arith.constant 32 : index
    %514 = vector.load %arg9[%c0_143, %c32_144] : memref<64x64xf32, #tpu.memory_space<vmem>>, vector<8x32xf32>
    tpu.vector_store %arg9[%c0_143, %c32_144], %512 {strides = array<i32>} : memref<64x64xf32, #tpu.memory_space<vmem>>, vector<8x32xf32>,
    return
  }
}

module attributes {stable_mosaic.version = 11 : i64} {
  func.func @_bigru_layer_kernel(%arg0: memref<64x64xf32, #tpu.memory_space<vmem>>, %arg1: memref<64x96xf32, #tpu.memory_space<vmem>>, %arg2: memref<64x96xf32, #tpu.memory_space<vmem>>, %arg3: memref<1x96xf32, #tpu.memory_space<vmem>>, %arg4: memref<1x96xf32, #tpu.memory_space<vmem>>, %arg5: memref<32x96xf32, #tpu.memory_space<vmem>>, %arg6: memref<32x96xf32, #tpu.memory_space<vmem>>, %arg7: memref<1x32xf32, #tpu.memory_space<vmem>>, %arg8: memref<1x32xf32, #tpu.memory_space<vmem>>, %arg9: memref<32x32xf32, #tpu.memory_space<vmem>>, %arg10: memref<32x32xf32, #tpu.memory_space<vmem>>, %arg11: memref<1x32xf32, #tpu.memory_space<vmem>>, %arg12: memref<64x64xf32, #tpu.memory_space<vmem>>, %arg13: memref<8x32xf32, #tpu.memory_space<vmem>>, %arg14: memref<64x96xf32, #tpu.memory_space<vmem>>, %arg15: memref<64x96xf32, #tpu.memory_space<vmem>>) attributes {dimension_semantics = [], scalar_prefetch = 0 : i64, scratch_operands = 2 : i64, tpu.core_type = #tpu.core_type<tc>} {
    %c0 = arith.constant 0 : index
    %c0_0 = arith.constant 0 : index
    %0 = vector.load %arg0[%c0, %c0_0] : memref<64x64xf32, #tpu.memory_space<vmem>>, vector<64x64xf32>
    %c0_1 = arith.constant 0 : index
    %c0_2 = arith.constant 0 : index
    %1 = vector.load %arg1[%c0_1, %c0_2] : memref<64x96xf32, #tpu.memory_space<vmem>>, vector<64x96xf32>
    %cst = arith.constant dense<0.000000e+00> : vector<64x96xf32>
    %2 = tpu.matmul %0, %1, %cst {dimension_numbers = #tpu.dot_dimension_numbers<[1], [0], [0], [1], [0, 0, 1, 1], [], []>} : vector<64x64xf32>, vector<64x96xf32>, vector<64x96xf32> -> vector<64x96xf32>
    %c0_3 = arith.constant 0 : index
    %c0_4 = arith.constant 0 : index
    %3 = vector.load %arg3[%c0_3, %c0_4] : memref<1x96xf32, #tpu.memory_space<vmem>>, vector<1x96xf32>
    %4 = vector.broadcast %3 : vector<1x96xf32> to vector<64x96xf32>
    %5 = arith.addf %2, %4 : vector<64x96xf32>
    %c0_5 = arith.constant 0 : index
    %c0_6 = arith.constant 0 : index
    %6 = vector.load %arg14[%c0_5, %c0_6] : memref<64x96xf32, #tpu.memory_space<vmem>>, vector<64x96xf32>
    tpu.vector_store %arg14[%c0_5, %c0_6], %5 {strides = array<i32>} : memref<64x96xf32, #tpu.memory_space<vmem>>, vector<64x96xf32>,
    %c0_7 = arith.constant 0 : index
    %c0_8 = arith.constant 0 : index
    %7 = vector.load %arg2[%c0_7, %c0_8] : memref<64x96xf32, #tpu.memory_space<vmem>>, vector<64x96xf32>
    %cst_9 = arith.constant dense<0.000000e+00> : vector<64x96xf32>
    %8 = tpu.matmul %0, %7, %cst_9 {dimension_numbers = #tpu.dot_dimension_numbers<[1], [0], [0], [1], [0, 0, 1, 1], [], []>} : vector<64x64xf32>, vector<64x96xf32>, vector<64x96xf32> -> vector<64x96xf32>
    %c0_10 = arith.constant 0 : index
    %c0_11 = arith.constant 0 : index
    %9 = vector.load %arg4[%c0_10, %c0_11] : memref<1x96xf32, #tpu.memory_space<vmem>>, vector<1x96xf32>
    %10 = vector.broadcast %9 : vector<1x96xf32> to vector<64x96xf32>
    %11 = arith.addf %8, %10 : vector<64x96xf32>
    %c0_12 = arith.constant 0 : index
    %c0_13 = arith.constant 0 : index
    %12 = vector.load %arg15[%c0_12, %c0_13] : memref<64x96xf32, #tpu.memory_space<vmem>>, vector<64x96xf32>
    tpu.vector_store %arg15[%c0_12, %c0_13], %11 {strides = array<i32>} : memref<64x96xf32, #tpu.memory_space<vmem>>, vector<64x96xf32>,
    %c0_14 = arith.constant 0 : index
    %c0_15 = arith.constant 0 : index
    %13 = vector.load %arg5[%c0_14, %c0_15] : memref<32x96xf32, #tpu.memory_space<vmem>>, vector<32x96xf32>
    %c0_16 = arith.constant 0 : index
    %c0_17 = arith.constant 0 : index
    %14 = vector.load %arg6[%c0_16, %c0_17] : memref<32x96xf32, #tpu.memory_space<vmem>>, vector<32x96xf32>
    %c0_18 = arith.constant 0 : index
    %c0_19 = arith.constant 0 : index
    %15 = vector.load %arg7[%c0_18, %c0_19] : memref<1x32xf32, #tpu.memory_space<vmem>>, vector<1x32xf32>
    %c0_20 = arith.constant 0 : index
    %c0_21 = arith.constant 0 : index
    %16 = vector.load %arg8[%c0_20, %c0_21] : memref<1x32xf32, #tpu.memory_space<vmem>>, vector<1x32xf32>
    %cst_22 = arith.constant 0.000000e+00 : f32
    %17 = vector.broadcast %cst_22 : f32 to vector<8x32xf32>
    %cst_23 = arith.constant 0.000000e+00 : f32
    %18 = vector.broadcast %cst_23 : f32 to vector<8x32xf32>
    %c0_24 = arith.constant 0 : index
    %c0_25 = arith.constant 0 : index
    %19 = vector.load %arg14[%c0_24, %c0_25] : memref<64x96xf32, #tpu.memory_space<vmem>>, vector<8x96xf32>
    %cst_26 = arith.constant dense<0.000000e+00> : vector<8x96xf32>
    %20 = tpu.matmul %17, %13, %cst_26 {dimension_numbers = #tpu.dot_dimension_numbers<[1], [0], [0], [1], [0, 0, 1, 1], [], []>} : vector<8x32xf32>, vector<32x96xf32>, vector<8x96xf32> -> vector<8x96xf32>
    %21 = vector.extract_strided_slice %19 {offsets = [0, 0], sizes = [8, 32], strides = [1, 1]} : vector<8x96xf32> to vector<8x32xf32>
    %22 = vector.extract_strided_slice %20 {offsets = [0, 0], sizes = [8, 32], strides = [1, 1]} : vector<8x96xf32> to vector<8x32xf32>
    %23 = arith.addf %21, %22 : vector<8x32xf32>
    %24 = arith.negf %23 : vector<8x32xf32>
    %25 = math.exp %24 : vector<8x32xf32>
    %cst_27 = arith.constant 1.000000e+00 : f32
    %26 = vector.broadcast %cst_27 : f32 to vector<8x32xf32>
    %27 = arith.addf %26, %25 : vector<8x32xf32>
    %28 = arith.divf %26, %27 : vector<8x32xf32>
    %29 = vector.extract_strided_slice %19 {offsets = [0, 32], sizes = [8, 32], strides = [1, 1]} : vector<8x96xf32> to vector<8x32xf32>
    %30 = vector.extract_strided_slice %20 {offsets = [0, 32], sizes = [8, 32], strides = [1, 1]} : vector<8x96xf32> to vector<8x32xf32>
    %31 = arith.addf %29, %30 : vector<8x32xf32>
    %32 = arith.negf %31 : vector<8x32xf32>
    %33 = math.exp %32 : vector<8x32xf32>
    %cst_28 = arith.constant 1.000000e+00 : f32
    %34 = vector.broadcast %cst_28 : f32 to vector<8x32xf32>
    %35 = arith.addf %34, %33 : vector<8x32xf32>
    %36 = arith.divf %34, %35 : vector<8x32xf32>
    %37 = vector.extract_strided_slice %19 {offsets = [0, 64], sizes = [8, 32], strides = [1, 1]} : vector<8x96xf32> to vector<8x32xf32>
    %38 = vector.extract_strided_slice %20 {offsets = [0, 64], sizes = [8, 32], strides = [1, 1]} : vector<8x96xf32> to vector<8x32xf32>
    %39 = vector.broadcast %15 : vector<1x32xf32> to vector<8x32xf32>
    %40 = arith.addf %38, %39 : vector<8x32xf32>
    %41 = arith.mulf %28, %40 : vector<8x32xf32>
    %42 = arith.addf %37, %41 : vector<8x32xf32>
    %43 = math.tanh %42 : vector<8x32xf32>
    %cst_29 = arith.constant 1.000000e+00 : f32
    %44 = vector.broadcast %cst_29 : f32 to vector<8x32xf32>
    %45 = arith.subf %44, %36 : vector<8x32xf32>
    %46 = arith.mulf %45, %43 : vector<8x32xf32>
    %47 = arith.mulf %36, %17 : vector<8x32xf32>
    %48 = arith.addf %46, %47 : vector<8x32xf32>
    %c56 = arith.constant 56 : index
    %c0_30 = arith.constant 0 : index
    %49 = vector.load %arg15[%c56, %c0_30] : memref<64x96xf32, #tpu.memory_space<vmem>>, vector<8x96xf32>
    %cst_31 = arith.constant dense<0.000000e+00> : vector<8x96xf32>
    %50 = tpu.matmul %18, %14, %cst_31 {dimension_numbers = #tpu.dot_dimension_numbers<[1], [0], [0], [1], [0, 0, 1, 1], [], []>} : vector<8x32xf32>, vector<32x96xf32>, vector<8x96xf32> -> vector<8x96xf32>
    %51 = vector.extract_strided_slice %49 {offsets = [0, 0], sizes = [8, 32], strides = [1, 1]} : vector<8x96xf32> to vector<8x32xf32>
    %52 = vector.extract_strided_slice %50 {offsets = [0, 0], sizes = [8, 32], strides = [1, 1]} : vector<8x96xf32> to vector<8x32xf32>
    %53 = arith.addf %51, %52 : vector<8x32xf32>
    %54 = arith.negf %53 : vector<8x32xf32>
    %55 = math.exp %54 : vector<8x32xf32>
    %cst_32 = arith.constant 1.000000e+00 : f32
    %56 = vector.broadcast %cst_32 : f32 to vector<8x32xf32>
    %57 = arith.addf %56, %55 : vector<8x32xf32>
    %58 = arith.divf %56, %57 : vector<8x32xf32>
    %59 = vector.extract_strided_slice %49 {offsets = [0, 32], sizes = [8, 32], strides = [1, 1]} : vector<8x96xf32> to vector<8x32xf32>
    %60 = vector.extract_strided_slice %50 {offsets = [0, 32], sizes = [8, 32], strides = [1, 1]} : vector<8x96xf32> to vector<8x32xf32>
    %61 = arith.addf %59, %60 : vector<8x32xf32>
    %62 = arith.negf %61 : vector<8x32xf32>
    %63 = math.exp %62 : vector<8x32xf32>
    %cst_33 = arith.constant 1.000000e+00 : f32
    %64 = vector.broadcast %cst_33 : f32 to vector<8x32xf32>
    %65 = arith.addf %64, %63 : vector<8x32xf32>
    %66 = arith.divf %64, %65 : vector<8x32xf32>
    %67 = vector.extract_strided_slice %49 {offsets = [0, 64], sizes = [8, 32], strides = [1, 1]} : vector<8x96xf32> to vector<8x32xf32>
    %68 = vector.extract_strided_slice %50 {offsets = [0, 64], sizes = [8, 32], strides = [1, 1]} : vector<8x96xf32> to vector<8x32xf32>
    %69 = vector.broadcast %16 : vector<1x32xf32> to vector<8x32xf32>
    %70 = arith.addf %68, %69 : vector<8x32xf32>
    %71 = arith.mulf %58, %70 : vector<8x32xf32>
    %72 = arith.addf %67, %71 : vector<8x32xf32>
    %73 = math.tanh %72 : vector<8x32xf32>
    %cst_34 = arith.constant 1.000000e+00 : f32
    %74 = vector.broadcast %cst_34 : f32 to vector<8x32xf32>
    %75 = arith.subf %74, %66 : vector<8x32xf32>
    %76 = arith.mulf %75, %73 : vector<8x32xf32>
    %77 = arith.mulf %66, %18 : vector<8x32xf32>
    %78 = arith.addf %76, %77 : vector<8x32xf32>
    %c0_35 = arith.constant 0 : index
    %c0_36 = arith.constant 0 : index
    %79 = vector.load %arg12[%c0_35, %c0_36] : memref<64x64xf32, #tpu.memory_space<vmem>>, vector<8x32xf32>
    tpu.vector_store %arg12[%c0_35, %c0_36], %48 {strides = array<i32>} : memref<64x64xf32, #tpu.memory_space<vmem>>, vector<8x32xf32>,
    %c56_37 = arith.constant 56 : index
    %c32 = arith.constant 32 : index
    %80 = vector.load %arg12[%c56_37, %c32] : memref<64x64xf32, #tpu.memory_space<vmem>>, vector<8x32xf32>
    tpu.vector_store %arg12[%c56_37, %c32], %78 {strides = array<i32>} : memref<64x64xf32, #tpu.memory_space<vmem>>, vector<8x32xf32>,
    %c8 = arith.constant 8 : index
    %c0_38 = arith.constant 0 : index
    %81 = vector.load %arg14[%c8, %c0_38] : memref<64x96xf32, #tpu.memory_space<vmem>>, vector<8x96xf32>
    %cst_39 = arith.constant dense<0.000000e+00> : vector<8x96xf32>
    %82 = tpu.matmul %48, %13, %cst_39 {dimension_numbers = #tpu.dot_dimension_numbers<[1], [0], [0], [1], [0, 0, 1, 1], [], []>} : vector<8x32xf32>, vector<32x96xf32>, vector<8x96xf32> -> vector<8x96xf32>
    %83 = vector.extract_strided_slice %81 {offsets = [0, 0], sizes = [8, 32], strides = [1, 1]} : vector<8x96xf32> to vector<8x32xf32>
    %84 = vector.extract_strided_slice %82 {offsets = [0, 0], sizes = [8, 32], strides = [1, 1]} : vector<8x96xf32> to vector<8x32xf32>
    %85 = arith.addf %83, %84 : vector<8x32xf32>
    %86 = arith.negf %85 : vector<8x32xf32>
    %87 = math.exp %86 : vector<8x32xf32>
    %cst_40 = arith.constant 1.000000e+00 : f32
    %88 = vector.broadcast %cst_40 : f32 to vector<8x32xf32>
    %89 = arith.addf %88, %87 : vector<8x32xf32>
    %90 = arith.divf %88, %89 : vector<8x32xf32>
    %91 = vector.extract_strided_slice %81 {offsets = [0, 32], sizes = [8, 32], strides = [1, 1]} : vector<8x96xf32> to vector<8x32xf32>
    %92 = vector.extract_strided_slice %82 {offsets = [0, 32], sizes = [8, 32], strides = [1, 1]} : vector<8x96xf32> to vector<8x32xf32>
    %93 = arith.addf %91, %92 : vector<8x32xf32>
    %94 = arith.negf %93 : vector<8x32xf32>
    %95 = math.exp %94 : vector<8x32xf32>
    %cst_41 = arith.constant 1.000000e+00 : f32
    %96 = vector.broadcast %cst_41 : f32 to vector<8x32xf32>
    %97 = arith.addf %96, %95 : vector<8x32xf32>
    %98 = arith.divf %96, %97 : vector<8x32xf32>
    %99 = vector.extract_strided_slice %81 {offsets = [0, 64], sizes = [8, 32], strides = [1, 1]} : vector<8x96xf32> to vector<8x32xf32>
    %100 = vector.extract_strided_slice %82 {offsets = [0, 64], sizes = [8, 32], strides = [1, 1]} : vector<8x96xf32> to vector<8x32xf32>
    %101 = vector.broadcast %15 : vector<1x32xf32> to vector<8x32xf32>
    %102 = arith.addf %100, %101 : vector<8x32xf32>
    %103 = arith.mulf %90, %102 : vector<8x32xf32>
    %104 = arith.addf %99, %103 : vector<8x32xf32>
    %105 = math.tanh %104 : vector<8x32xf32>
    %cst_42 = arith.constant 1.000000e+00 : f32
    %106 = vector.broadcast %cst_42 : f32 to vector<8x32xf32>
    %107 = arith.subf %106, %98 : vector<8x32xf32>
    %108 = arith.mulf %107, %105 : vector<8x32xf32>
    %109 = arith.mulf %98, %48 : vector<8x32xf32>
    %110 = arith.addf %108, %109 : vector<8x32xf32>
    %c48 = arith.constant 48 : index
    %c0_43 = arith.constant 0 : index
    %111 = vector.load %arg15[%c48, %c0_43] : memref<64x96xf32, #tpu.memory_space<vmem>>, vector<8x96xf32>
    %cst_44 = arith.constant dense<0.000000e+00> : vector<8x96xf32>
    %112 = tpu.matmul %78, %14, %cst_44 {dimension_numbers = #tpu.dot_dimension_numbers<[1], [0], [0], [1], [0, 0, 1, 1], [], []>} : vector<8x32xf32>, vector<32x96xf32>, vector<8x96xf32> -> vector<8x96xf32>
    %113 = vector.extract_strided_slice %111 {offsets = [0, 0], sizes = [8, 32], strides = [1, 1]} : vector<8x96xf32> to vector<8x32xf32>
    %114 = vector.extract_strided_slice %112 {offsets = [0, 0], sizes = [8, 32], strides = [1, 1]} : vector<8x96xf32> to vector<8x32xf32>
    %115 = arith.addf %113, %114 : vector<8x32xf32>
    %116 = arith.negf %115 : vector<8x32xf32>
    %117 = math.exp %116 : vector<8x32xf32>
    %cst_45 = arith.constant 1.000000e+00 : f32
    %118 = vector.broadcast %cst_45 : f32 to vector<8x32xf32>
    %119 = arith.addf %118, %117 : vector<8x32xf32>
    %120 = arith.divf %118, %119 : vector<8x32xf32>
    %121 = vector.extract_strided_slice %111 {offsets = [0, 32], sizes = [8, 32], strides = [1, 1]} : vector<8x96xf32> to vector<8x32xf32>
    %122 = vector.extract_strided_slice %112 {offsets = [0, 32], sizes = [8, 32], strides = [1, 1]} : vector<8x96xf32> to vector<8x32xf32>
    %123 = arith.addf %121, %122 : vector<8x32xf32>
    %124 = arith.negf %123 : vector<8x32xf32>
    %125 = math.exp %124 : vector<8x32xf32>
    %cst_46 = arith.constant 1.000000e+00 : f32
    %126 = vector.broadcast %cst_46 : f32 to vector<8x32xf32>
    %127 = arith.addf %126, %125 : vector<8x32xf32>
    %128 = arith.divf %126, %127 : vector<8x32xf32>
    %129 = vector.extract_strided_slice %111 {offsets = [0, 64], sizes = [8, 32], strides = [1, 1]} : vector<8x96xf32> to vector<8x32xf32>
    %130 = vector.extract_strided_slice %112 {offsets = [0, 64], sizes = [8, 32], strides = [1, 1]} : vector<8x96xf32> to vector<8x32xf32>
    %131 = vector.broadcast %16 : vector<1x32xf32> to vector<8x32xf32>
    %132 = arith.addf %130, %131 : vector<8x32xf32>
    %133 = arith.mulf %120, %132 : vector<8x32xf32>
    %134 = arith.addf %129, %133 : vector<8x32xf32>
    %135 = math.tanh %134 : vector<8x32xf32>
    %cst_47 = arith.constant 1.000000e+00 : f32
    %136 = vector.broadcast %cst_47 : f32 to vector<8x32xf32>
    %137 = arith.subf %136, %128 : vector<8x32xf32>
    %138 = arith.mulf %137, %135 : vector<8x32xf32>
    %139 = arith.mulf %128, %78 : vector<8x32xf32>
    %140 = arith.addf %138, %139 : vector<8x32xf32>
    %c8_48 = arith.constant 8 : index
    %c0_49 = arith.constant 0 : index
    %141 = vector.load %arg12[%c8_48, %c0_49] : memref<64x64xf32, #tpu.memory_space<vmem>>, vector<8x32xf32>
    tpu.vector_store %arg12[%c8_48, %c0_49], %110 {strides = array<i32>} : memref<64x64xf32, #tpu.memory_space<vmem>>, vector<8x32xf32>,
    %c48_50 = arith.constant 48 : index
    %c32_51 = arith.constant 32 : index
    %142 = vector.load %arg12[%c48_50, %c32_51] : memref<64x64xf32, #tpu.memory_space<vmem>>, vector<8x32xf32>
    tpu.vector_store %arg12[%c48_50, %c32_51], %140 {strides = array<i32>} : memref<64x64xf32, #tpu.memory_space<vmem>>, vector<8x32xf32>,
    %c16 = arith.constant 16 : index
    %c0_52 = arith.constant 0 : index
    %143 = vector.load %arg14[%c16, %c0_52] : memref<64x96xf32, #tpu.memory_space<vmem>>, vector<8x96xf32>
    %cst_53 = arith.constant dense<0.000000e+00> : vector<8x96xf32>
    %144 = tpu.matmul %110, %13, %cst_53 {dimension_numbers = #tpu.dot_dimension_numbers<[1], [0], [0], [1], [0, 0, 1, 1], [], []>} : vector<8x32xf32>, vector<32x96xf32>, vector<8x96xf32> -> vector<8x96xf32>
    %145 = vector.extract_strided_slice %143 {offsets = [0, 0], sizes = [8, 32], strides = [1, 1]} : vector<8x96xf32> to vector<8x32xf32>
    %146 = vector.extract_strided_slice %144 {offsets = [0, 0], sizes = [8, 32], strides = [1, 1]} : vector<8x96xf32> to vector<8x32xf32>
    %147 = arith.addf %145, %146 : vector<8x32xf32>
    %148 = arith.negf %147 : vector<8x32xf32>
    %149 = math.exp %148 : vector<8x32xf32>
    %cst_54 = arith.constant 1.000000e+00 : f32
    %150 = vector.broadcast %cst_54 : f32 to vector<8x32xf32>
    %151 = arith.addf %150, %149 : vector<8x32xf32>
    %152 = arith.divf %150, %151 : vector<8x32xf32>
    %153 = vector.extract_strided_slice %143 {offsets = [0, 32], sizes = [8, 32], strides = [1, 1]} : vector<8x96xf32> to vector<8x32xf32>
    %154 = vector.extract_strided_slice %144 {offsets = [0, 32], sizes = [8, 32], strides = [1, 1]} : vector<8x96xf32> to vector<8x32xf32>
    %155 = arith.addf %153, %154 : vector<8x32xf32>
    %156 = arith.negf %155 : vector<8x32xf32>
    %157 = math.exp %156 : vector<8x32xf32>
    %cst_55 = arith.constant 1.000000e+00 : f32
    %158 = vector.broadcast %cst_55 : f32 to vector<8x32xf32>
    %159 = arith.addf %158, %157 : vector<8x32xf32>
    %160 = arith.divf %158, %159 : vector<8x32xf32>
    %161 = vector.extract_strided_slice %143 {offsets = [0, 64], sizes = [8, 32], strides = [1, 1]} : vector<8x96xf32> to vector<8x32xf32>
    %162 = vector.extract_strided_slice %144 {offsets = [0, 64], sizes = [8, 32], strides = [1, 1]} : vector<8x96xf32> to vector<8x32xf32>
    %163 = vector.broadcast %15 : vector<1x32xf32> to vector<8x32xf32>
    %164 = arith.addf %162, %163 : vector<8x32xf32>
    %165 = arith.mulf %152, %164 : vector<8x32xf32>
    %166 = arith.addf %161, %165 : vector<8x32xf32>
    %167 = math.tanh %166 : vector<8x32xf32>
    %cst_56 = arith.constant 1.000000e+00 : f32
    %168 = vector.broadcast %cst_56 : f32 to vector<8x32xf32>
    %169 = arith.subf %168, %160 : vector<8x32xf32>
    %170 = arith.mulf %169, %167 : vector<8x32xf32>
    %171 = arith.mulf %160, %110 : vector<8x32xf32>
    %172 = arith.addf %170, %171 : vector<8x32xf32>
    %c40 = arith.constant 40 : index
    %c0_57 = arith.constant 0 : index
    %173 = vector.load %arg15[%c40, %c0_57] : memref<64x96xf32, #tpu.memory_space<vmem>>, vector<8x96xf32>
    %cst_58 = arith.constant dense<0.000000e+00> : vector<8x96xf32>
    %174 = tpu.matmul %140, %14, %cst_58 {dimension_numbers = #tpu.dot_dimension_numbers<[1], [0], [0], [1], [0, 0, 1, 1], [], []>} : vector<8x32xf32>, vector<32x96xf32>, vector<8x96xf32> -> vector<8x96xf32>
    %175 = vector.extract_strided_slice %173 {offsets = [0, 0], sizes = [8, 32], strides = [1, 1]} : vector<8x96xf32> to vector<8x32xf32>
    %176 = vector.extract_strided_slice %174 {offsets = [0, 0], sizes = [8, 32], strides = [1, 1]} : vector<8x96xf32> to vector<8x32xf32>
    %177 = arith.addf %175, %176 : vector<8x32xf32>
    %178 = arith.negf %177 : vector<8x32xf32>
    %179 = math.exp %178 : vector<8x32xf32>
    %cst_59 = arith.constant 1.000000e+00 : f32
    %180 = vector.broadcast %cst_59 : f32 to vector<8x32xf32>
    %181 = arith.addf %180, %179 : vector<8x32xf32>
    %182 = arith.divf %180, %181 : vector<8x32xf32>
    %183 = vector.extract_strided_slice %173 {offsets = [0, 32], sizes = [8, 32], strides = [1, 1]} : vector<8x96xf32> to vector<8x32xf32>
    %184 = vector.extract_strided_slice %174 {offsets = [0, 32], sizes = [8, 32], strides = [1, 1]} : vector<8x96xf32> to vector<8x32xf32>
    %185 = arith.addf %183, %184 : vector<8x32xf32>
    %186 = arith.negf %185 : vector<8x32xf32>
    %187 = math.exp %186 : vector<8x32xf32>
    %cst_60 = arith.constant 1.000000e+00 : f32
    %188 = vector.broadcast %cst_60 : f32 to vector<8x32xf32>
    %189 = arith.addf %188, %187 : vector<8x32xf32>
    %190 = arith.divf %188, %189 : vector<8x32xf32>
    %191 = vector.extract_strided_slice %173 {offsets = [0, 64], sizes = [8, 32], strides = [1, 1]} : vector<8x96xf32> to vector<8x32xf32>
    %192 = vector.extract_strided_slice %174 {offsets = [0, 64], sizes = [8, 32], strides = [1, 1]} : vector<8x96xf32> to vector<8x32xf32>
    %193 = vector.broadcast %16 : vector<1x32xf32> to vector<8x32xf32>
    %194 = arith.addf %192, %193 : vector<8x32xf32>
    %195 = arith.mulf %182, %194 : vector<8x32xf32>
    %196 = arith.addf %191, %195 : vector<8x32xf32>
    %197 = math.tanh %196 : vector<8x32xf32>
    %cst_61 = arith.constant 1.000000e+00 : f32
    %198 = vector.broadcast %cst_61 : f32 to vector<8x32xf32>
    %199 = arith.subf %198, %190 : vector<8x32xf32>
    %200 = arith.mulf %199, %197 : vector<8x32xf32>
    %201 = arith.mulf %190, %140 : vector<8x32xf32>
    %202 = arith.addf %200, %201 : vector<8x32xf32>
    %c16_62 = arith.constant 16 : index
    %c0_63 = arith.constant 0 : index
    %203 = vector.load %arg12[%c16_62, %c0_63] : memref<64x64xf32, #tpu.memory_space<vmem>>, vector<8x32xf32>
    tpu.vector_store %arg12[%c16_62, %c0_63], %172 {strides = array<i32>} : memref<64x64xf32, #tpu.memory_space<vmem>>, vector<8x32xf32>,
    %c40_64 = arith.constant 40 : index
    %c32_65 = arith.constant 32 : index
    %204 = vector.load %arg12[%c40_64, %c32_65] : memref<64x64xf32, #tpu.memory_space<vmem>>, vector<8x32xf32>
    tpu.vector_store %arg12[%c40_64, %c32_65], %202 {strides = array<i32>} : memref<64x64xf32, #tpu.memory_space<vmem>>, vector<8x32xf32>,
    %c24 = arith.constant 24 : index
    %c0_66 = arith.constant 0 : index
    %205 = vector.load %arg14[%c24, %c0_66] : memref<64x96xf32, #tpu.memory_space<vmem>>, vector<8x96xf32>
    %cst_67 = arith.constant dense<0.000000e+00> : vector<8x96xf32>
    %206 = tpu.matmul %172, %13, %cst_67 {dimension_numbers = #tpu.dot_dimension_numbers<[1], [0], [0], [1], [0, 0, 1, 1], [], []>} : vector<8x32xf32>, vector<32x96xf32>, vector<8x96xf32> -> vector<8x96xf32>
    %207 = vector.extract_strided_slice %205 {offsets = [0, 0], sizes = [8, 32], strides = [1, 1]} : vector<8x96xf32> to vector<8x32xf32>
    %208 = vector.extract_strided_slice %206 {offsets = [0, 0], sizes = [8, 32], strides = [1, 1]} : vector<8x96xf32> to vector<8x32xf32>
    %209 = arith.addf %207, %208 : vector<8x32xf32>
    %210 = arith.negf %209 : vector<8x32xf32>
    %211 = math.exp %210 : vector<8x32xf32>
    %cst_68 = arith.constant 1.000000e+00 : f32
    %212 = vector.broadcast %cst_68 : f32 to vector<8x32xf32>
    %213 = arith.addf %212, %211 : vector<8x32xf32>
    %214 = arith.divf %212, %213 : vector<8x32xf32>
    %215 = vector.extract_strided_slice %205 {offsets = [0, 32], sizes = [8, 32], strides = [1, 1]} : vector<8x96xf32> to vector<8x32xf32>
    %216 = vector.extract_strided_slice %206 {offsets = [0, 32], sizes = [8, 32], strides = [1, 1]} : vector<8x96xf32> to vector<8x32xf32>
    %217 = arith.addf %215, %216 : vector<8x32xf32>
    %218 = arith.negf %217 : vector<8x32xf32>
    %219 = math.exp %218 : vector<8x32xf32>
    %cst_69 = arith.constant 1.000000e+00 : f32
    %220 = vector.broadcast %cst_69 : f32 to vector<8x32xf32>
    %221 = arith.addf %220, %219 : vector<8x32xf32>
    %222 = arith.divf %220, %221 : vector<8x32xf32>
    %223 = vector.extract_strided_slice %205 {offsets = [0, 64], sizes = [8, 32], strides = [1, 1]} : vector<8x96xf32> to vector<8x32xf32>
    %224 = vector.extract_strided_slice %206 {offsets = [0, 64], sizes = [8, 32], strides = [1, 1]} : vector<8x96xf32> to vector<8x32xf32>
    %225 = vector.broadcast %15 : vector<1x32xf32> to vector<8x32xf32>
    %226 = arith.addf %224, %225 : vector<8x32xf32>
    %227 = arith.mulf %214, %226 : vector<8x32xf32>
    %228 = arith.addf %223, %227 : vector<8x32xf32>
    %229 = math.tanh %228 : vector<8x32xf32>
    %cst_70 = arith.constant 1.000000e+00 : f32
    %230 = vector.broadcast %cst_70 : f32 to vector<8x32xf32>
    %231 = arith.subf %230, %222 : vector<8x32xf32>
    %232 = arith.mulf %231, %229 : vector<8x32xf32>
    %233 = arith.mulf %222, %172 : vector<8x32xf32>
    %234 = arith.addf %232, %233 : vector<8x32xf32>
    %c32_71 = arith.constant 32 : index
    %c0_72 = arith.constant 0 : index
    %235 = vector.load %arg15[%c32_71, %c0_72] : memref<64x96xf32, #tpu.memory_space<vmem>>, vector<8x96xf32>
    %cst_73 = arith.constant dense<0.000000e+00> : vector<8x96xf32>
    %236 = tpu.matmul %202, %14, %cst_73 {dimension_numbers = #tpu.dot_dimension_numbers<[1], [0], [0], [1], [0, 0, 1, 1], [], []>} : vector<8x32xf32>, vector<32x96xf32>, vector<8x96xf32> -> vector<8x96xf32>
    %237 = vector.extract_strided_slice %235 {offsets = [0, 0], sizes = [8, 32], strides = [1, 1]} : vector<8x96xf32> to vector<8x32xf32>
    %238 = vector.extract_strided_slice %236 {offsets = [0, 0], sizes = [8, 32], strides = [1, 1]} : vector<8x96xf32> to vector<8x32xf32>
    %239 = arith.addf %237, %238 : vector<8x32xf32>
    %240 = arith.negf %239 : vector<8x32xf32>
    %241 = math.exp %240 : vector<8x32xf32>
    %cst_74 = arith.constant 1.000000e+00 : f32
    %242 = vector.broadcast %cst_74 : f32 to vector<8x32xf32>
    %243 = arith.addf %242, %241 : vector<8x32xf32>
    %244 = arith.divf %242, %243 : vector<8x32xf32>
    %245 = vector.extract_strided_slice %235 {offsets = [0, 32], sizes = [8, 32], strides = [1, 1]} : vector<8x96xf32> to vector<8x32xf32>
    %246 = vector.extract_strided_slice %236 {offsets = [0, 32], sizes = [8, 32], strides = [1, 1]} : vector<8x96xf32> to vector<8x32xf32>
    %247 = arith.addf %245, %246 : vector<8x32xf32>
    %248 = arith.negf %247 : vector<8x32xf32>
    %249 = math.exp %248 : vector<8x32xf32>
    %cst_75 = arith.constant 1.000000e+00 : f32
    %250 = vector.broadcast %cst_75 : f32 to vector<8x32xf32>
    %251 = arith.addf %250, %249 : vector<8x32xf32>
    %252 = arith.divf %250, %251 : vector<8x32xf32>
    %253 = vector.extract_strided_slice %235 {offsets = [0, 64], sizes = [8, 32], strides = [1, 1]} : vector<8x96xf32> to vector<8x32xf32>
    %254 = vector.extract_strided_slice %236 {offsets = [0, 64], sizes = [8, 32], strides = [1, 1]} : vector<8x96xf32> to vector<8x32xf32>
    %255 = vector.broadcast %16 : vector<1x32xf32> to vector<8x32xf32>
    %256 = arith.addf %254, %255 : vector<8x32xf32>
    %257 = arith.mulf %244, %256 : vector<8x32xf32>
    %258 = arith.addf %253, %257 : vector<8x32xf32>
    %259 = math.tanh %258 : vector<8x32xf32>
    %cst_76 = arith.constant 1.000000e+00 : f32
    %260 = vector.broadcast %cst_76 : f32 to vector<8x32xf32>
    %261 = arith.subf %260, %252 : vector<8x32xf32>
    %262 = arith.mulf %261, %259 : vector<8x32xf32>
    %263 = arith.mulf %252, %202 : vector<8x32xf32>
    %264 = arith.addf %262, %263 : vector<8x32xf32>
    %c24_77 = arith.constant 24 : index
    %c0_78 = arith.constant 0 : index
    %265 = vector.load %arg12[%c24_77, %c0_78] : memref<64x64xf32, #tpu.memory_space<vmem>>, vector<8x32xf32>
    tpu.vector_store %arg12[%c24_77, %c0_78], %234 {strides = array<i32>} : memref<64x64xf32, #tpu.memory_space<vmem>>, vector<8x32xf32>,
    %c32_79 = arith.constant 32 : index
    %c32_80 = arith.constant 32 : index
    %266 = vector.load %arg12[%c32_79, %c32_80] : memref<64x64xf32, #tpu.memory_space<vmem>>, vector<8x32xf32>
    tpu.vector_store %arg12[%c32_79, %c32_80], %264 {strides = array<i32>} : memref<64x64xf32, #tpu.memory_space<vmem>>, vector<8x32xf32>,
    %c32_81 = arith.constant 32 : index
    %c0_82 = arith.constant 0 : index
    %267 = vector.load %arg14[%c32_81, %c0_82] : memref<64x96xf32, #tpu.memory_space<vmem>>, vector<8x96xf32>
    %cst_83 = arith.constant dense<0.000000e+00> : vector<8x96xf32>
    %268 = tpu.matmul %234, %13, %cst_83 {dimension_numbers = #tpu.dot_dimension_numbers<[1], [0], [0], [1], [0, 0, 1, 1], [], []>} : vector<8x32xf32>, vector<32x96xf32>, vector<8x96xf32> -> vector<8x96xf32>
    %269 = vector.extract_strided_slice %267 {offsets = [0, 0], sizes = [8, 32], strides = [1, 1]} : vector<8x96xf32> to vector<8x32xf32>
    %270 = vector.extract_strided_slice %268 {offsets = [0, 0], sizes = [8, 32], strides = [1, 1]} : vector<8x96xf32> to vector<8x32xf32>
    %271 = arith.addf %269, %270 : vector<8x32xf32>
    %272 = arith.negf %271 : vector<8x32xf32>
    %273 = math.exp %272 : vector<8x32xf32>
    %cst_84 = arith.constant 1.000000e+00 : f32
    %274 = vector.broadcast %cst_84 : f32 to vector<8x32xf32>
    %275 = arith.addf %274, %273 : vector<8x32xf32>
    %276 = arith.divf %274, %275 : vector<8x32xf32>
    %277 = vector.extract_strided_slice %267 {offsets = [0, 32], sizes = [8, 32], strides = [1, 1]} : vector<8x96xf32> to vector<8x32xf32>
    %278 = vector.extract_strided_slice %268 {offsets = [0, 32], sizes = [8, 32], strides = [1, 1]} : vector<8x96xf32> to vector<8x32xf32>
    %279 = arith.addf %277, %278 : vector<8x32xf32>
    %280 = arith.negf %279 : vector<8x32xf32>
    %281 = math.exp %280 : vector<8x32xf32>
    %cst_85 = arith.constant 1.000000e+00 : f32
    %282 = vector.broadcast %cst_85 : f32 to vector<8x32xf32>
    %283 = arith.addf %282, %281 : vector<8x32xf32>
    %284 = arith.divf %282, %283 : vector<8x32xf32>
    %285 = vector.extract_strided_slice %267 {offsets = [0, 64], sizes = [8, 32], strides = [1, 1]} : vector<8x96xf32> to vector<8x32xf32>
    %286 = vector.extract_strided_slice %268 {offsets = [0, 64], sizes = [8, 32], strides = [1, 1]} : vector<8x96xf32> to vector<8x32xf32>
    %287 = vector.broadcast %15 : vector<1x32xf32> to vector<8x32xf32>
    %288 = arith.addf %286, %287 : vector<8x32xf32>
    %289 = arith.mulf %276, %288 : vector<8x32xf32>
    %290 = arith.addf %285, %289 : vector<8x32xf32>
    %291 = math.tanh %290 : vector<8x32xf32>
    %cst_86 = arith.constant 1.000000e+00 : f32
    %292 = vector.broadcast %cst_86 : f32 to vector<8x32xf32>
    %293 = arith.subf %292, %284 : vector<8x32xf32>
    %294 = arith.mulf %293, %291 : vector<8x32xf32>
    %295 = arith.mulf %284, %234 : vector<8x32xf32>
    %296 = arith.addf %294, %295 : vector<8x32xf32>
    %c24_87 = arith.constant 24 : index
    %c0_88 = arith.constant 0 : index
    %297 = vector.load %arg15[%c24_87, %c0_88] : memref<64x96xf32, #tpu.memory_space<vmem>>, vector<8x96xf32>
    %cst_89 = arith.constant dense<0.000000e+00> : vector<8x96xf32>
    %298 = tpu.matmul %264, %14, %cst_89 {dimension_numbers = #tpu.dot_dimension_numbers<[1], [0], [0], [1], [0, 0, 1, 1], [], []>} : vector<8x32xf32>, vector<32x96xf32>, vector<8x96xf32> -> vector<8x96xf32>
    %299 = vector.extract_strided_slice %297 {offsets = [0, 0], sizes = [8, 32], strides = [1, 1]} : vector<8x96xf32> to vector<8x32xf32>
    %300 = vector.extract_strided_slice %298 {offsets = [0, 0], sizes = [8, 32], strides = [1, 1]} : vector<8x96xf32> to vector<8x32xf32>
    %301 = arith.addf %299, %300 : vector<8x32xf32>
    %302 = arith.negf %301 : vector<8x32xf32>
    %303 = math.exp %302 : vector<8x32xf32>
    %cst_90 = arith.constant 1.000000e+00 : f32
    %304 = vector.broadcast %cst_90 : f32 to vector<8x32xf32>
    %305 = arith.addf %304, %303 : vector<8x32xf32>
    %306 = arith.divf %304, %305 : vector<8x32xf32>
    %307 = vector.extract_strided_slice %297 {offsets = [0, 32], sizes = [8, 32], strides = [1, 1]} : vector<8x96xf32> to vector<8x32xf32>
    %308 = vector.extract_strided_slice %298 {offsets = [0, 32], sizes = [8, 32], strides = [1, 1]} : vector<8x96xf32> to vector<8x32xf32>
    %309 = arith.addf %307, %308 : vector<8x32xf32>
    %310 = arith.negf %309 : vector<8x32xf32>
    %311 = math.exp %310 : vector<8x32xf32>
    %cst_91 = arith.constant 1.000000e+00 : f32
    %312 = vector.broadcast %cst_91 : f32 to vector<8x32xf32>
    %313 = arith.addf %312, %311 : vector<8x32xf32>
    %314 = arith.divf %312, %313 : vector<8x32xf32>
    %315 = vector.extract_strided_slice %297 {offsets = [0, 64], sizes = [8, 32], strides = [1, 1]} : vector<8x96xf32> to vector<8x32xf32>
    %316 = vector.extract_strided_slice %298 {offsets = [0, 64], sizes = [8, 32], strides = [1, 1]} : vector<8x96xf32> to vector<8x32xf32>
    %317 = vector.broadcast %16 : vector<1x32xf32> to vector<8x32xf32>
    %318 = arith.addf %316, %317 : vector<8x32xf32>
    %319 = arith.mulf %306, %318 : vector<8x32xf32>
    %320 = arith.addf %315, %319 : vector<8x32xf32>
    %321 = math.tanh %320 : vector<8x32xf32>
    %cst_92 = arith.constant 1.000000e+00 : f32
    %322 = vector.broadcast %cst_92 : f32 to vector<8x32xf32>
    %323 = arith.subf %322, %314 : vector<8x32xf32>
    %324 = arith.mulf %323, %321 : vector<8x32xf32>
    %325 = arith.mulf %314, %264 : vector<8x32xf32>
    %326 = arith.addf %324, %325 : vector<8x32xf32>
    %c32_93 = arith.constant 32 : index
    %c0_94 = arith.constant 0 : index
    %327 = vector.load %arg12[%c32_93, %c0_94] : memref<64x64xf32, #tpu.memory_space<vmem>>, vector<8x32xf32>
    tpu.vector_store %arg12[%c32_93, %c0_94], %296 {strides = array<i32>} : memref<64x64xf32, #tpu.memory_space<vmem>>, vector<8x32xf32>,
    %c24_95 = arith.constant 24 : index
    %c32_96 = arith.constant 32 : index
    %328 = vector.load %arg12[%c24_95, %c32_96] : memref<64x64xf32, #tpu.memory_space<vmem>>, vector<8x32xf32>
    tpu.vector_store %arg12[%c24_95, %c32_96], %326 {strides = array<i32>} : memref<64x64xf32, #tpu.memory_space<vmem>>, vector<8x32xf32>,
    %c40_97 = arith.constant 40 : index
    %c0_98 = arith.constant 0 : index
    %329 = vector.load %arg14[%c40_97, %c0_98] : memref<64x96xf32, #tpu.memory_space<vmem>>, vector<8x96xf32>
    %cst_99 = arith.constant dense<0.000000e+00> : vector<8x96xf32>
    %330 = tpu.matmul %296, %13, %cst_99 {dimension_numbers = #tpu.dot_dimension_numbers<[1], [0], [0], [1], [0, 0, 1, 1], [], []>} : vector<8x32xf32>, vector<32x96xf32>, vector<8x96xf32> -> vector<8x96xf32>
    %331 = vector.extract_strided_slice %329 {offsets = [0, 0], sizes = [8, 32], strides = [1, 1]} : vector<8x96xf32> to vector<8x32xf32>
    %332 = vector.extract_strided_slice %330 {offsets = [0, 0], sizes = [8, 32], strides = [1, 1]} : vector<8x96xf32> to vector<8x32xf32>
    %333 = arith.addf %331, %332 : vector<8x32xf32>
    %334 = arith.negf %333 : vector<8x32xf32>
    %335 = math.exp %334 : vector<8x32xf32>
    %cst_100 = arith.constant 1.000000e+00 : f32
    %336 = vector.broadcast %cst_100 : f32 to vector<8x32xf32>
    %337 = arith.addf %336, %335 : vector<8x32xf32>
    %338 = arith.divf %336, %337 : vector<8x32xf32>
    %339 = vector.extract_strided_slice %329 {offsets = [0, 32], sizes = [8, 32], strides = [1, 1]} : vector<8x96xf32> to vector<8x32xf32>
    %340 = vector.extract_strided_slice %330 {offsets = [0, 32], sizes = [8, 32], strides = [1, 1]} : vector<8x96xf32> to vector<8x32xf32>
    %341 = arith.addf %339, %340 : vector<8x32xf32>
    %342 = arith.negf %341 : vector<8x32xf32>
    %343 = math.exp %342 : vector<8x32xf32>
    %cst_101 = arith.constant 1.000000e+00 : f32
    %344 = vector.broadcast %cst_101 : f32 to vector<8x32xf32>
    %345 = arith.addf %344, %343 : vector<8x32xf32>
    %346 = arith.divf %344, %345 : vector<8x32xf32>
    %347 = vector.extract_strided_slice %329 {offsets = [0, 64], sizes = [8, 32], strides = [1, 1]} : vector<8x96xf32> to vector<8x32xf32>
    %348 = vector.extract_strided_slice %330 {offsets = [0, 64], sizes = [8, 32], strides = [1, 1]} : vector<8x96xf32> to vector<8x32xf32>
    %349 = vector.broadcast %15 : vector<1x32xf32> to vector<8x32xf32>
    %350 = arith.addf %348, %349 : vector<8x32xf32>
    %351 = arith.mulf %338, %350 : vector<8x32xf32>
    %352 = arith.addf %347, %351 : vector<8x32xf32>
    %353 = math.tanh %352 : vector<8x32xf32>
    %cst_102 = arith.constant 1.000000e+00 : f32
    %354 = vector.broadcast %cst_102 : f32 to vector<8x32xf32>
    %355 = arith.subf %354, %346 : vector<8x32xf32>
    %356 = arith.mulf %355, %353 : vector<8x32xf32>
    %357 = arith.mulf %346, %296 : vector<8x32xf32>
    %358 = arith.addf %356, %357 : vector<8x32xf32>
    %c16_103 = arith.constant 16 : index
    %c0_104 = arith.constant 0 : index
    %359 = vector.load %arg15[%c16_103, %c0_104] : memref<64x96xf32, #tpu.memory_space<vmem>>, vector<8x96xf32>
    %cst_105 = arith.constant dense<0.000000e+00> : vector<8x96xf32>
    %360 = tpu.matmul %326, %14, %cst_105 {dimension_numbers = #tpu.dot_dimension_numbers<[1], [0], [0], [1], [0, 0, 1, 1], [], []>} : vector<8x32xf32>, vector<32x96xf32>, vector<8x96xf32> -> vector<8x96xf32>
    %361 = vector.extract_strided_slice %359 {offsets = [0, 0], sizes = [8, 32], strides = [1, 1]} : vector<8x96xf32> to vector<8x32xf32>
    %362 = vector.extract_strided_slice %360 {offsets = [0, 0], sizes = [8, 32], strides = [1, 1]} : vector<8x96xf32> to vector<8x32xf32>
    %363 = arith.addf %361, %362 : vector<8x32xf32>
    %364 = arith.negf %363 : vector<8x32xf32>
    %365 = math.exp %364 : vector<8x32xf32>
    %cst_106 = arith.constant 1.000000e+00 : f32
    %366 = vector.broadcast %cst_106 : f32 to vector<8x32xf32>
    %367 = arith.addf %366, %365 : vector<8x32xf32>
    %368 = arith.divf %366, %367 : vector<8x32xf32>
    %369 = vector.extract_strided_slice %359 {offsets = [0, 32], sizes = [8, 32], strides = [1, 1]} : vector<8x96xf32> to vector<8x32xf32>
    %370 = vector.extract_strided_slice %360 {offsets = [0, 32], sizes = [8, 32], strides = [1, 1]} : vector<8x96xf32> to vector<8x32xf32>
    %371 = arith.addf %369, %370 : vector<8x32xf32>
    %372 = arith.negf %371 : vector<8x32xf32>
    %373 = math.exp %372 : vector<8x32xf32>
    %cst_107 = arith.constant 1.000000e+00 : f32
    %374 = vector.broadcast %cst_107 : f32 to vector<8x32xf32>
    %375 = arith.addf %374, %373 : vector<8x32xf32>
    %376 = arith.divf %374, %375 : vector<8x32xf32>
    %377 = vector.extract_strided_slice %359 {offsets = [0, 64], sizes = [8, 32], strides = [1, 1]} : vector<8x96xf32> to vector<8x32xf32>
    %378 = vector.extract_strided_slice %360 {offsets = [0, 64], sizes = [8, 32], strides = [1, 1]} : vector<8x96xf32> to vector<8x32xf32>
    %379 = vector.broadcast %16 : vector<1x32xf32> to vector<8x32xf32>
    %380 = arith.addf %378, %379 : vector<8x32xf32>
    %381 = arith.mulf %368, %380 : vector<8x32xf32>
    %382 = arith.addf %377, %381 : vector<8x32xf32>
    %383 = math.tanh %382 : vector<8x32xf32>
    %cst_108 = arith.constant 1.000000e+00 : f32
    %384 = vector.broadcast %cst_108 : f32 to vector<8x32xf32>
    %385 = arith.subf %384, %376 : vector<8x32xf32>
    %386 = arith.mulf %385, %383 : vector<8x32xf32>
    %387 = arith.mulf %376, %326 : vector<8x32xf32>
    %388 = arith.addf %386, %387 : vector<8x32xf32>
    %c40_109 = arith.constant 40 : index
    %c0_110 = arith.constant 0 : index
    %389 = vector.load %arg12[%c40_109, %c0_110] : memref<64x64xf32, #tpu.memory_space<vmem>>, vector<8x32xf32>
    tpu.vector_store %arg12[%c40_109, %c0_110], %358 {strides = array<i32>} : memref<64x64xf32, #tpu.memory_space<vmem>>, vector<8x32xf32>,
    %c16_111 = arith.constant 16 : index
    %c32_112 = arith.constant 32 : index
    %390 = vector.load %arg12[%c16_111, %c32_112] : memref<64x64xf32, #tpu.memory_space<vmem>>, vector<8x32xf32>
    tpu.vector_store %arg12[%c16_111, %c32_112], %388 {strides = array<i32>} : memref<64x64xf32, #tpu.memory_space<vmem>>, vector<8x32xf32>,
    %c48_113 = arith.constant 48 : index
    %c0_114 = arith.constant 0 : index
    %391 = vector.load %arg14[%c48_113, %c0_114] : memref<64x96xf32, #tpu.memory_space<vmem>>, vector<8x96xf32>
    %cst_115 = arith.constant dense<0.000000e+00> : vector<8x96xf32>
    %392 = tpu.matmul %358, %13, %cst_115 {dimension_numbers = #tpu.dot_dimension_numbers<[1], [0], [0], [1], [0, 0, 1, 1], [], []>} : vector<8x32xf32>, vector<32x96xf32>, vector<8x96xf32> -> vector<8x96xf32>
    %393 = vector.extract_strided_slice %391 {offsets = [0, 0], sizes = [8, 32], strides = [1, 1]} : vector<8x96xf32> to vector<8x32xf32>
    %394 = vector.extract_strided_slice %392 {offsets = [0, 0], sizes = [8, 32], strides = [1, 1]} : vector<8x96xf32> to vector<8x32xf32>
    %395 = arith.addf %393, %394 : vector<8x32xf32>
    %396 = arith.negf %395 : vector<8x32xf32>
    %397 = math.exp %396 : vector<8x32xf32>
    %cst_116 = arith.constant 1.000000e+00 : f32
    %398 = vector.broadcast %cst_116 : f32 to vector<8x32xf32>
    %399 = arith.addf %398, %397 : vector<8x32xf32>
    %400 = arith.divf %398, %399 : vector<8x32xf32>
    %401 = vector.extract_strided_slice %391 {offsets = [0, 32], sizes = [8, 32], strides = [1, 1]} : vector<8x96xf32> to vector<8x32xf32>
    %402 = vector.extract_strided_slice %392 {offsets = [0, 32], sizes = [8, 32], strides = [1, 1]} : vector<8x96xf32> to vector<8x32xf32>
    %403 = arith.addf %401, %402 : vector<8x32xf32>
    %404 = arith.negf %403 : vector<8x32xf32>
    %405 = math.exp %404 : vector<8x32xf32>
    %cst_117 = arith.constant 1.000000e+00 : f32
    %406 = vector.broadcast %cst_117 : f32 to vector<8x32xf32>
    %407 = arith.addf %406, %405 : vector<8x32xf32>
    %408 = arith.divf %406, %407 : vector<8x32xf32>
    %409 = vector.extract_strided_slice %391 {offsets = [0, 64], sizes = [8, 32], strides = [1, 1]} : vector<8x96xf32> to vector<8x32xf32>
    %410 = vector.extract_strided_slice %392 {offsets = [0, 64], sizes = [8, 32], strides = [1, 1]} : vector<8x96xf32> to vector<8x32xf32>
    %411 = vector.broadcast %15 : vector<1x32xf32> to vector<8x32xf32>
    %412 = arith.addf %410, %411 : vector<8x32xf32>
    %413 = arith.mulf %400, %412 : vector<8x32xf32>
    %414 = arith.addf %409, %413 : vector<8x32xf32>
    %415 = math.tanh %414 : vector<8x32xf32>
    %cst_118 = arith.constant 1.000000e+00 : f32
    %416 = vector.broadcast %cst_118 : f32 to vector<8x32xf32>
    %417 = arith.subf %416, %408 : vector<8x32xf32>
    %418 = arith.mulf %417, %415 : vector<8x32xf32>
    %419 = arith.mulf %408, %358 : vector<8x32xf32>
    %420 = arith.addf %418, %419 : vector<8x32xf32>
    %c8_119 = arith.constant 8 : index
    %c0_120 = arith.constant 0 : index
    %421 = vector.load %arg15[%c8_119, %c0_120] : memref<64x96xf32, #tpu.memory_space<vmem>>, vector<8x96xf32>
    %cst_121 = arith.constant dense<0.000000e+00> : vector<8x96xf32>
    %422 = tpu.matmul %388, %14, %cst_121 {dimension_numbers = #tpu.dot_dimension_numbers<[1], [0], [0], [1], [0, 0, 1, 1], [], []>} : vector<8x32xf32>, vector<32x96xf32>, vector<8x96xf32> -> vector<8x96xf32>
    %423 = vector.extract_strided_slice %421 {offsets = [0, 0], sizes = [8, 32], strides = [1, 1]} : vector<8x96xf32> to vector<8x32xf32>
    %424 = vector.extract_strided_slice %422 {offsets = [0, 0], sizes = [8, 32], strides = [1, 1]} : vector<8x96xf32> to vector<8x32xf32>
    %425 = arith.addf %423, %424 : vector<8x32xf32>
    %426 = arith.negf %425 : vector<8x32xf32>
    %427 = math.exp %426 : vector<8x32xf32>
    %cst_122 = arith.constant 1.000000e+00 : f32
    %428 = vector.broadcast %cst_122 : f32 to vector<8x32xf32>
    %429 = arith.addf %428, %427 : vector<8x32xf32>
    %430 = arith.divf %428, %429 : vector<8x32xf32>
    %431 = vector.extract_strided_slice %421 {offsets = [0, 32], sizes = [8, 32], strides = [1, 1]} : vector<8x96xf32> to vector<8x32xf32>
    %432 = vector.extract_strided_slice %422 {offsets = [0, 32], sizes = [8, 32], strides = [1, 1]} : vector<8x96xf32> to vector<8x32xf32>
    %433 = arith.addf %431, %432 : vector<8x32xf32>
    %434 = arith.negf %433 : vector<8x32xf32>
    %435 = math.exp %434 : vector<8x32xf32>
    %cst_123 = arith.constant 1.000000e+00 : f32
    %436 = vector.broadcast %cst_123 : f32 to vector<8x32xf32>
    %437 = arith.addf %436, %435 : vector<8x32xf32>
    %438 = arith.divf %436, %437 : vector<8x32xf32>
    %439 = vector.extract_strided_slice %421 {offsets = [0, 64], sizes = [8, 32], strides = [1, 1]} : vector<8x96xf32> to vector<8x32xf32>
    %440 = vector.extract_strided_slice %422 {offsets = [0, 64], sizes = [8, 32], strides = [1, 1]} : vector<8x96xf32> to vector<8x32xf32>
    %441 = vector.broadcast %16 : vector<1x32xf32> to vector<8x32xf32>
    %442 = arith.addf %440, %441 : vector<8x32xf32>
    %443 = arith.mulf %430, %442 : vector<8x32xf32>
    %444 = arith.addf %439, %443 : vector<8x32xf32>
    %445 = math.tanh %444 : vector<8x32xf32>
    %cst_124 = arith.constant 1.000000e+00 : f32
    %446 = vector.broadcast %cst_124 : f32 to vector<8x32xf32>
    %447 = arith.subf %446, %438 : vector<8x32xf32>
    %448 = arith.mulf %447, %445 : vector<8x32xf32>
    %449 = arith.mulf %438, %388 : vector<8x32xf32>
    %450 = arith.addf %448, %449 : vector<8x32xf32>
    %c48_125 = arith.constant 48 : index
    %c0_126 = arith.constant 0 : index
    %451 = vector.load %arg12[%c48_125, %c0_126] : memref<64x64xf32, #tpu.memory_space<vmem>>, vector<8x32xf32>
    tpu.vector_store %arg12[%c48_125, %c0_126], %420 {strides = array<i32>} : memref<64x64xf32, #tpu.memory_space<vmem>>, vector<8x32xf32>,
    %c8_127 = arith.constant 8 : index
    %c32_128 = arith.constant 32 : index
    %452 = vector.load %arg12[%c8_127, %c32_128] : memref<64x64xf32, #tpu.memory_space<vmem>>, vector<8x32xf32>
    tpu.vector_store %arg12[%c8_127, %c32_128], %450 {strides = array<i32>} : memref<64x64xf32, #tpu.memory_space<vmem>>, vector<8x32xf32>,
    %c56_129 = arith.constant 56 : index
    %c0_130 = arith.constant 0 : index
    %453 = vector.load %arg14[%c56_129, %c0_130] : memref<64x96xf32, #tpu.memory_space<vmem>>, vector<8x96xf32>
    %cst_131 = arith.constant dense<0.000000e+00> : vector<8x96xf32>
    %454 = tpu.matmul %420, %13, %cst_131 {dimension_numbers = #tpu.dot_dimension_numbers<[1], [0], [0], [1], [0, 0, 1, 1], [], []>} : vector<8x32xf32>, vector<32x96xf32>, vector<8x96xf32> -> vector<8x96xf32>
    %455 = vector.extract_strided_slice %453 {offsets = [0, 0], sizes = [8, 32], strides = [1, 1]} : vector<8x96xf32> to vector<8x32xf32>
    %456 = vector.extract_strided_slice %454 {offsets = [0, 0], sizes = [8, 32], strides = [1, 1]} : vector<8x96xf32> to vector<8x32xf32>
    %457 = arith.addf %455, %456 : vector<8x32xf32>
    %458 = arith.negf %457 : vector<8x32xf32>
    %459 = math.exp %458 : vector<8x32xf32>
    %cst_132 = arith.constant 1.000000e+00 : f32
    %460 = vector.broadcast %cst_132 : f32 to vector<8x32xf32>
    %461 = arith.addf %460, %459 : vector<8x32xf32>
    %462 = arith.divf %460, %461 : vector<8x32xf32>
    %463 = vector.extract_strided_slice %453 {offsets = [0, 32], sizes = [8, 32], strides = [1, 1]} : vector<8x96xf32> to vector<8x32xf32>
    %464 = vector.extract_strided_slice %454 {offsets = [0, 32], sizes = [8, 32], strides = [1, 1]} : vector<8x96xf32> to vector<8x32xf32>
    %465 = arith.addf %463, %464 : vector<8x32xf32>
    %466 = arith.negf %465 : vector<8x32xf32>
    %467 = math.exp %466 : vector<8x32xf32>
    %cst_133 = arith.constant 1.000000e+00 : f32
    %468 = vector.broadcast %cst_133 : f32 to vector<8x32xf32>
    %469 = arith.addf %468, %467 : vector<8x32xf32>
    %470 = arith.divf %468, %469 : vector<8x32xf32>
    %471 = vector.extract_strided_slice %453 {offsets = [0, 64], sizes = [8, 32], strides = [1, 1]} : vector<8x96xf32> to vector<8x32xf32>
    %472 = vector.extract_strided_slice %454 {offsets = [0, 64], sizes = [8, 32], strides = [1, 1]} : vector<8x96xf32> to vector<8x32xf32>
    %473 = vector.broadcast %15 : vector<1x32xf32> to vector<8x32xf32>
    %474 = arith.addf %472, %473 : vector<8x32xf32>
    %475 = arith.mulf %462, %474 : vector<8x32xf32>
    %476 = arith.addf %471, %475 : vector<8x32xf32>
    %477 = math.tanh %476 : vector<8x32xf32>
    %cst_134 = arith.constant 1.000000e+00 : f32
    %478 = vector.broadcast %cst_134 : f32 to vector<8x32xf32>
    %479 = arith.subf %478, %470 : vector<8x32xf32>
    %480 = arith.mulf %479, %477 : vector<8x32xf32>
    %481 = arith.mulf %470, %420 : vector<8x32xf32>
    %482 = arith.addf %480, %481 : vector<8x32xf32>
    %c0_135 = arith.constant 0 : index
    %c0_136 = arith.constant 0 : index
    %483 = vector.load %arg15[%c0_135, %c0_136] : memref<64x96xf32, #tpu.memory_space<vmem>>, vector<8x96xf32>
    %cst_137 = arith.constant dense<0.000000e+00> : vector<8x96xf32>
    %484 = tpu.matmul %450, %14, %cst_137 {dimension_numbers = #tpu.dot_dimension_numbers<[1], [0], [0], [1], [0, 0, 1, 1], [], []>} : vector<8x32xf32>, vector<32x96xf32>, vector<8x96xf32> -> vector<8x96xf32>
    %485 = vector.extract_strided_slice %483 {offsets = [0, 0], sizes = [8, 32], strides = [1, 1]} : vector<8x96xf32> to vector<8x32xf32>
    %486 = vector.extract_strided_slice %484 {offsets = [0, 0], sizes = [8, 32], strides = [1, 1]} : vector<8x96xf32> to vector<8x32xf32>
    %487 = arith.addf %485, %486 : vector<8x32xf32>
    %488 = arith.negf %487 : vector<8x32xf32>
    %489 = math.exp %488 : vector<8x32xf32>
    %cst_138 = arith.constant 1.000000e+00 : f32
    %490 = vector.broadcast %cst_138 : f32 to vector<8x32xf32>
    %491 = arith.addf %490, %489 : vector<8x32xf32>
    %492 = arith.divf %490, %491 : vector<8x32xf32>
    %493 = vector.extract_strided_slice %483 {offsets = [0, 32], sizes = [8, 32], strides = [1, 1]} : vector<8x96xf32> to vector<8x32xf32>
    %494 = vector.extract_strided_slice %484 {offsets = [0, 32], sizes = [8, 32], strides = [1, 1]} : vector<8x96xf32> to vector<8x32xf32>
    %495 = arith.addf %493, %494 : vector<8x32xf32>
    %496 = arith.negf %495 : vector<8x32xf32>
    %497 = math.exp %496 : vector<8x32xf32>
    %cst_139 = arith.constant 1.000000e+00 : f32
    %498 = vector.broadcast %cst_139 : f32 to vector<8x32xf32>
    %499 = arith.addf %498, %497 : vector<8x32xf32>
    %500 = arith.divf %498, %499 : vector<8x32xf32>
    %501 = vector.extract_strided_slice %483 {offsets = [0, 64], sizes = [8, 32], strides = [1, 1]} : vector<8x96xf32> to vector<8x32xf32>
    %502 = vector.extract_strided_slice %484 {offsets = [0, 64], sizes = [8, 32], strides = [1, 1]} : vector<8x96xf32> to vector<8x32xf32>
    %503 = vector.broadcast %16 : vector<1x32xf32> to vector<8x32xf32>
    %504 = arith.addf %502, %503 : vector<8x32xf32>
    %505 = arith.mulf %492, %504 : vector<8x32xf32>
    %506 = arith.addf %501, %505 : vector<8x32xf32>
    %507 = math.tanh %506 : vector<8x32xf32>
    %cst_140 = arith.constant 1.000000e+00 : f32
    %508 = vector.broadcast %cst_140 : f32 to vector<8x32xf32>
    %509 = arith.subf %508, %500 : vector<8x32xf32>
    %510 = arith.mulf %509, %507 : vector<8x32xf32>
    %511 = arith.mulf %500, %450 : vector<8x32xf32>
    %512 = arith.addf %510, %511 : vector<8x32xf32>
    %c56_141 = arith.constant 56 : index
    %c0_142 = arith.constant 0 : index
    %513 = vector.load %arg12[%c56_141, %c0_142] : memref<64x64xf32, #tpu.memory_space<vmem>>, vector<8x32xf32>
    tpu.vector_store %arg12[%c56_141, %c0_142], %482 {strides = array<i32>} : memref<64x64xf32, #tpu.memory_space<vmem>>, vector<8x32xf32>,
    %c0_143 = arith.constant 0 : index
    %c32_144 = arith.constant 32 : index
    %514 = vector.load %arg12[%c0_143, %c32_144] : memref<64x64xf32, #tpu.memory_space<vmem>>, vector<8x32xf32>
    tpu.vector_store %arg12[%c0_143, %c32_144], %512 {strides = array<i32>} : memref<64x64xf32, #tpu.memory_space<vmem>>, vector<8x32xf32>,
    %c0_145 = arith.constant 0 : index
    %c0_146 = arith.constant 0 : index
    %515 = vector.load %arg9[%c0_145, %c0_146] : memref<32x32xf32, #tpu.memory_space<vmem>>, vector<32x32xf32>
    %cst_147 = arith.constant dense<0.000000e+00> : vector<8x32xf32>
    %516 = tpu.matmul %482, %515, %cst_147 {dimension_numbers = #tpu.dot_dimension_numbers<[1], [0], [0], [1], [0, 0, 1, 1], [], []>} : vector<8x32xf32>, vector<32x32xf32>, vector<8x32xf32> -> vector<8x32xf32>
    %c0_148 = arith.constant 0 : index
    %c0_149 = arith.constant 0 : index
    %517 = vector.load %arg10[%c0_148, %c0_149] : memref<32x32xf32, #tpu.memory_space<vmem>>, vector<32x32xf32>
    %cst_150 = arith.constant dense<0.000000e+00> : vector<8x32xf32>
    %518 = tpu.matmul %512, %517, %cst_150 {dimension_numbers = #tpu.dot_dimension_numbers<[1], [0], [0], [1], [0, 0, 1, 1], [], []>} : vector<8x32xf32>, vector<32x32xf32>, vector<8x32xf32> -> vector<8x32xf32>
    %519 = arith.addf %516, %518 : vector<8x32xf32>
    %c0_151 = arith.constant 0 : index
    %c0_152 = arith.constant 0 : index
    %520 = vector.load %arg11[%c0_151, %c0_152] : memref<1x32xf32, #tpu.memory_space<vmem>>, vector<1x32xf32>
    %521 = vector.broadcast %520 : vector<1x32xf32> to vector<8x32xf32>
    %522 = arith.addf %519, %521 : vector<8x32xf32>
    %523 = math.tanh %522 : vector<8x32xf32>
    %c0_153 = arith.constant 0 : index
    %c0_154 = arith.constant 0 : index
    %524 = vector.load %arg13[%c0_153, %c0_154] : memref<8x32xf32, #tpu.memory_space<vmem>>, vector<8x32xf32>
    tpu.vector_store %arg13[%c0_153, %c0_154], %523 {strides = array<i32>} : memref<8x32xf32, #tpu.memory_space<vmem>>, vector<8x32xf32>,
    return
  }
}

</mosaic_0001>

<llo_original>
// kernel: encoder_bigru_forward.3
$region0: #{encoder_bigru_forward.3}
  #allocation0 [shape = 'u32[]', space=smem, size = 0x4, offset = 0x4, fixed_abs, tag = 'smem constant byte address 0x4 - core index']
  #allocation1 [shape = 'u32[144,128]{1,0:T(1,128)}', space=vmem, size = 0x12000, scoped, tag = 'internal scratch']
  #allocation2 [shape = 'f32[64,96]{1,0:T(8,128)}', space=vmem, size = 0x8000, scoped, tag = 'scratch operand']
  #allocation3 [shape = 'f32[64,96]{1,0:T(8,128)}', space=vmem, size = 0x8000, scoped, tag = 'scratch operand']
  %s0 = inlined_call_operand.vmem [shape: f32[64,64], index: 0, kind: input, shape index: {}]
  %s1 = inlined_call_operand.vmem [shape: f32[64,96], index: 1, kind: input, shape index: {}]
  %s2 = inlined_call_operand.vmem [shape: f32[64,96], index: 2, kind: input, shape index: {}]
  %s3 = inlined_call_operand.vmem [shape: f32[1,96], index: 3, kind: input, shape index: {}]
  %s4 = inlined_call_operand.vmem [shape: f32[1,96], index: 4, kind: input, shape index: {}]
  %s5 = inlined_call_operand.vmem [shape: f32[32,96], index: 5, kind: input, shape index: {}]
  %s6 = inlined_call_operand.vmem [shape: f32[32,96], index: 6, kind: input, shape index: {}]
  %s7 = inlined_call_operand.vmem [shape: f32[1,32], index: 7, kind: input, shape index: {}]
  %s8 = inlined_call_operand.vmem [shape: f32[1,32], index: 8, kind: input, shape index: {}]
  %s9 = inlined_call_operand.vmem [shape: f32[32,32], index: 9, kind: input, shape index: {}]
  %s10 = inlined_call_operand.vmem [shape: f32[32,32], index: 10, kind: input, shape index: {}]
  %s11 = inlined_call_operand.vmem [shape: f32[1,32], index: 11, kind: input, shape index: {}]
  %s12 = inlined_call_operand.vmem [shape: f32[64,64], index: 12, kind: output, shape index: {0}]
  %s13 = inlined_call_operand.vmem [shape: f32[8,32], index: 13, kind: output, shape index: {1}]
  %14 = xla_tuple %s12, %s13
  %s15 = sld [smem:[#allocation0]]
  $region66: #{encoder_bigru_forward.3} parent=0
    _
  %s17 = ssub.s32 1, %s15
  %s18 = scalar_select 0, %s17, %s15
  // Predicated region
  $region2: #{encoder_bigru_forward.3} parent=0 // pred_check
    _
  $region3: #{encoder_bigru_forward.3} parent=0 // pred_check_branch
    %20 = sbr.rel (0) target = $region5
  $region4: #{encoder_bigru_forward.3} parent=0 // pred_region
    _
  $region5: #{encoder_bigru_forward.3} parent=0 // pred_fallthru
    _
  // Predicated region
  $region6: #{encoder_bigru_forward.3} parent=0 // pred_check
    _
  $region7: #{encoder_bigru_forward.3} parent=0 // pred_check_branch
    %22 = sbr.rel (0) target = $region9
  $region8: #{encoder_bigru_forward.3} parent=0 // pred_region
    _
  $region9: #{encoder_bigru_forward.3} parent=0 // pred_fallthru
    _
  // Predicated region
  $region10: #{encoder_bigru_forward.3} parent=0 // pred_check
    _
  $region11: #{encoder_bigru_forward.3} parent=0 // pred_check_branch
    %24 = sbr.rel (0) target = $region13
  $region12: #{encoder_bigru_forward.3} parent=0 // pred_region
    _
  $region13: #{encoder_bigru_forward.3} parent=0 // pred_fallthru
    _
  // Predicated region
  $region14: #{encoder_bigru_forward.3} parent=0 // pred_check
    _
  $region15: #{encoder_bigru_forward.3} parent=0 // pred_check_branch
    %26 = sbr.rel (0) target = $region17
  $region16: #{encoder_bigru_forward.3} parent=0 // pred_region
    _
  $region17: #{encoder_bigru_forward.3} parent=0 // pred_fallthru
    _
  // Predicated region
  $region18: #{encoder_bigru_forward.3} parent=0 // pred_check
    _
  $region19: #{encoder_bigru_forward.3} parent=0 // pred_check_branch
    %28 = sbr.rel (0) target = $region21
  $region20: #{encoder_bigru_forward.3} parent=0 // pred_region
    _
  $region21: #{encoder_bigru_forward.3} parent=0 // pred_fallthru
    _
  // Predicated region
  $region22: #{encoder_bigru_forward.3} parent=0 // pred_check
    _
  $region23: #{encoder_bigru_forward.3} parent=0 // pred_check_branch
    %30 = sbr.rel (0) target = $region25
  $region24: #{encoder_bigru_forward.3} parent=0 // pred_region
    _
  $region25: #{encoder_bigru_forward.3} parent=0 // pred_fallthru
    _
  // Predicated region
  $region26: #{encoder_bigru_forward.3} parent=0 // pred_check
    _
  $region27: #{encoder_bigru_forward.3} parent=0 // pred_check_branch
    %32 = sbr.rel (0) target = $region29
  $region28: #{encoder_bigru_forward.3} parent=0 // pred_region
    _
  $region29: #{encoder_bigru_forward.3} parent=0 // pred_fallthru
    _
  // Predicated region
  $region30: #{encoder_bigru_forward.3} parent=0 // pred_check
    _
  $region31: #{encoder_bigru_forward.3} parent=0 // pred_check_branch
    %34 = sbr.rel (0) target = $region33
  $region32: #{encoder_bigru_forward.3} parent=0 // pred_region
    _
  $region33: #{encoder_bigru_forward.3} parent=0 // pred_fallthru
    _
  // Predicated region
  $region34: #{encoder_bigru_forward.3} parent=0 // pred_check
    _
  $region35: #{encoder_bigru_forward.3} parent=0 // pred_check_branch
    %36 = sbr.rel (0) target = $region37
  $region36: #{encoder_bigru_forward.3} parent=0 // pred_region
    _
  $region37: #{encoder_bigru_forward.3} parent=0 // pred_fallthru
    _
  // Predicated region
  $region38: #{encoder_bigru_forward.3} parent=0 // pred_check
    _
  $region39: #{encoder_bigru_forward.3} parent=0 // pred_check_branch
    %38 = sbr.rel (0) target = $region41
  $region40: #{encoder_bigru_forward.3} parent=0 // pred_region
    _
  $region41: #{encoder_bigru_forward.3} parent=0 // pred_fallthru
    _
  // Predicated region
  $region42: #{encoder_bigru_forward.3} parent=0 // pred_check
    _
  $region43: #{encoder_bigru_forward.3} parent=0 // pred_check_branch
    %40 = sbr.rel (0) target = $region45
  $region44: #{encoder_bigru_forward.3} parent=0 // pred_region
    _
  $region45: #{encoder_bigru_forward.3} parent=0 // pred_fallthru
    _
  // Predicated region
  $region46: #{encoder_bigru_forward.3} parent=0 // pred_check
    _
  $region47: #{encoder_bigru_forward.3} parent=0 // pred_check_branch
    %42 = sbr.rel (0) target = $region49
  $region48: #{encoder_bigru_forward.3} parent=0 // pred_region
    _
  $region49: #{encoder_bigru_forward.3} parent=0 // pred_fallthru
    _
  %v43 = vld [vmem:[%s0] sm:$0xff]
  %v44 = vld [vmem:[%s0 + $0x8] sm:$0xff]
  %v45 = vld [vmem:[%s0 + $0x10] sm:$0xff]
  %v46 = vld [vmem:[%s0 + $0x18] sm:$0xff]
  %v47 = vld [vmem:[%s0 + $0x20] sm:$0xff]
  %v48 = vld [vmem:[%s0 + $0x28] sm:$0xff]
  %v49 = vld [vmem:[%s0 + $0x30] sm:$0xff]
  %v50 = vld [vmem:[%s0 + $0x38] sm:$0xff]
  %v51 = vld [vmem:[%s1] sm:$0xff]
  %v52 = vld [vmem:[%s1 + $0x8] sm:$0xff]
  %v53 = vld [vmem:[%s1 + $0x10] sm:$0xff]
  %v54 = vld [vmem:[%s1 + $0x18] sm:$0xff]
  %v55 = vld [vmem:[%s1 + $0x20] sm:$0xff]
  %v56 = vld [vmem:[%s1 + $0x28] sm:$0xff]
  %v57 = vld [vmem:[%s1 + $0x30] sm:$0xff]
  %v58 = vld [vmem:[%s1 + $0x38] sm:$0xff]
  %v59 = vld [vmem:[%s3] sm:$0x1]
  %v61 = vlaneseq
  %v62 = vshrl.u32 %v61, 7
  %v63 = vsub.s32 0, %v62
  %v64 = vrot.slane %v59, %v63
  %vm66 = vcmask 523264
  %v68 = vsel %vm66, %v43, 0
  %v71 = vsel %vm66, %v44, 0
  %v74 = vsel %vm66, %v45, 0
  %v77 = vsel %vm66, %v46, 0
  %v80 = vsel %vm66, %v47, 0
  %v83 = vsel %vm66, %v48, 0
  %v86 = vsel %vm66, %v49, 0
  %v89 = vsel %vm66, %v50, 0
  %91 = vmatprep.subr.mxu0 0.0
  %92 = vmatpush1.msra.mxu0 %v51
  %93 = vmatprep.subr.mxu0 0.0
  %94 = vmatpush1.msra.mxu0 %v52
  %95 = vmatprep.subr.mxu0 0.0
  %96 = vmatpush1.msra.mxu0 %v53
  %97 = vmatprep.subr.mxu0 0.0
  %98 = vmatpush1.msra.mxu0 %v54
  %99 = vmatprep.subr.mxu0 0.0
  %100 = vmatpush1.msra.mxu0 %v55
  %101 = vmatprep.subr.mxu0 0.0
  %102 = vmatpush1.msra.mxu0 %v56
  %103 = vmatprep.subr.mxu0 0.0
  %104 = vmatpush1.msra.mxu0 %v57
  %105 = vmatprep.subr.mxu0 0.0
  %106 = vmatpush1.msra.mxu0 %v58
  %107 = vmatprep.subr.mxu0 0.0
  %108 = vmatpush1.msra.mxu0 0.0
  %109 = vmatprep.subr.mxu0 0.0
  %110 = vmatpush1.msra.mxu0 0.0
  %111 = vmatprep.subr.mxu0 0.0
  %112 = vmatpush1.msra.mxu0 0.0
  %113 = vmatprep.subr.mxu0 0.0
  %114 = vmatpush1.msra.mxu0 0.0
  %115 = vmatprep.subr.mxu0 0.0
  %116 = vmatpush1.msra.mxu0 0.0
  %117 = vmatprep.subr.mxu0 0.0
  %118 = vmatpush1.msra.mxu0 0.0
  %119 = vmatprep.subr.mxu0 0.0
  %120 = vmatpush1.msra.mxu0 0.0
  %121 = vmatprep.subr.mxu0 0.0
  %122 = vmatpush1.msra.mxu0 0.0
  %123 = vmatprep.subr.mxu0 0.0
  %124 = vmatpush1.msra.mxu0 0.0
  %125 = vmatprep.subr.mxu0 0.0
  %126 = vmatpush1.msra.mxu0 0.0
  %127 = vmatprep.subr.mxu0 0.0
  %128 = vmatpush1.msra.mxu0 0.0
  %129 = vmatprep.subr.mxu0 0.0
  %130 = vmatpush1.msra.mxu0 0.0
  %131 = vmatprep.subr.mxu0 0.0
  %132 = vmatpush1.msra.mxu0 0.0
  %133 = vmatprep.subr.mxu0 0.0
  %134 = vmatpush1.msra.mxu0 0.0
  %135 = vmatprep.subr.mxu0 0.0
  %136 = vmatpush1.msra.mxu0 0.0
  %137 = vmatprep.subr.mxu0 0.0
  %138 = vmatpush1.msra.mxu0 0.0
  %139 = vmatprep.subr.mxu0 0.0
  %140 = vmatpush1.msra.mxu0 0.0
  %141 = vmatprep.subr.mxu0 0.0
  %142 = vmatpush1.msra.mxu0 0.0
  %143 = vmatprep.subr.mxu0 0.0
  %144 = vmatpush1.msra.mxu0 0.0
  %145 = vmatprep.subr.mxu0 0.0
  %146 = vmatpush1.msra.mxu0 0.0
  %147 = vmatprep.subr.mxu0 0.0
  %148 = vmatpush1.msra.mxu0 0.0
  %149 = vmatprep.subr.mxu0 0.0
  %150 = vmatpush1.msra.mxu0 0.0
  %151 = vmatprep.subr.mxu0 0.0
  %152 = vmatpush1.msra.mxu0 0.0
  %153 = vmatprep.subr.mxu0 0.0
  %154 = vmatpush1.msra.mxu0 0.0
  %155 = vmatprep.mubr.f32.mxu0 0.0
  %156 = vmatmul.mubr.f32.gmra.mrb[0].mxu0 %v68
  %v157 = vpop.f32.mrb[0].mxu0
  %v158 = vadd.f32 %v64, %v157
  %v159 = vpop.f32.mrb[0].mxu0
  %160 = vmatprep.mubr.f32.mxu0 0.0
  %161 = vmatmul.mubr.f32.gmra.mrb[0].mxu0 %v71
  %v162 = vpop.f32.mrb[0].mxu0
  %v163 = vadd.f32 %v64, %v162
  %v164 = vpop.f32.mrb[0].mxu0
  %165 = vmatprep.mubr.f32.mxu0 0.0
  %166 = vmatmul.mubr.f32.gmra.mrb[0].mxu0 %v74
  %v167 = vpop.f32.mrb[0].mxu0
  %v168 = vadd.f32 %v64, %v167
  %v169 = vpop.f32.mrb[0].mxu0
  %170 = vmatprep.mubr.f32.mxu0 0.0
  %171 = vmatmul.mubr.f32.gmra.mrb[0].mxu0 %v77
  %v172 = vpop.f32.mrb[0].mxu0
  %v173 = vadd.f32 %v64, %v172
  %v174 = vpop.f32.mrb[0].mxu0
  %175 = vmatprep.mubr.f32.mxu0 0.0
  %176 = vmatmul.mubr.f32.gmra.mrb[0].mxu0 %v80
  %v177 = vpop.f32.mrb[0].mxu0
  %v178 = vadd.f32 %v64, %v177
  %v179 = vpop.f32.mrb[0].mxu0
  %180 = vmatprep.mubr.f32.mxu0 0.0
  %181 = vmatmul.mubr.f32.gmra.mrb[0].mxu0 %v83
  %v182 = vpop.f32.mrb[0].mxu0
  %v183 = vadd.f32 %v64, %v182
  %v184 = vpop.f32.mrb[0].mxu0
  %185 = vmatprep.mubr.f32.mxu0 0.0
  %186 = vmatmul.mubr.f32.gmra.mrb[0].mxu0 %v86
  %v187 = vpop.f32.mrb[0].mxu0
  %v188 = vadd.f32 %v64, %v187
  %v189 = vpop.f32.mrb[0].mxu0
  %190 = vmatprep.mubr.f32.mxu0 0.0
  %191 = vmatmul.mubr.f32.gmra.mrb[0].mxu0 %v89
  %v192 = vpop.f32.mrb[0].mxu0
  %v193 = vadd.f32 %v64, %v192
  %v194 = vpop.f32.mrb[0].mxu0
  %195 = vdwg.mxu0
  %vm196 = vcmask 785408
  %197 = vst.msk [vmem:[#allocation2] sm:$0xff] %vm196, %v158
  %198 = vst.msk [vmem:[#allocation2 + $0x8] sm:$0xff] %vm196, %v163
  %199 = vst.msk [vmem:[#allocation2 + $0x10] sm:$0xff] %vm196, %v168
  %200 = vst.msk [vmem:[#allocation2 + $0x18] sm:$0xff] %vm196, %v173
  %201 = vst.msk [vmem:[#allocation2 + $0x20] sm:$0xff] %vm196, %v178
  %202 = vst.msk [vmem:[#allocation2 + $0x28] sm:$0xff] %vm196, %v183
  %203 = vst.msk [vmem:[#allocation2 + $0x30] sm:$0xff] %vm196, %v188
  %204 = vst.msk [vmem:[#allocation2 + $0x38] sm:$0xff] %vm196, %v193
  %v205 = vld [vmem:[%s2] sm:$0xff]
  %v206 = vld [vmem:[%s2 + $0x8] sm:$0xff]
  %v207 = vld [vmem:[%s2 + $0x10] sm:$0xff]
  %v208 = vld [vmem:[%s2 + $0x18] sm:$0xff]
  %v209 = vld [vmem:[%s2 + $0x20] sm:$0xff]
  %v210 = vld [vmem:[%s2 + $0x28] sm:$0xff]
  %v211 = vld [vmem:[%s2 + $0x30] sm:$0xff]
  %v212 = vld [vmem:[%s2 + $0x38] sm:$0xff]
  %v213 = vld [vmem:[%s4] sm:$0x1]
  %v215 = vlaneseq
  %v216 = vshrl.u32 %v215, 7
  %v217 = vsub.s32 0, %v216
  %v218 = vrot.slane %v213, %v217
  %220 = vmatprep.subr.mxu0 0.0
  %221 = vmatpush1.msra.mxu0 %v205
  %222 = vmatprep.subr.mxu0 0.0
  %223 = vmatpush1.msra.mxu0 %v206
  %224 = vmatprep.subr.mxu0 0.0
  %225 = vmatpush1.msra.mxu0 %v207
  %226 = vmatprep.subr.mxu0 0.0
  %227 = vmatpush1.msra.mxu0 %v208
  %228 = vmatprep.subr.mxu0 0.0
  %229 = vmatpush1.msra.mxu0 %v209
  %230 = vmatprep.subr.mxu0 0.0
  %231 = vmatpush1.msra.mxu0 %v210
  %232 = vmatprep.subr.mxu0 0.0
  %233 = vmatpush1.msra.mxu0 %v211
  %234 = vmatprep.subr.mxu0 0.0
  %235 = vmatpush1.msra.mxu0 %v212
  %236 = vmatprep.subr.mxu0 0.0
  %237 = vmatpush1.msra.mxu0 0.0
  %238 = vmatprep.subr.mxu0 0.0
  %239 = vmatpush1.msra.mxu0 0.0
  %240 = vmatprep.subr.mxu0 0.0
  %241 = vmatpush1.msra.mxu0 0.0
  %242 = vmatprep.subr.mxu0 0.0
  %243 = vmatpush1.msra.mxu0 0.0
  %244 = vmatprep.subr.mxu0 0.0
  %245 = vmatpush1.msra.mxu0 0.0
  %246 = vmatprep.subr.mxu0 0.0
  %247 = vmatpush1.msra.mxu0 0.0
  %248 = vmatprep.subr.mxu0 0.0
  %249 = vmatpush1.msra.mxu0 0.0
  %250 = vmatprep.subr.mxu0 0.0
  %251 = vmatpush1.msra.mxu0 0.0
  %252 = vmatprep.subr.mxu0 0.0
  %253 = vmatpush1.msra.mxu0 0.0
  %254 = vmatprep.subr.mxu0 0.0
  %255 = vmatpush1.msra.mxu0 0.0
  %256 = vmatprep.subr.mxu0 0.0
  %257 = vmatpush1.msra.mxu0 0.0
  %258 = vmatprep.subr.mxu0 0.0
  %259 = vmatpush1.msra.mxu0 0.0
  %260 = vmatprep.subr.mxu0 0.0
  %261 = vmatpush1.msra.mxu0 0.0
  %262 = vmatprep.subr.mxu0 0.0
  %263 = vmatpush1.msra.mxu0 0.0
  %264 = vmatprep.subr.mxu0 0.0
  %265 = vmatpush1.msra.mxu0 0.0
  %266 = vmatprep.subr.mxu0 0.0
  %267 = vmatpush1.msra.mxu0 0.0
  %268 = vmatprep.subr.mxu0 0.0
  %269 = vmatpush1.msra.mxu0 0.0
  %270 = vmatprep.subr.mxu0 0.0
  %271 = vmatpush1.msra.mxu0 0.0
  %272 = vmatprep.subr.mxu0 0.0
  %273 = vmatpush1.msra.mxu0 0.0
  %274 = vmatprep.subr.mxu0 0.0
  %275 = vmatpush1.msra.mxu0 0.0
  %276 = vmatprep.subr.mxu0 0.0
  %277 = vmatpush1.msra.mxu0 0.0
  %278 = vmatprep.subr.mxu0 0.0
  %279 = vmatpush1.msra.mxu0 0.0
  %280 = vmatprep.subr.mxu0 0.0
  %281 = vmatpush1.msra.mxu0 0.0
  %282 = vmatprep.subr.mxu0 0.0
  %283 = vmatpush1.msra.mxu0 0.0
  %284 = vmatprep.mubr.f32.mxu0 0.0
  %285 = vmatmul.mubr.f32.gmra.mrb[0].mxu0 %v68
  %v286 = vpop.f32.mrb[0].mxu0
  %v287 = vadd.f32 %v218, %v286
  %v288 = vpop.f32.mrb[0].mxu0
  %289 = vmatprep.mubr.f32.mxu0 0.0
  %290 = vmatmul.mubr.f32.gmra.mrb[0].mxu0 %v71
  %v291 = vpop.f32.mrb[0].mxu0
  %v292 = vadd.f32 %v218, %v291
  %v293 = vpop.f32.mrb[0].mxu0
  %294 = vmatprep.mubr.f32.mxu0 0.0
  %295 = vmatmul.mubr.f32.gmra.mrb[0].mxu0 %v74
  %v296 = vpop.f32.mrb[0].mxu0
  %v297 = vadd.f32 %v218, %v296
  %v298 = vpop.f32.mrb[0].mxu0
  %299 = vmatprep.mubr.f32.mxu0 0.0
  %300 = vmatmul.mubr.f32.gmra.mrb[0].mxu0 %v77
  %v301 = vpop.f32.mrb[0].mxu0
  %v302 = vadd.f32 %v218, %v301
  %v303 = vpop.f32.mrb[0].mxu0
  %304 = vmatprep.mubr.f32.mxu0 0.0
  %305 = vmatmul.mubr.f32.gmra.mrb[0].mxu0 %v80
  %v306 = vpop.f32.mrb[0].mxu0
  %v307 = vadd.f32 %v218, %v306
  %v308 = vpop.f32.mrb[0].mxu0
  %309 = vmatprep.mubr.f32.mxu0 0.0
  %310 = vmatmul.mubr.f32.gmra.mrb[0].mxu0 %v83
  %v311 = vpop.f32.mrb[0].mxu0
  %v312 = vadd.f32 %v218, %v311
  %v313 = vpop.f32.mrb[0].mxu0
  %314 = vmatprep.mubr.f32.mxu0 0.0
  %315 = vmatmul.mubr.f32.gmra.mrb[0].mxu0 %v86
  %v316 = vpop.f32.mrb[0].mxu0
  %v317 = vadd.f32 %v218, %v316
  %v318 = vpop.f32.mrb[0].mxu0
  %319 = vmatprep.mubr.f32.mxu0 0.0
  %320 = vmatmul.mubr.f32.gmra.mrb[0].mxu0 %v89
  %v321 = vpop.f32.mrb[0].mxu0
  %v322 = vadd.f32 %v218, %v321
  %v323 = vpop.f32.mrb[0].mxu0
  %324 = vdwg.mxu0
  %325 = vst.msk [vmem:[#allocation3] sm:$0xff] %vm196, %v287
  %326 = vst.msk [vmem:[#allocation3 + $0x8] sm:$0xff] %vm196, %v292
  %327 = vst.msk [vmem:[#allocation3 + $0x10] sm:$0xff] %vm196, %v297
  %328 = vst.msk [vmem:[#allocation3 + $0x18] sm:$0xff] %vm196, %v302
  %329 = vst.msk [vmem:[#allocation3 + $0x20] sm:$0xff] %vm196, %v307
  %330 = vst.msk [vmem:[#allocation3 + $0x28] sm:$0xff] %vm196, %v312
  %331 = vst.msk [vmem:[#allocation3 + $0x30] sm:$0xff] %vm196, %v317
  %332 = vst.msk [vmem:[#allocation3 + $0x38] sm:$0xff] %vm196, %v322
  %v333 = vld [vmem:[%s5] sm:$0xff]
  %v334 = vld [vmem:[%s5 + $0x8] sm:$0xff]
  %v335 = vld [vmem:[%s5 + $0x10] sm:$0xff]
  %v336 = vld [vmem:[%s5 + $0x18] sm:$0xff]
  %v337 = vld [vmem:[%s6] sm:$0xff]
  %v338 = vld [vmem:[%s6 + $0x8] sm:$0xff]
  %v339 = vld [vmem:[%s6 + $0x10] sm:$0xff]
  %v340 = vld [vmem:[%s6 + $0x18] sm:$0xff]
  %v341 = vld [vmem:[%s7] sm:$0x1]
  %v342 = vld [vmem:[%s8] sm:$0x1]
  %v343 = vld [vmem:[#allocation2] sm:$0xff]
  %vm344 = vcmask 261120
  %v346 = vsel %vm344, 0.0, 0
  %348 = vmatprep.subr.mxu0 0.0
  %349 = vmatpush1.msra.mxu0 %v333
  %350 = vmatprep.subr.mxu0 0.0
  %351 = vmatpush1.msra.mxu0 %v334
  %352 = vmatprep.subr.mxu0 0.0
  %353 = vmatpush1.msra.mxu0 %v335
  %354 = vmatprep.subr.mxu0 0.0
  %355 = vmatpush1.msra.mxu0 %v336
  %356 = vmatprep.subr.mxu0 0.0
  %357 = vmatpush1.msra.mxu0 0.0
  %358 = vmatprep.subr.mxu0 0.0
  %359 = vmatpush1.msra.mxu0 0.0
  %360 = vmatprep.subr.mxu0 0.0
  %361 = vmatpush1.msra.mxu0 0.0
  %362 = vmatprep.subr.mxu0 0.0
  %363 = vmatpush1.msra.mxu0 0.0
  %364 = vmatprep.subr.mxu0 0.0
  %365 = vmatpush1.msra.mxu0 0.0
  %366 = vmatprep.subr.mxu0 0.0
  %367 = vmatpush1.msra.mxu0 0.0
  %368 = vmatprep.subr.mxu0 0.0
  %369 = vmatpush1.msra.mxu0 0.0
  %370 = vmatprep.subr.mxu0 0.0
  %371 = vmatpush1.msra.mxu0 0.0
  %372 = vmatprep.subr.mxu0 0.0
  %373 = vmatpush1.msra.mxu0 0.0
  %374 = vmatprep.subr.mxu0 0.0
  %375 = vmatpush1.msra.mxu0 0.0
  %376 = vmatprep.subr.mxu0 0.0
  %377 = vmatpush1.msra.mxu0 0.0
  %378 = vmatprep.subr.mxu0 0.0
  %379 = vmatpush1.msra.mxu0 0.0
  %380 = vmatprep.subr.mxu0 0.0
  %381 = vmatpush1.msra.mxu0 0.0
  %382 = vmatprep.subr.mxu0 0.0
  %383 = vmatpush1.msra.mxu0 0.0
  %384 = vmatprep.subr.mxu0 0.0
  %385 = vmatpush1.msra.mxu0 0.0
  %386 = vmatprep.subr.mxu0 0.0
  %387 = vmatpush1.msra.mxu0 0.0
  %388 = vmatprep.subr.mxu0 0.0
  %389 = vmatpush1.msra.mxu0 0.0
  %390 = vmatprep.subr.mxu0 0.0
  %391 = vmatpush1.msra.mxu0 0.0
  %392 = vmatprep.subr.mxu0 0.0
  %393 = vmatpush1.msra.mxu0 0.0
  %394 = vmatprep.subr.mxu0 0.0
  %395 = vmatpush1.msra.mxu0 0.0
  %396 = vmatprep.subr.mxu0 0.0
  %397 = vmatpush1.msra.mxu0 0.0
  %398 = vmatprep.subr.mxu0 0.0
  %399 = vmatpush1.msra.mxu0 0.0
  %400 = vmatprep.subr.mxu0 0.0
  %401 = vmatpush1.msra.mxu0 0.0
  %402 = vmatprep.subr.mxu0 0.0
  %403 = vmatpush1.msra.mxu0 0.0
  %404 = vmatprep.subr.mxu0 0.0
  %405 = vmatpush1.msra.mxu0 0.0
  %406 = vmatprep.subr.mxu0 0.0
  %407 = vmatpush1.msra.mxu0 0.0
  %408 = vmatprep.subr.mxu0 0.0
  %409 = vmatpush1.msra.mxu0 0.0
  %410 = vmatprep.subr.mxu0 0.0
  %411 = vmatpush1.msra.mxu0 0.0
  %412 = vmatprep.mubr.f32.mxu0 0.0
  %413 = vmatmul.mubr.f32.gmra.mrb[0].mxu0 %v346
  %v414 = vpop.f32.mrb[0].mxu0
  %v415 = vadd.f32 0.0, %v414
  %v416 = vpop.f32.mrb[0].mxu0
  %417 = vdwg.mxu0
  %v418 = vadd.f32 %v343, %v415
  %v419 = vxor.u32 %v418, 2147483648
  %v420 = vmul.f32 %v419, 1.442695
  %v421 = vpow.pop %v420
  %v422 = vadd.f32 %v421, 1.0
  %v423 = vrcp.pop %v422
  %v424 = vmul.f32 1.0, %v423
  %v426 = vlaneseq
  %v427 = vshrl.u32 %v426, 7
  %v428 = vsub.s32 0, %v427
  %v429 = vrot.slane %v341, %v428
  %430 = vrot.lane.b32.xlu0 %v429, 64
  %v431 = vpop.permute.xlu0 %430
  %v433 = vadd.f32 %v415, %v431
  %435 = vrot.lane.b32.xlu0 %v433, 64
  %v436 = vpop.permute.xlu0 %435
  %v438 = vmul.f32 %v424, %v436
  %440 = vrot.lane.b32.xlu0 %v438, 64
  %v441 = vpop.permute.xlu0 %440
  %v443 = vadd.f32 %v343, %v441
  %v444 = vtanh.pop %v443
  %v445 = vsub.f32 1.0, %v424
  %447 = vrot.lane.b32.xlu0 %v444, 96
  %v448 = vpop.permute.xlu0 %447
  %v450 = vmul.f32 %v445, %v448
  %v451 = vmul.f32 %v424, 0.0
  %v452 = vadd.f32 %v450, %v451
  %v453 = vld [vmem:[#allocation3 + $0x38] sm:$0xff]
  %454 = vmatprep.subr.mxu0 0.0
  %455 = vmatpush1.msra.mxu0 %v337
  %456 = vmatprep.subr.mxu0 0.0
  %457 = vmatpush1.msra.mxu0 %v338
  %458 = vmatprep.subr.mxu0 0.0
  %459 = vmatpush1.msra.mxu0 %v339
  %460 = vmatprep.subr.mxu0 0.0
  %461 = vmatpush1.msra.mxu0 %v340
  %462 = vmatprep.subr.mxu0 0.0
  %463 = vmatpush1.msra.mxu0 0.0
  %464 = vmatprep.subr.mxu0 0.0
  %465 = vmatpush1.msra.mxu0 0.0
  %466 = vmatprep.subr.mxu0 0.0
  %467 = vmatpush1.msra.mxu0 0.0
  %468 = vmatprep.subr.mxu0 0.0
  %469 = vmatpush1.msra.mxu0 0.0
  %470 = vmatprep.subr.mxu0 0.0
  %471 = vmatpush1.msra.mxu0 0.0
  %472 = vmatprep.subr.mxu0 0.0
  %473 = vmatpush1.msra.mxu0 0.0
  %474 = vmatprep.subr.mxu0 0.0
  %475 = vmatpush1.msra.mxu0 0.0
  %476 = vmatprep.subr.mxu0 0.0
  %477 = vmatpush1.msra.mxu0 0.0
  %478 = vmatprep.subr.mxu0 0.0
  %479 = vmatpush1.msra.mxu0 0.0
  %480 = vmatprep.subr.mxu0 0.0
  %481 = vmatpush1.msra.mxu0 0.0
  %482 = vmatprep.subr.mxu0 0.0
  %483 = vmatpush1.msra.mxu0 0.0
  %484 = vmatprep.subr.mxu0 0.0
  %485 = vmatpush1.msra.mxu0 0.0
  %486 = vmatprep.subr.mxu0 0.0
  %487 = vmatpush1.msra.mxu0 0.0
  %488 = vmatprep.subr.mxu0 0.0
  %489 = vmatpush1.msra.mxu0 0.0
  %490 = vmatprep.subr.mxu0 0.0
  %491 = vmatpush1.msra.mxu0 0.0
  %492 = vmatprep.subr.mxu0 0.0
  %493 = vmatpush1.msra.mxu0 0.0
  %494 = vmatprep.subr.mxu0 0.0
  %495 = vmatpush1.msra.mxu0 0.0
  %496 = vmatprep.subr.mxu0 0.0
  %497 = vmatpush1.msra.mxu0 0.0
  %498 = vmatprep.subr.mxu0 0.0
  %499 = vmatpush1.msra.mxu0 0.0
  %500 = vmatprep.subr.mxu0 0.0
  %501 = vmatpush1.msra.mxu0 0.0
  %502 = vmatprep.subr.mxu0 0.0
  %503 = vmatpush1.msra.mxu0 0.0
  %504 = vmatprep.subr.mxu0 0.0
  %505 = vmatpush1.msra.mxu0 0.0
  %506 = vmatprep.subr.mxu0 0.0
  %507 = vmatpush1.msra.mxu0 0.0
  %508 = vmatprep.subr.mxu0 0.0
  %509 = vmatpush1.msra.mxu0 0.0
  %510 = vmatprep.subr.mxu0 0.0
  %511 = vmatpush1.msra.mxu0 0.0
  %512 = vmatprep.subr.mxu0 0.0
  %513 = vmatpush1.msra.mxu0 0.0
  %514 = vmatprep.subr.mxu0 0.0
  %515 = vmatpush1.msra.mxu0 0.0
  %516 = vmatprep.subr.mxu0 0.0
  %517 = vmatpush1.msra.mxu0 0.0
  %518 = vmatprep.mubr.f32.mxu0 0.0
  %519 = vmatmul.mubr.f32.gmra.mrb[0].mxu0 %v346
  %v520 = vpop.f32.mrb[0].mxu0
  %v521 = vadd.f32 0.0, %v520
  %v522 = vpop.f32.mrb[0].mxu0
  %523 = vdwg.mxu0
  %v524 = vadd.f32 %v453, %v521
  %v525 = vxor.u32 %v524, 2147483648
  %v526 = vmul.f32 %v525, 1.442695
  %v527 = vpow.pop %v526
  %v528 = vadd.f32 %v527, 1.0
  %v529 = vrcp.pop %v528
  %v530 = vmul.f32 1.0, %v529
  %v532 = vlaneseq
  %v533 = vshrl.u32 %v532, 7
  %v534 = vsub.s32 0, %v533
  %v535 = vrot.slane %v342, %v534
  %536 = vrot.lane.b32.xlu0 %v535, 64
  %v537 = vpop.permute.xlu0 %536
  %v539 = vadd.f32 %v521, %v537
  %541 = vrot.lane.b32.xlu0 %v539, 64
  %v542 = vpop.permute.xlu0 %541
  %v544 = vmul.f32 %v530, %v542
  %546 = vrot.lane.b32.xlu0 %v544, 64
  %v547 = vpop.permute.xlu0 %546
  %v549 = vadd.f32 %v453, %v547
  %v550 = vtanh.pop %v549
  %v551 = vsub.f32 1.0, %v530
  %553 = vrot.lane.b32.xlu0 %v550, 96
  %v554 = vpop.permute.xlu0 %553
  %v556 = vmul.f32 %v551, %v554
  %v557 = vmul.f32 %v530, 0.0
  %v558 = vadd.f32 %v556, %v557
  %560 = vrot.lane.b32.xlu0 %v452, 96
  %v561 = vpop.permute.xlu0 %560
  %563 = vst.msk [vmem:[%s12] sm:$0xff] %vm344, %v561
  %vm564 = vcmask 523520
  %565 = vst.msk [vmem:[%s12 + $0x38] sm:$0xff] %vm564, %v558
  %v566 = vld [vmem:[#allocation2 + $0x8] sm:$0xff]
  %v567 = vsel %vm344, %v561, 0
  %569 = vmatprep.subr.mxu0 0.0
  %570 = vmatpush1.msra.mxu0 %v333
  %571 = vmatprep.subr.mxu0 0.0
  %572 = vmatpush1.msra.mxu0 %v334
  %573 = vmatprep.subr.mxu0 0.0
  %574 = vmatpush1.msra.mxu0 %v335
  %575 = vmatprep.subr.mxu0 0.0
  %576 = vmatpush1.msra.mxu0 %v336
  %577 = vmatprep.subr.mxu0 0.0
  %578 = vmatpush1.msra.mxu0 0.0
  %579 = vmatprep.subr.mxu0 0.0
  %580 = vmatpush1.msra.mxu0 0.0
  %581 = vmatprep.subr.mxu0 0.0
  %582 = vmatpush1.msra.mxu0 0.0
  %583 = vmatprep.subr.mxu0 0.0
  %584 = vmatpush1.msra.mxu0 0.0
  %585 = vmatprep.subr.mxu0 0.0
  %586 = vmatpush1.msra.mxu0 0.0
  %587 = vmatprep.subr.mxu0 0.0
  %588 = vmatpush1.msra.mxu0 0.0
  %589 = vmatprep.subr.mxu0 0.0
  %590 = vmatpush1.msra.mxu0 0.0
  %591 = vmatprep.subr.mxu0 0.0
  %592 = vmatpush1.msra.mxu0 0.0
  %593 = vmatprep.subr.mxu0 0.0
  %594 = vmatpush1.msra.mxu0 0.0
  %595 = vmatprep.subr.mxu0 0.0
  %596 = vmatpush1.msra.mxu0 0.0
  %597 = vmatprep.subr.mxu0 0.0
  %598 = vmatpush1.msra.mxu0 0.0
  %599 = vmatprep.subr.mxu0 0.0
  %600 = vmatpush1.msra.mxu0 0.0
  %601 = vmatprep.subr.mxu0 0.0
  %602 = vmatpush1.msra.mxu0 0.0
  %603 = vmatprep.subr.mxu0 0.0
  %604 = vmatpush1.msra.mxu0 0.0
  %605 = vmatprep.subr.mxu0 0.0
  %606 = vmatpush1.msra.mxu0 0.0
  %607 = vmatprep.subr.mxu0 0.0
  %608 = vmatpush1.msra.mxu0 0.0
  %609 = vmatprep.subr.mxu0 0.0
  %610 = vmatpush1.msra.mxu0 0.0
  %611 = vmatprep.subr.mxu0 0.0
  %612 = vmatpush1.msra.mxu0 0.0
  %613 = vmatprep.subr.mxu0 0.0
  %614 = vmatpush1.msra.mxu0 0.0
  %615 = vmatprep.subr.mxu0 0.0
  %616 = vmatpush1.msra.mxu0 0.0
  %617 = vmatprep.subr.mxu0 0.0
  %618 = vmatpush1.msra.mxu0 0.0
  %619 = vmatprep.subr.mxu0 0.0
  %620 = vmatpush1.msra.mxu0 0.0
  %621 = vmatprep.subr.mxu0 0.0
  %622 = vmatpush1.msra.mxu0 0.0
  %623 = vmatprep.subr.mxu0 0.0
  %624 = vmatpush1.msra.mxu0 0.0
  %625 = vmatprep.subr.mxu0 0.0
  %626 = vmatpush1.msra.mxu0 0.0
  %627 = vmatprep.subr.mxu0 0.0
  %628 = vmatpush1.msra.mxu0 0.0
  %629 = vmatprep.subr.mxu0 0.0
  %630 = vmatpush1.msra.mxu0 0.0
  %631 = vmatprep.subr.mxu0 0.0
  %632 = vmatpush1.msra.mxu0 0.0
  %633 = vmatprep.mubr.f32.mxu0 0.0
  %634 = vmatmul.mubr.f32.gmra.mrb[0].mxu0 %v567
  %v635 = vpop.f32.mrb[0].mxu0
  %v636 = vadd.f32 0.0, %v635
  %v637 = vpop.f32.mrb[0].mxu0
  %638 = vdwg.mxu0
  %v639 = vadd.f32 %v566, %v636
  %v640 = vxor.u32 %v639, 2147483648
  %v641 = vmul.f32 %v640, 1.442695
  %v642 = vpow.pop %v641
  %v643 = vadd.f32 %v642, 1.0
  %v644 = vrcp.pop %v643
  %v645 = vmul.f32 1.0, %v644
  %v646 = vadd.f32 %v636, %v431
  %648 = vrot.lane.b32.xlu0 %v646, 64
  %v649 = vpop.permute.xlu0 %648
  %v651 = vmul.f32 %v645, %v649
  %653 = vrot.lane.b32.xlu0 %v651, 64
  %v654 = vpop.permute.xlu0 %653
  %v656 = vadd.f32 %v566, %v654
  %v657 = vtanh.pop %v656
  %v658 = vsub.f32 1.0, %v645
  %660 = vrot.lane.b32.xlu0 %v657, 96
  %v661 = vpop.permute.xlu0 %660
  %v663 = vmul.f32 %v658, %v661
  %v664 = vmul.f32 %v645, %v452
  %v665 = vadd.f32 %v663, %v664
  %v666 = vld [vmem:[#allocation3 + $0x30] sm:$0xff]
  %668 = vrot.lane.b32.xlu0 %v558, 96
  %v669 = vpop.permute.xlu0 %668
  %v670 = vsel %vm344, %v669, 0
  %672 = vmatprep.subr.mxu0 0.0
  %673 = vmatpush1.msra.mxu0 %v337
  %674 = vmatprep.subr.mxu0 0.0
  %675 = vmatpush1.msra.mxu0 %v338
  %676 = vmatprep.subr.mxu0 0.0
  %677 = vmatpush1.msra.mxu0 %v339
  %678 = vmatprep.subr.mxu0 0.0
  %679 = vmatpush1.msra.mxu0 %v340
  %680 = vmatprep.subr.mxu0 0.0
  %681 = vmatpush1.msra.mxu0 0.0
  %682 = vmatprep.subr.mxu0 0.0
  %683 = vmatpush1.msra.mxu0 0.0
  %684 = vmatprep.subr.mxu0 0.0
  %685 = vmatpush1.msra.mxu0 0.0
  %686 = vmatprep.subr.mxu0 0.0
  %687 = vmatpush1.msra.mxu0 0.0
  %688 = vmatprep.subr.mxu0 0.0
  %689 = vmatpush1.msra.mxu0 0.0
  %690 = vmatprep.subr.mxu0 0.0
  %691 = vmatpush1.msra.mxu0 0.0
  %692 = vmatprep.subr.mxu0 0.0
  %693 = vmatpush1.msra.mxu0 0.0
  %694 = vmatprep.subr.mxu0 0.0
  %695 = vmatpush1.msra.mxu0 0.0
  %696 = vmatprep.subr.mxu0 0.0
  %697 = vmatpush1.msra.mxu0 0.0
  %698 = vmatprep.subr.mxu0 0.0
  %699 = vmatpush1.msra.mxu0 0.0
  %700 = vmatprep.subr.mxu0 0.0
  %701 = vmatpush1.msra.mxu0 0.0
  %702 = vmatprep.subr.mxu0 0.0
  %703 = vmatpush1.msra.mxu0 0.0
  %704 = vmatprep.subr.mxu0 0.0
  %705 = vmatpush1.msra.mxu0 0.0
  %706 = vmatprep.subr.mxu0 0.0
  %707 = vmatpush1.msra.mxu0 0.0
  %708 = vmatprep.subr.mxu0 0.0
  %709 = vmatpush1.msra.mxu0 0.0
  %710 = vmatprep.subr.mxu0 0.0
  %711 = vmatpush1.msra.mxu0 0.0
  %712 = vmatprep.subr.mxu0 0.0
  %713 = vmatpush1.msra.mxu0 0.0
  %714 = vmatprep.subr.mxu0 0.0
  %715 = vmatpush1.msra.mxu0 0.0
  %716 = vmatprep.subr.mxu0 0.0
  %717 = vmatpush1.msra.mxu0 0.0
  %718 = vmatprep.subr.mxu0 0.0
  %719 = vmatpush1.msra.mxu0 0.0
  %720 = vmatprep.subr.mxu0 0.0
  %721 = vmatpush1.msra.mxu0 0.0
  %722 = vmatprep.subr.mxu0 0.0
  %723 = vmatpush1.msra.mxu0 0.0
  %724 = vmatprep.subr.mxu0 0.0
  %725 = vmatpush1.msra.mxu0 0.0
  %726 = vmatprep.subr.mxu0 0.0
  %727 = vmatpush1.msra.mxu0 0.0
  %728 = vmatprep.subr.mxu0 0.0
  %729 = vmatpush1.msra.mxu0 0.0
  %730 = vmatprep.subr.mxu0 0.0
  %731 = vmatpush1.msra.mxu0 0.0
  %732 = vmatprep.subr.mxu0 0.0
  %733 = vmatpush1.msra.mxu0 0.0
  %734 = vmatprep.subr.mxu0 0.0
  %735 = vmatpush1.msra.mxu0 0.0
  %736 = vmatprep.mubr.f32.mxu0 0.0
  %737 = vmatmul.mubr.f32.gmra.mrb[0].mxu0 %v670
  %v738 = vpop.f32.mrb[0].mxu0
  %v739 = vadd.f32 0.0, %v738
  %v740 = vpop.f32.mrb[0].mxu0
  %741 = vdwg.mxu0
  %v742 = vadd.f32 %v666, %v739
  %v743 = vxor.u32 %v742, 2147483648
  %v744 = vmul.f32 %v743, 1.442695
  %v745 = vpow.pop %v744
  %v746 = vadd.f32 %v745, 1.0
  %v747 = vrcp.pop %v746
  %v748 = vmul.f32 1.0, %v747
  %v749 = vadd.f32 %v739, %v537
  %751 = vrot.lane.b32.xlu0 %v749, 64
  %v752 = vpop.permute.xlu0 %751
  %v754 = vmul.f32 %v748, %v752
  %756 = vrot.lane.b32.xlu0 %v754, 64
  %v757 = vpop.permute.xlu0 %756
  %v759 = vadd.f32 %v666, %v757
  %v760 = vtanh.pop %v759
  %v761 = vsub.f32 1.0, %v748
  %763 = vrot.lane.b32.xlu0 %v760, 96
  %v764 = vpop.permute.xlu0 %763
  %v766 = vmul.f32 %v761, %v764
  %v767 = vmul.f32 %v748, %v558
  %v768 = vadd.f32 %v766, %v767
  %770 = vrot.lane.b32.xlu0 %v665, 96
  %v771 = vpop.permute.xlu0 %770
  %773 = vst.msk [vmem:[%s12 + $0x8] sm:$0xff] %vm344, %v771
  %774 = vst.msk [vmem:[%s12 + $0x30] sm:$0xff] %vm564, %v768
  %v775 = vld [vmem:[#allocation2 + $0x10] sm:$0xff]
  %v776 = vsel %vm344, %v771, 0
  %778 = vmatprep.subr.mxu0 0.0
  %779 = vmatpush1.msra.mxu0 %v333
  %780 = vmatprep.subr.mxu0 0.0
  %781 = vmatpush1.msra.mxu0 %v334
  %782 = vmatprep.subr.mxu0 0.0
  %783 = vmatpush1.msra.mxu0 %v335
  %784 = vmatprep.subr.mxu0 0.0
  %785 = vmatpush1.msra.mxu0 %v336
  %786 = vmatprep.subr.mxu0 0.0
  %787 = vmatpush1.msra.mxu0 0.0
  %788 = vmatprep.subr.mxu0 0.0
  %789 = vmatpush1.msra.mxu0 0.0
  %790 = vmatprep.subr.mxu0 0.0
  %791 = vmatpush1.msra.mxu0 0.0
  %792 = vmatprep.subr.mxu0 0.0
  %793 = vmatpush1.msra.mxu0 0.0
  %794 = vmatprep.subr.mxu0 0.0
  %795 = vmatpush1.msra.mxu0 0.0
  %796 = vmatprep.subr.mxu0 0.0
  %797 = vmatpush1.msra.mxu0 0.0
  %798 = vmatprep.subr.mxu0 0.0
  %799 = vmatpush1.msra.mxu0 0.0
  %800 = vmatprep.subr.mxu0 0.0
  %801 = vmatpush1.msra.mxu0 0.0
  %802 = vmatprep.subr.mxu0 0.0
  %803 = vmatpush1.msra.mxu0 0.0
  %804 = vmatprep.subr.mxu0 0.0
  %805 = vmatpush1.msra.mxu0 0.0
  %806 = vmatprep.subr.mxu0 0.0
  %807 = vmatpush1.msra.mxu0 0.0
  %808 = vmatprep.subr.mxu0 0.0
  %809 = vmatpush1.msra.mxu0 0.0
  %810 = vmatprep.subr.mxu0 0.0
  %811 = vmatpush1.msra.mxu0 0.0
  %812 = vmatprep.subr.mxu0 0.0
  %813 = vmatpush1.msra.mxu0 0.0
  %814 = vmatprep.subr.mxu0 0.0
  %815 = vmatpush1.msra.mxu0 0.0
  %816 = vmatprep.subr.mxu0 0.0
  %817 = vmatpush1.msra.mxu0 0.0
  %818 = vmatprep.subr.mxu0 0.0
  %819 = vmatpush1.msra.mxu0 0.0
  %820 = vmatprep.subr.mxu0 0.0
  %821 = vmatpush1.msra.mxu0 0.0
  %822 = vmatprep.subr.mxu0 0.0
  %823 = vmatpush1.msra.mxu0 0.0
  %824 = vmatprep.subr.mxu0 0.0
  %825 = vmatpush1.msra.mxu0 0.0
  %826 = vmatprep.subr.mxu0 0.0
  %827 = vmatpush1.msra.mxu0 0.0
  %828 = vmatprep.subr.mxu0 0.0
  %829 = vmatpush1.msra.mxu0 0.0
  %830 = vmatprep.subr.mxu0 0.0
  %831 = vmatpush1.msra.mxu0 0.0
  %832 = vmatprep.subr.mxu0 0.0
  %833 = vmatpush1.msra.mxu0 0.0
  %834 = vmatprep.subr.mxu0 0.0
  %835 = vmatpush1.msra.mxu0 0.0
  %836 = vmatprep.subr.mxu0 0.0
  %837 = vmatpush1.msra.mxu0 0.0
  %838 = vmatprep.subr.mxu0 0.0
  %839 = vmatpush1.msra.mxu0 0.0
  %840 = vmatprep.subr.mxu0 0.0
  %841 = vmatpush1.msra.mxu0 0.0
  %842 = vmatprep.mubr.f32.mxu0 0.0
  %843 = vmatmul.mubr.f32.gmra.mrb[0].mxu0 %v776
  %v844 = vpop.f32.mrb[0].mxu0
  %v845 = vadd.f32 0.0, %v844
  %v846 = vpop.f32.mrb[0].mxu0
  %847 = vdwg.mxu0
  %v848 = vadd.f32 %v775, %v845
  %v849 = vxor.u32 %v848, 2147483648
  %v850 = vmul.f32 %v849, 1.442695
  %v851 = vpow.pop %v850
  %v852 = vadd.f32 %v851, 1.0
  %v853 = vrcp.pop %v852
  %v854 = vmul.f32 1.0, %v853
  %v855 = vadd.f32 %v845, %v431
  %857 = vrot.lane.b32.xlu0 %v855, 64
  %v858 = vpop.permute.xlu0 %857
  %v860 = vmul.f32 %v854, %v858
  %862 = vrot.lane.b32.xlu0 %v860, 64
  %v863 = vpop.permute.xlu0 %862
  %v865 = vadd.f32 %v775, %v863
  %v866 = vtanh.pop %v865
  %v867 = vsub.f32 1.0, %v854
  %869 = vrot.lane.b32.xlu0 %v866, 96
  %v870 = vpop.permute.xlu0 %869
  %v872 = vmul.f32 %v867, %v870
  %v873 = vmul.f32 %v854, %v665
  %v874 = vadd.f32 %v872, %v873
  %v875 = vld [vmem:[#allocation3 + $0x28] sm:$0xff]
  %877 = vrot.lane.b32.xlu0 %v768, 96
  %v878 = vpop.permute.xlu0 %877
  %v879 = vsel %vm344, %v878, 0
  %881 = vmatprep.subr.mxu0 0.0
  %882 = vmatpush1.msra.mxu0 %v337
  %883 = vmatprep.subr.mxu0 0.0
  %884 = vmatpush1.msra.mxu0 %v338
  %885 = vmatprep.subr.mxu0 0.0
  %886 = vmatpush1.msra.mxu0 %v339
  %887 = vmatprep.subr.mxu0 0.0
  %888 = vmatpush1.msra.mxu0 %v340
  %889 = vmatprep.subr.mxu0 0.0
  %890 = vmatpush1.msra.mxu0 0.0
  %891 = vmatprep.subr.mxu0 0.0
  %892 = vmatpush1.msra.mxu0 0.0
  %893 = vmatprep.subr.mxu0 0.0
  %894 = vmatpush1.msra.mxu0 0.0
  %895 = vmatprep.subr.mxu0 0.0
  %896 = vmatpush1.msra.mxu0 0.0
  %897 = vmatprep.subr.mxu0 0.0
  %898 = vmatpush1.msra.mxu0 0.0
  %899 = vmatprep.subr.mxu0 0.0
  %900 = vmatpush1.msra.mxu0 0.0
  %901 = vmatprep.subr.mxu0 0.0
  %902 = vmatpush1.msra.mxu0 0.0
  %903 = vmatprep.subr.mxu0 0.0
  %904 = vmatpush1.msra.mxu0 0.0
  %905 = vmatprep.subr.mxu0 0.0
  %906 = vmatpush1.msra.mxu0 0.0
  %907 = vmatprep.subr.mxu0 0.0
  %908 = vmatpush1.msra.mxu0 0.0
  %909 = vmatprep.subr.mxu0 0.0
  %910 = vmatpush1.msra.mxu0 0.0
  %911 = vmatprep.subr.mxu0 0.0
  %912 = vmatpush1.msra.mxu0 0.0
  %913 = vmatprep.subr.mxu0 0.0
  %914 = vmatpush1.msra.mxu0 0.0
  %915 = vmatprep.subr.mxu0 0.0
  %916 = vmatpush1.msra.mxu0 0.0
  %917 = vmatprep.subr.mxu0 0.0
  %918 = vmatpush1.msra.mxu0 0.0
  %919 = vmatprep.subr.mxu0 0.0
  %920 = vmatpush1.msra.mxu0 0.0
  %921 = vmatprep.subr.mxu0 0.0
  %922 = vmatpush1.msra.mxu0 0.0
  %923 = vmatprep.subr.mxu0 0.0
  %924 = vmatpush1.msra.mxu0 0.0
  %925 = vmatprep.subr.mxu0 0.0
  %926 = vmatpush1.msra.mxu0 0.0
  %927 = vmatprep.subr.mxu0 0.0
  %928 = vmatpush1.msra.mxu0 0.0
  %929 = vmatprep.subr.mxu0 0.0
  %930 = vmatpush1.msra.mxu0 0.0
  %931 = vmatprep.subr.mxu0 0.0
  %932 = vmatpush1.msra.mxu0 0.0
  %933 = vmatprep.subr.mxu0 0.0
  %934 = vmatpush1.msra.mxu0 0.0
  %935 = vmatprep.subr.mxu0 0.0
  %936 = vmatpush1.msra.mxu0 0.0
  %937 = vmatprep.subr.mxu0 0.0
  %938 = vmatpush1.msra.mxu0 0.0
  %939 = vmatprep.subr.mxu0 0.0
  %940 = vmatpush1.msra.mxu0 0.0
  %941 = vmatprep.subr.mxu0 0.0
  %942 = vmatpush1.msra.mxu0 0.0
  %943 = vmatprep.subr.mxu0 0.0
  %944 = vmatpush1.msra.mxu0 0.0
  %945 = vmatprep.mubr.f32.mxu0 0.0
  %946 = vmatmul.mubr.f32.gmra.mrb[0].mxu0 %v879
  %v947 = vpop.f32.mrb[0].mxu0
  %v948 = vadd.f32 0.0, %v947
  %v949 = vpop.f32.mrb[0].mxu0
  %950 = vdwg.mxu0
  %v951 = vadd.f32 %v875, %v948
  %v952 = vxor.u32 %v951, 2147483648
  %v953 = vmul.f32 %v952, 1.442695
  %v954 = vpow.pop %v953
  %v955 = vadd.f32 %v954, 1.0
  %v956 = vrcp.pop %v955
  %v957 = vmul.f32 1.0, %v956
  %v958 = vadd.f32 %v948, %v537
  %960 = vrot.lane.b32.xlu0 %v958, 64
  %v961 = vpop.permute.xlu0 %960
  %v963 = vmul.f32 %v957, %v961
  %965 = vrot.lane.b32.xlu0 %v963, 64
  %v966 = vpop.permute.xlu0 %965
  %v968 = vadd.f32 %v875, %v966
  %v969 = vtanh.pop %v968
  %v970 = vsub.f32 1.0, %v957
  %972 = vrot.lane.b32.xlu0 %v969, 96
  %v973 = vpop.permute.xlu0 %972
  %v975 = vmul.f32 %v970, %v973
  %v976 = vmul.f32 %v957, %v768
  %v977 = vadd.f32 %v975, %v976
  %979 = vrot.lane.b32.xlu0 %v874, 96
  %v980 = vpop.permute.xlu0 %979
  %982 = vst.msk [vmem:[%s12 + $0x10] sm:$0xff] %vm344, %v980
  %983 = vst.msk [vmem:[%s12 + $0x28] sm:$0xff] %vm564, %v977
  %v984 = vld [vmem:[#allocation2 + $0x18] sm:$0xff]
  %v985 = vsel %vm344, %v980, 0
  %987 = vmatprep.subr.mxu0 0.0
  %988 = vmatpush1.msra.mxu0 %v333
  %989 = vmatprep.subr.mxu0 0.0
  %990 = vmatpush1.msra.mxu0 %v334
  %991 = vmatprep.subr.mxu0 0.0
  %992 = vmatpush1.msra.mxu0 %v335
  %993 = vmatprep.subr.mxu0 0.0
  %994 = vmatpush1.msra.mxu0 %v336
  %995 = vmatprep.subr.mxu0 0.0
  %996 = vmatpush1.msra.mxu0 0.0
  %997 = vmatprep.subr.mxu0 0.0
  %998 = vmatpush1.msra.mxu0 0.0
  %999 = vmatprep.subr.mxu0 0.0
  %1000 = vmatpush1.msra.mxu0 0.0
  %1001 = vmatprep.subr.mxu0 0.0
  %1002 = vmatpush1.msra.mxu0 0.0
  %1003 = vmatprep.subr.mxu0 0.0
  %1004 = vmatpush1.msra.mxu0 0.0
  %1005 = vmatprep.subr.mxu0 0.0
  %1006 = vmatpush1.msra.mxu0 0.0
  %1007 = vmatprep.subr.mxu0 0.0
  %1008 = vmatpush1.msra.mxu0 0.0
  %1009 = vmatprep.subr.mxu0 0.0
  %1010 = vmatpush1.msra.mxu0 0.0
  %1011 = vmatprep.subr.mxu0 0.0
  %1012 = vmatpush1.msra.mxu0 0.0
  %1013 = vmatprep.subr.mxu0 0.0
  %1014 = vmatpush1.msra.mxu0 0.0
  %1015 = vmatprep.subr.mxu0 0.0
  %1016 = vmatpush1.msra.mxu0 0.0
  %1017 = vmatprep.subr.mxu0 0.0
  %1018 = vmatpush1.msra.mxu0 0.0
  %1019 = vmatprep.subr.mxu0 0.0
  %1020 = vmatpush1.msra.mxu0 0.0
  %1021 = vmatprep.subr.mxu0 0.0
  %1022 = vmatpush1.msra.mxu0 0.0
  %1023 = vmatprep.subr.mxu0 0.0
  %1024 = vmatpush1.msra.mxu0 0.0
  %1025 = vmatprep.subr.mxu0 0.0
  %1026 = vmatpush1.msra.mxu0 0.0
  %1027 = vmatprep.subr.mxu0 0.0
  %1028 = vmatpush1.msra.mxu0 0.0
  %1029 = vmatprep.subr.mxu0 0.0
  %1030 = vmatpush1.msra.mxu0 0.0
  %1031 = vmatprep.subr.mxu0 0.0
  %1032 = vmatpush1.msra.mxu0 0.0
  %1033 = vmatprep.subr.mxu0 0.0
  %1034 = vmatpush1.msra.mxu0 0.0
  %1035 = vmatprep.subr.mxu0 0.0
  %1036 = vmatpush1.msra.mxu0 0.0
  %1037 = vmatprep.subr.mxu0 0.0
  %1038 = vmatpush1.msra.mxu0 0.0
  %1039 = vmatprep.subr.mxu0 0.0
  %1040 = vmatpush1.msra.mxu0 0.0
  %1041 = vmatprep.subr.mxu0 0.0
  %1042 = vmatpush1.msra.mxu0 0.0
  %1043 = vmatprep.subr.mxu0 0.0
  %1044 = vmatpush1.msra.mxu0 0.0
  %1045 = vmatprep.subr.mxu0 0.0
  %1046 = vmatpush1.msra.mxu0 0.0
  %1047 = vmatprep.subr.mxu0 0.0
  %1048 = vmatpush1.msra.mxu0 0.0
  %1049 = vmatprep.subr.mxu0 0.0
  %1050 = vmatpush1.msra.mxu0 0.0
  %1051 = vmatprep.mubr.f32.mxu0 0.0
  %1052 = vmatmul.mubr.f32.gmra.mrb[0].mxu0 %v985
  %v1053 = vpop.f32.mrb[0].mxu0
  %v1054 = vadd.f32 0.0, %v1053
  %v1055 = vpop.f32.mrb[0].mxu0
  %1056 = vdwg.mxu0
  %v1057 = vadd.f32 %v984, %v1054
  %v1058 = vxor.u32 %v1057, 2147483648
  %v1059 = vmul.f32 %v1058, 1.442695
  %v1060 = vpow.pop %v1059
  %v1061 = vadd.f32 %v1060, 1.0
  %v1062 = vrcp.pop %v1061
  %v1063 = vmul.f32 1.0, %v1062
  %v1064 = vadd.f32 %v1054, %v431
  %1066 = vrot.lane.b32.xlu0 %v1064, 64
  %v1067 = vpop.permute.xlu0 %1066
  %v1069 = vmul.f32 %v1063, %v1067
  %1071 = vrot.lane.b32.xlu0 %v1069, 64
  %v1072 = vpop.permute.xlu0 %1071
  %v1074 = vadd.f32 %v984, %v1072
  %v1075 = vtanh.pop %v1074
  %v1076 = vsub.f32 1.0, %v1063
  %1078 = vrot.lane.b32.xlu0 %v1075, 96
  %v1079 = vpop.permute.xlu0 %1078
  %v1081 = vmul.f32 %v1076, %v1079
  %v1082 = vmul.f32 %v1063, %v874
  %v1083 = vadd.f32 %v1081, %v1082
  %v1084 = vld [vmem:[#allocation3 + $0x20] sm:$0xff]
  %1086 = vrot.lane.b32.xlu0 %v977, 96
  %v1087 = vpop.permute.xlu0 %1086
  %v1088 = vsel %vm344, %v1087, 0
  %1090 = vmatprep.subr.mxu0 0.0
  %1091 = vmatpush1.msra.mxu0 %v337
  %1092 = vmatprep.subr.mxu0 0.0
  %1093 = vmatpush1.msra.mxu0 %v338
  %1094 = vmatprep.subr.mxu0 0.0
  %1095 = vmatpush1.msra.mxu0 %v339
  %1096 = vmatprep.subr.mxu0 0.0
  %1097 = vmatpush1.msra.mxu0 %v340
  %1098 = vmatprep.subr.mxu0 0.0
  %1099 = vmatpush1.msra.mxu0 0.0
  %1100 = vmatprep.subr.mxu0 0.0
  %1101 = vmatpush1.msra.mxu0 0.0
  %1102 = vmatprep.subr.mxu0 0.0
  %1103 = vmatpush1.msra.mxu0 0.0
  %1104 = vmatprep.subr.mxu0 0.0
  %1105 = vmatpush1.msra.mxu0 0.0
  %1106 = vmatprep.subr.mxu0 0.0
  %1107 = vmatpush1.msra.mxu0 0.0
  %1108 = vmatprep.subr.mxu0 0.0
  %1109 = vmatpush1.msra.mxu0 0.0
  %1110 = vmatprep.subr.mxu0 0.0
  %1111 = vmatpush1.msra.mxu0 0.0
  %1112 = vmatprep.subr.mxu0 0.0
  %1113 = vmatpush1.msra.mxu0 0.0
  %1114 = vmatprep.subr.mxu0 0.0
  %1115 = vmatpush1.msra.mxu0 0.0
  %1116 = vmatprep.subr.mxu0 0.0
  %1117 = vmatpush1.msra.mxu0 0.0
  %1118 = vmatprep.subr.mxu0 0.0
  %1119 = vmatpush1.msra.mxu0 0.0
  %1120 = vmatprep.subr.mxu0 0.0
  %1121 = vmatpush1.msra.mxu0 0.0
  %1122 = vmatprep.subr.mxu0 0.0
  %1123 = vmatpush1.msra.mxu0 0.0
  %1124 = vmatprep.subr.mxu0 0.0
  %1125 = vmatpush1.msra.mxu0 0.0
  %1126 = vmatprep.subr.mxu0 0.0
  %1127 = vmatpush1.msra.mxu0 0.0
  %1128 = vmatprep.subr.mxu0 0.0
  %1129 = vmatpush1.msra.mxu0 0.0
  %1130 = vmatprep.subr.mxu0 0.0
  %1131 = vmatpush1.msra.mxu0 0.0
  %1132 = vmatprep.subr.mxu0 0.0
  %1133 = vmatpush1.msra.mxu0 0.0
  %1134 = vmatprep.subr.mxu0 0.0
  %1135 = vmatpush1.msra.mxu0 0.0
  %1136 = vmatprep.subr.mxu0 0.0
  %1137 = vmatpush1.msra.mxu0 0.0
  %1138 = vmatprep.subr.mxu0 0.0
  %1139 = vmatpush1.msra.mxu0 0.0
  %1140 = vmatprep.subr.mxu0 0.0
  %1141 = vmatpush1.msra.mxu0 0.0
  %1142 = vmatprep.subr.mxu0 0.0
  %1143 = vmatpush1.msra.mxu0 0.0
  %1144 = vmatprep.subr.mxu0 0.0
  %1145 = vmatpush1.msra.mxu0 0.0
  %1146 = vmatprep.subr.mxu0 0.0
  %1147 = vmatpush1.msra.mxu0 0.0
  %1148 = vmatprep.subr.mxu0 0.0
  %1149 = vmatpush1.msra.mxu0 0.0
  %1150 = vmatprep.subr.mxu0 0.0
  %1151 = vmatpush1.msra.mxu0 0.0
  %1152 = vmatprep.subr.mxu0 0.0
  %1153 = vmatpush1.msra.mxu0 0.0
  %1154 = vmatprep.mubr.f32.mxu0 0.0
  %1155 = vmatmul.mubr.f32.gmra.mrb[0].mxu0 %v1088
  %v1156 = vpop.f32.mrb[0].mxu0
  %v1157 = vadd.f32 0.0, %v1156
  %v1158 = vpop.f32.mrb[0].mxu0
  %1159 = vdwg.mxu0
  %v1160 = vadd.f32 %v1084, %v1157
  %v1161 = vxor.u32 %v1160, 2147483648
  %v1162 = vmul.f32 %v1161, 1.442695
  %v1163 = vpow.pop %v1162
  %v1164 = vadd.f32 %v1163, 1.0
  %v1165 = vrcp.pop %v1164
  %v1166 = vmul.f32 1.0, %v1165
  %v1167 = vadd.f32 %v1157, %v537
  %1169 = vrot.lane.b32.xlu0 %v1167, 64
  %v1170 = vpop.permute.xlu0 %1169
  %v1172 = vmul.f32 %v1166, %v1170
  %1174 = vrot.lane.b32.xlu0 %v1172, 64
  %v1175 = vpop.permute.xlu0 %1174
  %v1177 = vadd.f32 %v1084, %v1175
  %v1178 = vtanh.pop %v1177
  %v1179 = vsub.f32 1.0, %v1166
  %1181 = vrot.lane.b32.xlu0 %v1178, 96
  %v1182 = vpop.permute.xlu0 %1181
  %v1184 = vmul.f32 %v1179, %v1182
  %v1185 = vmul.f32 %v1166, %v977
  %v1186 = vadd.f32 %v1184, %v1185
  %1188 = vrot.lane.b32.xlu0 %v1083, 96
  %v1189 = vpop.permute.xlu0 %1188
  %1191 = vst.msk [vmem:[%s12 + $0x18] sm:$0xff] %vm344, %v1189
  %1192 = vst.msk [vmem:[%s12 + $0x20] sm:$0xff] %vm564, %v1186
  %v1193 = vld [vmem:[#allocation2 + $0x20] sm:$0xff]
  %v1194 = vsel %vm344, %v1189, 0
  %1196 = vmatprep.subr.mxu0 0.0
  %1197 = vmatpush1.msra.mxu0 %v333
  %1198 = vmatprep.subr.mxu0 0.0
  %1199 = vmatpush1.msra.mxu0 %v334
  %1200 = vmatprep.subr.mxu0 0.0
  %1201 = vmatpush1.msra.mxu0 %v335
  %1202 = vmatprep.subr.mxu0 0.0
  %1203 = vmatpush1.msra.mxu0 %v336
  %1204 = vmatprep.subr.mxu0 0.0
  %1205 = vmatpush1.msra.mxu0 0.0
  %1206 = vmatprep.subr.mxu0 0.0
  %1207 = vmatpush1.msra.mxu0 0.0
  %1208 = vmatprep.subr.mxu0 0.0
  %1209 = vmatpush1.msra.mxu0 0.0
  %1210 = vmatprep.subr.mxu0 0.0
  %1211 = vmatpush1.msra.mxu0 0.0
  %1212 = vmatprep.subr.mxu0 0.0
  %1213 = vmatpush1.msra.mxu0 0.0
  %1214 = vmatprep.subr.mxu0 0.0
  %1215 = vmatpush1.msra.mxu0 0.0
  %1216 = vmatprep.subr.mxu0 0.0
  %1217 = vmatpush1.msra.mxu0 0.0
  %1218 = vmatprep.subr.mxu0 0.0
  %1219 = vmatpush1.msra.mxu0 0.0
  %1220 = vmatprep.subr.mxu0 0.0
  %1221 = vmatpush1.msra.mxu0 0.0
  %1222 = vmatprep.subr.mxu0 0.0
  %1223 = vmatpush1.msra.mxu0 0.0
  %1224 = vmatprep.subr.mxu0 0.0
  %1225 = vmatpush1.msra.mxu0 0.0
  %1226 = vmatprep.subr.mxu0 0.0
  %1227 = vmatpush1.msra.mxu0 0.0
  %1228 = vmatprep.subr.mxu0 0.0
  %1229 = vmatpush1.msra.mxu0 0.0
  %1230 = vmatprep.subr.mxu0 0.0
  %1231 = vmatpush1.msra.mxu0 0.0
  %1232 = vmatprep.subr.mxu0 0.0
  %1233 = vmatpush1.msra.mxu0 0.0
  %1234 = vmatprep.subr.mxu0 0.0
  %1235 = vmatpush1.msra.mxu0 0.0
  %1236 = vmatprep.subr.mxu0 0.0
  %1237 = vmatpush1.msra.mxu0 0.0
  %1238 = vmatprep.subr.mxu0 0.0
  %1239 = vmatpush1.msra.mxu0 0.0
  %1240 = vmatprep.subr.mxu0 0.0
  %1241 = vmatpush1.msra.mxu0 0.0
  %1242 = vmatprep.subr.mxu0 0.0
  %1243 = vmatpush1.msra.mxu0 0.0
  %1244 = vmatprep.subr.mxu0 0.0
  %1245 = vmatpush1.msra.mxu0 0.0
  %1246 = vmatprep.subr.mxu0 0.0
  %1247 = vmatpush1.msra.mxu0 0.0
  %1248 = vmatprep.subr.mxu0 0.0
  %1249 = vmatpush1.msra.mxu0 0.0
  %1250 = vmatprep.subr.mxu0 0.0
  %1251 = vmatpush1.msra.mxu0 0.0
  %1252 = vmatprep.subr.mxu0 0.0
  %1253 = vmatpush1.msra.mxu0 0.0
  %1254 = vmatprep.subr.mxu0 0.0
  %1255 = vmatpush1.msra.mxu0 0.0
  %1256 = vmatprep.subr.mxu0 0.0
  %1257 = vmatpush1.msra.mxu0 0.0
  %1258 = vmatprep.subr.mxu0 0.0
  %1259 = vmatpush1.msra.mxu0 0.0
  %1260 = vmatprep.mubr.f32.mxu0 0.0
  %1261 = vmatmul.mubr.f32.gmra.mrb[0].mxu0 %v1194
  %v1262 = vpop.f32.mrb[0].mxu0
  %v1263 = vadd.f32 0.0, %v1262
  %v1264 = vpop.f32.mrb[0].mxu0
  %1265 = vdwg.mxu0
  %v1266 = vadd.f32 %v1193, %v1263
  %v1267 = vxor.u32 %v1266, 2147483648
  %v1268 = vmul.f32 %v1267, 1.442695
  %v1269 = vpow.pop %v1268
  %v1270 = vadd.f32 %v1269, 1.0
  %v1271 = vrcp.pop %v1270
  %v1272 = vmul.f32 1.0, %v1271
  %v1273 = vadd.f32 %v1263, %v431
  %1275 = vrot.lane.b32.xlu0 %v1273, 64
  %v1276 = vpop.permute.xlu0 %1275
  %v1278 = vmul.f32 %v1272, %v1276
  %1280 = vrot.lane.b32.xlu0 %v1278, 64
  %v1281 = vpop.permute.xlu0 %1280
  %v1283 = vadd.f32 %v1193, %v1281
  %v1284 = vtanh.pop %v1283
  %v1285 = vsub.f32 1.0, %v1272
  %1287 = vrot.lane.b32.xlu0 %v1284, 96
  %v1288 = vpop.permute.xlu0 %1287
  %v1290 = vmul.f32 %v1285, %v1288
  %v1291 = vmul.f32 %v1272, %v1083
  %v1292 = vadd.f32 %v1290, %v1291
  %v1293 = vld [vmem:[#allocation3 + $0x18] sm:$0xff]
  %1295 = vrot.lane.b32.xlu0 %v1186, 96
  %v1296 = vpop.permute.xlu0 %1295
  %v1297 = vsel %vm344, %v1296, 0
  %1299 = vmatprep.subr.mxu0 0.0
  %1300 = vmatpush1.msra.mxu0 %v337
  %1301 = vmatprep.subr.mxu0 0.0
  %1302 = vmatpush1.msra.mxu0 %v338
  %1303 = vmatprep.subr.mxu0 0.0
  %1304 = vmatpush1.msra.mxu0 %v339
  %1305 = vmatprep.subr.mxu0 0.0
  %1306 = vmatpush1.msra.mxu0 %v340
  %1307 = vmatprep.subr.mxu0 0.0
  %1308 = vmatpush1.msra.mxu0 0.0
  %1309 = vmatprep.subr.mxu0 0.0
  %1310 = vmatpush1.msra.mxu0 0.0
  %1311 = vmatprep.subr.mxu0 0.0
  %1312 = vmatpush1.msra.mxu0 0.0
  %1313 = vmatprep.subr.mxu0 0.0
  %1314 = vmatpush1.msra.mxu0 0.0
  %1315 = vmatprep.subr.mxu0 0.0
  %1316 = vmatpush1.msra.mxu0 0.0
  %1317 = vmatprep.subr.mxu0 0.0
  %1318 = vmatpush1.msra.mxu0 0.0
  %1319 = vmatprep.subr.mxu0 0.0
  %1320 = vmatpush1.msra.mxu0 0.0
  %1321 = vmatprep.subr.mxu0 0.0
  %1322 = vmatpush1.msra.mxu0 0.0
  %1323 = vmatprep.subr.mxu0 0.0
  %1324 = vmatpush1.msra.mxu0 0.0
  %1325 = vmatprep.subr.mxu0 0.0
  %1326 = vmatpush1.msra.mxu0 0.0
  %1327 = vmatprep.subr.mxu0 0.0
  %1328 = vmatpush1.msra.mxu0 0.0
  %1329 = vmatprep.subr.mxu0 0.0
  %1330 = vmatpush1.msra.mxu0 0.0
  %1331 = vmatprep.subr.mxu0 0.0
  %1332 = vmatpush1.msra.mxu0 0.0
  %1333 = vmatprep.subr.mxu0 0.0
  %1334 = vmatpush1.msra.mxu0 0.0
  %1335 = vmatprep.subr.mxu0 0.0
  %1336 = vmatpush1.msra.mxu0 0.0
  %1337 = vmatprep.subr.mxu0 0.0
  %1338 = vmatpush1.msra.mxu0 0.0
  %1339 = vmatprep.subr.mxu0 0.0
  %1340 = vmatpush1.msra.mxu0 0.0
  %1341 = vmatprep.subr.mxu0 0.0
  %1342 = vmatpush1.msra.mxu0 0.0
  %1343 = vmatprep.subr.mxu0 0.0
  %1344 = vmatpush1.msra.mxu0 0.0
  %1345 = vmatprep.subr.mxu0 0.0
  %1346 = vmatpush1.msra.mxu0 0.0
  %1347 = vmatprep.subr.mxu0 0.0
  %1348 = vmatpush1.msra.mxu0 0.0
  %1349 = vmatprep.subr.mxu0 0.0
  %1350 = vmatpush1.msra.mxu0 0.0
  %1351 = vmatprep.subr.mxu0 0.0
  %1352 = vmatpush1.msra.mxu0 0.0
  %1353 = vmatprep.subr.mxu0 0.0
  %1354 = vmatpush1.msra.mxu0 0.0
  %1355 = vmatprep.subr.mxu0 0.0
  %1356 = vmatpush1.msra.mxu0 0.0
  %1357 = vmatprep.subr.mxu0 0.0
  %1358 = vmatpush1.msra.mxu0 0.0
  %1359 = vmatprep.subr.mxu0 0.0
  %1360 = vmatpush1.msra.mxu0 0.0
  %1361 = vmatprep.subr.mxu0 0.0
  %1362 = vmatpush1.msra.mxu0 0.0
  %1363 = vmatprep.mubr.f32.mxu0 0.0
  %1364 = vmatmul.mubr.f32.gmra.mrb[0].mxu0 %v1297
  %v1365 = vpop.f32.mrb[0].mxu0
  %v1366 = vadd.f32 0.0, %v1365
  %v1367 = vpop.f32.mrb[0].mxu0
  %1368 = vdwg.mxu0
  %v1369 = vadd.f32 %v1293, %v1366
  %v1370 = vxor.u32 %v1369, 2147483648
  %v1371 = vmul.f32 %v1370, 1.442695
  %v1372 = vpow.pop %v1371
  %v1373 = vadd.f32 %v1372, 1.0
  %v1374 = vrcp.pop %v1373
  %v1375 = vmul.f32 1.0, %v1374
  %v1376 = vadd.f32 %v1366, %v537
  %1378 = vrot.lane.b32.xlu0 %v1376, 64
  %v1379 = vpop.permute.xlu0 %1378
  %v1381 = vmul.f32 %v1375, %v1379
  %1383 = vrot.lane.b32.xlu0 %v1381, 64
  %v1384 = vpop.permute.xlu0 %1383
  %v1386 = vadd.f32 %v1293, %v1384
  %v1387 = vtanh.pop %v1386
  %v1388 = vsub.f32 1.0, %v1375
  %1390 = vrot.lane.b32.xlu0 %v1387, 96
  %v1391 = vpop.permute.xlu0 %1390
  %v1393 = vmul.f32 %v1388, %v1391
  %v1394 = vmul.f32 %v1375, %v1186
  %v1395 = vadd.f32 %v1393, %v1394
  %1397 = vrot.lane.b32.xlu0 %v1292, 96
  %v1398 = vpop.permute.xlu0 %1397
  %1400 = vst.msk [vmem:[%s12 + $0x20] sm:$0xff] %vm344, %v1398
  %1401 = vst.msk [vmem:[%s12 + $0x18] sm:$0xff] %vm564, %v1395
  %v1402 = vld [vmem:[#allocation2 + $0x28] sm:$0xff]
  %v1403 = vsel %vm344, %v1398, 0
  %1405 = vmatprep.subr.mxu0 0.0
  %1406 = vmatpush1.msra.mxu0 %v333
  %1407 = vmatprep.subr.mxu0 0.0
  %1408 = vmatpush1.msra.mxu0 %v334
  %1409 = vmatprep.subr.mxu0 0.0
  %1410 = vmatpush1.msra.mxu0 %v335
  %1411 = vmatprep.subr.mxu0 0.0
  %1412 = vmatpush1.msra.mxu0 %v336
  %1413 = vmatprep.subr.mxu0 0.0
  %1414 = vmatpush1.msra.mxu0 0.0
  %1415 = vmatprep.subr.mxu0 0.0
  %1416 = vmatpush1.msra.mxu0 0.0
  %1417 = vmatprep.subr.mxu0 0.0
  %1418 = vmatpush1.msra.mxu0 0.0
  %1419 = vmatprep.subr.mxu0 0.0
  %1420 = vmatpush1.msra.mxu0 0.0
  %1421 = vmatprep.subr.mxu0 0.0
  %1422 = vmatpush1.msra.mxu0 0.0
  %1423 = vmatprep.subr.mxu0 0.0
  %1424 = vmatpush1.msra.mxu0 0.0
  %1425 = vmatprep.subr.mxu0 0.0
  %1426 = vmatpush1.msra.mxu0 0.0
  %1427 = vmatprep.subr.mxu0 0.0
  %1428 = vmatpush1.msra.mxu0 0.0
  %1429 = vmatprep.subr.mxu0 0.0
  %1430 = vmatpush1.msra.mxu0 0.0
  %1431 = vmatprep.subr.mxu0 0.0
  %1432 = vmatpush1.msra.mxu0 0.0
  %1433 = vmatprep.subr.mxu0 0.0
  %1434 = vmatpush1.msra.mxu0 0.0
  %1435 = vmatprep.subr.mxu0 0.0
  %1436 = vmatpush1.msra.mxu0 0.0
  %1437 = vmatprep.subr.mxu0 0.0
  %1438 = vmatpush1.msra.mxu0 0.0
  %1439 = vmatprep.subr.mxu0 0.0
  %1440 = vmatpush1.msra.mxu0 0.0
  %1441 = vmatprep.subr.mxu0 0.0
  %1442 = vmatpush1.msra.mxu0 0.0
  %1443 = vmatprep.subr.mxu0 0.0
  %1444 = vmatpush1.msra.mxu0 0.0
  %1445 = vmatprep.subr.mxu0 0.0
  %1446 = vmatpush1.msra.mxu0 0.0
  %1447 = vmatprep.subr.mxu0 0.0
  %1448 = vmatpush1.msra.mxu0 0.0
  %1449 = vmatprep.subr.mxu0 0.0
  %1450 = vmatpush1.msra.mxu0 0.0
  %1451 = vmatprep.subr.mxu0 0.0
  %1452 = vmatpush1.msra.mxu0 0.0
  %1453 = vmatprep.subr.mxu0 0.0
  %1454 = vmatpush1.msra.mxu0 0.0
  %1455 = vmatprep.subr.mxu0 0.0
  %1456 = vmatpush1.msra.mxu0 0.0
  %1457 = vmatprep.subr.mxu0 0.0
  %1458 = vmatpush1.msra.mxu0 0.0
  %1459 = vmatprep.subr.mxu0 0.0
  %1460 = vmatpush1.msra.mxu0 0.0
  %1461 = vmatprep.subr.mxu0 0.0
  %1462 = vmatpush1.msra.mxu0 0.0
  %1463 = vmatprep.subr.mxu0 0.0
  %1464 = vmatpush1.msra.mxu0 0.0
  %1465 = vmatprep.subr.mxu0 0.0
  %1466 = vmatpush1.msra.mxu0 0.0
  %1467 = vmatprep.subr.mxu0 0.0
  %1468 = vmatpush1.msra.mxu0 0.0
  %1469 = vmatprep.mubr.f32.mxu0 0.0
  %1470 = vmatmul.mubr.f32.gmra.mrb[0].mxu0 %v1403
  %v1471 = vpop.f32.mrb[0].mxu0
  %v1472 = vadd.f32 0.0, %v1471
  %v1473 = vpop.f32.mrb[0].mxu0
  %1474 = vdwg.mxu0
  %v1475 = vadd.f32 %v1402, %v1472
  %v1476 = vxor.u32 %v1475, 2147483648
  %v1477 = vmul.f32 %v1476, 1.442695
  %v1478 = vpow.pop %v1477
  %v1479 = vadd.f32 %v1478, 1.0
  %v1480 = vrcp.pop %v1479
  %v1481 = vmul.f32 1.0, %v1480
  %v1482 = vadd.f32 %v1472, %v431
  %1484 = vrot.lane.b32.xlu0 %v1482, 64
  %v1485 = vpop.permute.xlu0 %1484
  %v1487 = vmul.f32 %v1481, %v1485
  %1489 = vrot.lane.b32.xlu0 %v1487, 64
  %v1490 = vpop.permute.xlu0 %1489
  %v1492 = vadd.f32 %v1402, %v1490
  %v1493 = vtanh.pop %v1492
  %v1494 = vsub.f32 1.0, %v1481
  %1496 = vrot.lane.b32.xlu0 %v1493, 96
  %v1497 = vpop.permute.xlu0 %1496
  %v1499 = vmul.f32 %v1494, %v1497
  %v1500 = vmul.f32 %v1481, %v1292
  %v1501 = vadd.f32 %v1499, %v1500
  %v1502 = vld [vmem:[#allocation3 + $0x10] sm:$0xff]
  %1504 = vrot.lane.b32.xlu0 %v1395, 96
  %v1505 = vpop.permute.xlu0 %1504
  %v1506 = vsel %vm344, %v1505, 0
  %1508 = vmatprep.subr.mxu0 0.0
  %1509 = vmatpush1.msra.mxu0 %v337
  %1510 = vmatprep.subr.mxu0 0.0
  %1511 = vmatpush1.msra.mxu0 %v338
  %1512 = vmatprep.subr.mxu0 0.0
  %1513 = vmatpush1.msra.mxu0 %v339
  %1514 = vmatprep.subr.mxu0 0.0
  %1515 = vmatpush1.msra.mxu0 %v340
  %1516 = vmatprep.subr.mxu0 0.0
  %1517 = vmatpush1.msra.mxu0 0.0
  %1518 = vmatprep.subr.mxu0 0.0
  %1519 = vmatpush1.msra.mxu0 0.0
  %1520 = vmatprep.subr.mxu0 0.0
  %1521 = vmatpush1.msra.mxu0 0.0
  %1522 = vmatprep.subr.mxu0 0.0
  %1523 = vmatpush1.msra.mxu0 0.0
  %1524 = vmatprep.subr.mxu0 0.0
  %1525 = vmatpush1.msra.mxu0 0.0
  %1526 = vmatprep.subr.mxu0 0.0
  %1527 = vmatpush1.msra.mxu0 0.0
  %1528 = vmatprep.subr.mxu0 0.0
  %1529 = vmatpush1.msra.mxu0 0.0
  %1530 = vmatprep.subr.mxu0 0.0
  %1531 = vmatpush1.msra.mxu0 0.0
  %1532 = vmatprep.subr.mxu0 0.0
  %1533 = vmatpush1.msra.mxu0 0.0
  %1534 = vmatprep.subr.mxu0 0.0
  %1535 = vmatpush1.msra.mxu0 0.0
  %1536 = vmatprep.subr.mxu0 0.0
  %1537 = vmatpush1.msra.mxu0 0.0
  %1538 = vmatprep.subr.mxu0 0.0
  %1539 = vmatpush1.msra.mxu0 0.0
  %1540 = vmatprep.subr.mxu0 0.0
  %1541 = vmatpush1.msra.mxu0 0.0
  %1542 = vmatprep.subr.mxu0 0.0
  %1543 = vmatpush1.msra.mxu0 0.0
  %1544 = vmatprep.subr.mxu0 0.0
  %1545 = vmatpush1.msra.mxu0 0.0
  %1546 = vmatprep.subr.mxu0 0.0
  %1547 = vmatpush1.msra.mxu0 0.0
  %1548 = vmatprep.subr.mxu0 0.0
  %1549 = vmatpush1.msra.mxu0 0.0
  %1550 = vmatprep.subr.mxu0 0.0
  %1551 = vmatpush1.msra.mxu0 0.0
  %1552 = vmatprep.subr.mxu0 0.0
  %1553 = vmatpush1.msra.mxu0 0.0
  %1554 = vmatprep.subr.mxu0 0.0
  %1555 = vmatpush1.msra.mxu0 0.0
  %1556 = vmatprep.subr.mxu0 0.0
  %1557 = vmatpush1.msra.mxu0 0.0
  %1558 = vmatprep.subr.mxu0 0.0
  %1559 = vmatpush1.msra.mxu0 0.0
  %1560 = vmatprep.subr.mxu0 0.0
  %1561 = vmatpush1.msra.mxu0 0.0
  %1562 = vmatprep.subr.mxu0 0.0
  %1563 = vmatpush1.msra.mxu0 0.0
  %1564 = vmatprep.subr.mxu0 0.0
  %1565 = vmatpush1.msra.mxu0 0.0
  %1566 = vmatprep.subr.mxu0 0.0
  %1567 = vmatpush1.msra.mxu0 0.0
  %1568 = vmatprep.subr.mxu0 0.0
  %1569 = vmatpush1.msra.mxu0 0.0
  %1570 = vmatprep.subr.mxu0 0.0
  %1571 = vmatpush1.msra.mxu0 0.0
  %1572 = vmatprep.mubr.f32.mxu0 0.0
  %1573 = vmatmul.mubr.f32.gmra.mrb[0].mxu0 %v1506
  %v1574 = vpop.f32.mrb[0].mxu0
  %v1575 = vadd.f32 0.0, %v1574
  %v1576 = vpop.f32.mrb[0].mxu0
  %1577 = vdwg.mxu0
  %v1578 = vadd.f32 %v1502, %v1575
  %v1579 = vxor.u32 %v1578, 2147483648
  %v1580 = vmul.f32 %v1579, 1.442695
  %v1581 = vpow.pop %v1580
  %v1582 = vadd.f32 %v1581, 1.0
  %v1583 = vrcp.pop %v1582
  %v1584 = vmul.f32 1.0, %v1583
  %v1585 = vadd.f32 %v1575, %v537
  %1587 = vrot.lane.b32.xlu0 %v1585, 64
  %v1588 = vpop.permute.xlu0 %1587
  %v1590 = vmul.f32 %v1584, %v1588
  %1592 = vrot.lane.b32.xlu0 %v1590, 64
  %v1593 = vpop.permute.xlu0 %1592
  %v1595 = vadd.f32 %v1502, %v1593
  %v1596 = vtanh.pop %v1595
  %v1597 = vsub.f32 1.0, %v1584
  %1599 = vrot.lane.b32.xlu0 %v1596, 96
  %v1600 = vpop.permute.xlu0 %1599
  %v1602 = vmul.f32 %v1597, %v1600
  %v1603 = vmul.f32 %v1584, %v1395
  %v1604 = vadd.f32 %v1602, %v1603
  %1606 = vrot.lane.b32.xlu0 %v1501, 96
  %v1607 = vpop.permute.xlu0 %1606
  %1609 = vst.msk [vmem:[%s12 + $0x28] sm:$0xff] %vm344, %v1607
  %1610 = vst.msk [vmem:[%s12 + $0x10] sm:$0xff] %vm564, %v1604
  %v1611 = vld [vmem:[#allocation2 + $0x30] sm:$0xff]
  %v1612 = vsel %vm344, %v1607, 0
  %1614 = vmatprep.subr.mxu0 0.0
  %1615 = vmatpush1.msra.mxu0 %v333
  %1616 = vmatprep.subr.mxu0 0.0
  %1617 = vmatpush1.msra.mxu0 %v334
  %1618 = vmatprep.subr.mxu0 0.0
  %1619 = vmatpush1.msra.mxu0 %v335
  %1620 = vmatprep.subr.mxu0 0.0
  %1621 = vmatpush1.msra.mxu0 %v336
  %1622 = vmatprep.subr.mxu0 0.0
  %1623 = vmatpush1.msra.mxu0 0.0
  %1624 = vmatprep.subr.mxu0 0.0
  %1625 = vmatpush1.msra.mxu0 0.0
  %1626 = vmatprep.subr.mxu0 0.0
  %1627 = vmatpush1.msra.mxu0 0.0
  %1628 = vmatprep.subr.mxu0 0.0
  %1629 = vmatpush1.msra.mxu0 0.0
  %1630 = vmatprep.subr.mxu0 0.0
  %1631 = vmatpush1.msra.mxu0 0.0
  %1632 = vmatprep.subr.mxu0 0.0
  %1633 = vmatpush1.msra.mxu0 0.0
  %1634 = vmatprep.subr.mxu0 0.0
  %1635 = vmatpush1.msra.mxu0 0.0
  %1636 = vmatprep.subr.mxu0 0.0
  %1637 = vmatpush1.msra.mxu0 0.0
  %1638 = vmatprep.subr.mxu0 0.0
  %1639 = vmatpush1.msra.mxu0 0.0
  %1640 = vmatprep.subr.mxu0 0.0
  %1641 = vmatpush1.msra.mxu0 0.0
  %1642 = vmatprep.subr.mxu0 0.0
  %1643 = vmatpush1.msra.mxu0 0.0
  %1644 = vmatprep.subr.mxu0 0.0
  %1645 = vmatpush1.msra.mxu0 0.0
  %1646 = vmatprep.subr.mxu0 0.0
  %1647 = vmatpush1.msra.mxu0 0.0
  %1648 = vmatprep.subr.mxu0 0.0
  %1649 = vmatpush1.msra.mxu0 0.0
  %1650 = vmatprep.subr.mxu0 0.0
  %1651 = vmatpush1.msra.mxu0 0.0
  %1652 = vmatprep.subr.mxu0 0.0
  %1653 = vmatpush1.msra.mxu0 0.0
  %1654 = vmatprep.subr.mxu0 0.0
  %1655 = vmatpush1.msra.mxu0 0.0
  %1656 = vmatprep.subr.mxu0 0.0
  %1657 = vmatpush1.msra.mxu0 0.0
  %1658 = vmatprep.subr.mxu0 0.0
  %1659 = vmatpush1.msra.mxu0 0.0
  %1660 = vmatprep.subr.mxu0 0.0
  %1661 = vmatpush1.msra.mxu0 0.0
  %1662 = vmatprep.subr.mxu0 0.0
  %1663 = vmatpush1.msra.mxu0 0.0
  %1664 = vmatprep.subr.mxu0 0.0
  %1665 = vmatpush1.msra.mxu0 0.0
  %1666 = vmatprep.subr.mxu0 0.0
  %1667 = vmatpush1.msra.mxu0 0.0
  %1668 = vmatprep.subr.mxu0 0.0
  %1669 = vmatpush1.msra.mxu0 0.0
  %1670 = vmatprep.subr.mxu0 0.0
  %1671 = vmatpush1.msra.mxu0 0.0
  %1672 = vmatprep.subr.mxu0 0.0
  %1673 = vmatpush1.msra.mxu0 0.0
  %1674 = vmatprep.subr.mxu0 0.0
  %1675 = vmatpush1.msra.mxu0 0.0
  %1676 = vmatprep.subr.mxu0 0.0
  %1677 = vmatpush1.msra.mxu0 0.0
  %1678 = vmatprep.mubr.f32.mxu0 0.0
  %1679 = vmatmul.mubr.f32.gmra.mrb[0].mxu0 %v1612
  %v1680 = vpop.f32.mrb[0].mxu0
  %v1681 = vadd.f32 0.0, %v1680
  %v1682 = vpop.f32.mrb[0].mxu0
  %1683 = vdwg.mxu0
  %v1684 = vadd.f32 %v1611, %v1681
  %v1685 = vxor.u32 %v1684, 2147483648
  %v1686 = vmul.f32 %v1685, 1.442695
  %v1687 = vpow.pop %v1686
  %v1688 = vadd.f32 %v1687, 1.0
  %v1689 = vrcp.pop %v1688
  %v1690 = vmul.f32 1.0, %v1689
  %v1691 = vadd.f32 %v1681, %v431
  %1693 = vrot.lane.b32.xlu0 %v1691, 64
  %v1694 = vpop.permute.xlu0 %1693
  %v1696 = vmul.f32 %v1690, %v1694
  %1698 = vrot.lane.b32.xlu0 %v1696, 64
  %v1699 = vpop.permute.xlu0 %1698
  %v1701 = vadd.f32 %v1611, %v1699
  %v1702 = vtanh.pop %v1701
  %v1703 = vsub.f32 1.0, %v1690
  %1705 = vrot.lane.b32.xlu0 %v1702, 96
  %v1706 = vpop.permute.xlu0 %1705
  %v1708 = vmul.f32 %v1703, %v1706
  %v1709 = vmul.f32 %v1690, %v1501
  %v1710 = vadd.f32 %v1708, %v1709
  %v1711 = vld [vmem:[#allocation3 + $0x8] sm:$0xff]
  %1713 = vrot.lane.b32.xlu0 %v1604, 96
  %v1714 = vpop.permute.xlu0 %1713
  %v1715 = vsel %vm344, %v1714, 0
  %1717 = vmatprep.subr.mxu0 0.0
  %1718 = vmatpush1.msra.mxu0 %v337
  %1719 = vmatprep.subr.mxu0 0.0
  %1720 = vmatpush1.msra.mxu0 %v338
  %1721 = vmatprep.subr.mxu0 0.0
  %1722 = vmatpush1.msra.mxu0 %v339
  %1723 = vmatprep.subr.mxu0 0.0
  %1724 = vmatpush1.msra.mxu0 %v340
  %1725 = vmatprep.subr.mxu0 0.0
  %1726 = vmatpush1.msra.mxu0 0.0
  %1727 = vmatprep.subr.mxu0 0.0
  %1728 = vmatpush1.msra.mxu0 0.0
  %1729 = vmatprep.subr.mxu0 0.0
  %1730 = vmatpush1.msra.mxu0 0.0
  %1731 = vmatprep.subr.mxu0 0.0
  %1732 = vmatpush1.msra.mxu0 0.0
  %1733 = vmatprep.subr.mxu0 0.0
  %1734 = vmatpush1.msra.mxu0 0.0
  %1735 = vmatprep.subr.mxu0 0.0
  %1736 = vmatpush1.msra.mxu0 0.0
  %1737 = vmatprep.subr.mxu0 0.0
  %1738 = vmatpush1.msra.mxu0 0.0
  %1739 = vmatprep.subr.mxu0 0.0
  %1740 = vmatpush1.msra.mxu0 0.0
  %1741 = vmatprep.subr.mxu0 0.0
  %1742 = vmatpush1.msra.mxu0 0.0
  %1743 = vmatprep.subr.mxu0 0.0
  %1744 = vmatpush1.msra.mxu0 0.0
  %1745 = vmatprep.subr.mxu0 0.0
  %1746 = vmatpush1.msra.mxu0 0.0
  %1747 = vmatprep.subr.mxu0 0.0
  %1748 = vmatpush1.msra.mxu0 0.0
  %1749 = vmatprep.subr.mxu0 0.0
  %1750 = vmatpush1.msra.mxu0 0.0
  %1751 = vmatprep.subr.mxu0 0.0
  %1752 = vmatpush1.msra.mxu0 0.0
  %1753 = vmatprep.subr.mxu0 0.0
  %1754 = vmatpush1.msra.mxu0 0.0
  %1755 = vmatprep.subr.mxu0 0.0
  %1756 = vmatpush1.msra.mxu0 0.0
  %1757 = vmatprep.subr.mxu0 0.0
  %1758 = vmatpush1.msra.mxu0 0.0
  %1759 = vmatprep.subr.mxu0 0.0
  %1760 = vmatpush1.msra.mxu0 0.0
  %1761 = vmatprep.subr.mxu0 0.0
  %1762 = vmatpush1.msra.mxu0 0.0
  %1763 = vmatprep.subr.mxu0 0.0
  %1764 = vmatpush1.msra.mxu0 0.0
  %1765 = vmatprep.subr.mxu0 0.0
  %1766 = vmatpush1.msra.mxu0 0.0
  %1767 = vmatprep.subr.mxu0 0.0
  %1768 = vmatpush1.msra.mxu0 0.0
  %1769 = vmatprep.subr.mxu0 0.0
  %1770 = vmatpush1.msra.mxu0 0.0
  %1771 = vmatprep.subr.mxu0 0.0
  %1772 = vmatpush1.msra.mxu0 0.0
  %1773 = vmatprep.subr.mxu0 0.0
  %1774 = vmatpush1.msra.mxu0 0.0
  %1775 = vmatprep.subr.mxu0 0.0
  %1776 = vmatpush1.msra.mxu0 0.0
  %1777 = vmatprep.subr.mxu0 0.0
  %1778 = vmatpush1.msra.mxu0 0.0
  %1779 = vmatprep.subr.mxu0 0.0
  %1780 = vmatpush1.msra.mxu0 0.0
  %1781 = vmatprep.mubr.f32.mxu0 0.0
  %1782 = vmatmul.mubr.f32.gmra.mrb[0].mxu0 %v1715
  %v1783 = vpop.f32.mrb[0].mxu0
  %v1784 = vadd.f32 0.0, %v1783
  %v1785 = vpop.f32.mrb[0].mxu0
  %1786 = vdwg.mxu0
  %v1787 = vadd.f32 %v1711, %v1784
  %v1788 = vxor.u32 %v1787, 2147483648
  %v1789 = vmul.f32 %v1788, 1.442695
  %v1790 = vpow.pop %v1789
  %v1791 = vadd.f32 %v1790, 1.0
  %v1792 = vrcp.pop %v1791
  %v1793 = vmul.f32 1.0, %v1792
  %v1794 = vadd.f32 %v1784, %v537
  %1796 = vrot.lane.b32.xlu0 %v1794, 64
  %v1797 = vpop.permute.xlu0 %1796
  %v1799 = vmul.f32 %v1793, %v1797
  %1801 = vrot.lane.b32.xlu0 %v1799, 64
  %v1802 = vpop.permute.xlu0 %1801
  %v1804 = vadd.f32 %v1711, %v1802
  %v1805 = vtanh.pop %v1804
  %v1806 = vsub.f32 1.0, %v1793
  %1808 = vrot.lane.b32.xlu0 %v1805, 96
  %v1809 = vpop.permute.xlu0 %1808
  %v1811 = vmul.f32 %v1806, %v1809
  %v1812 = vmul.f32 %v1793, %v1604
  %v1813 = vadd.f32 %v1811, %v1812
  %1815 = vrot.lane.b32.xlu0 %v1710, 96
  %v1816 = vpop.permute.xlu0 %1815
  %1818 = vst.msk [vmem:[%s12 + $0x30] sm:$0xff] %vm344, %v1816
  %1819 = vst.msk [vmem:[%s12 + $0x8] sm:$0xff] %vm564, %v1813
  %v1820 = vld [vmem:[#allocation2 + $0x38] sm:$0xff]
  %v1821 = vsel %vm344, %v1816, 0
  %1823 = vmatprep.subr.mxu0 0.0
  %1824 = vmatpush1.msra.mxu0 %v333
  %1825 = vmatprep.subr.mxu0 0.0
  %1826 = vmatpush1.msra.mxu0 %v334
  %1827 = vmatprep.subr.mxu0 0.0
  %1828 = vmatpush1.msra.mxu0 %v335
  %1829 = vmatprep.subr.mxu0 0.0
  %1830 = vmatpush1.msra.mxu0 %v336
  %1831 = vmatprep.subr.mxu0 0.0
  %1832 = vmatpush1.msra.mxu0 0.0
  %1833 = vmatprep.subr.mxu0 0.0
  %1834 = vmatpush1.msra.mxu0 0.0
  %1835 = vmatprep.subr.mxu0 0.0
  %1836 = vmatpush1.msra.mxu0 0.0
  %1837 = vmatprep.subr.mxu0 0.0
  %1838 = vmatpush1.msra.mxu0 0.0
  %1839 = vmatprep.subr.mxu0 0.0
  %1840 = vmatpush1.msra.mxu0 0.0
  %1841 = vmatprep.subr.mxu0 0.0
  %1842 = vmatpush1.msra.mxu0 0.0
  %1843 = vmatprep.subr.mxu0 0.0
  %1844 = vmatpush1.msra.mxu0 0.0
  %1845 = vmatprep.subr.mxu0 0.0
  %1846 = vmatpush1.msra.mxu0 0.0
  %1847 = vmatprep.subr.mxu0 0.0
  %1848 = vmatpush1.msra.mxu0 0.0
  %1849 = vmatprep.subr.mxu0 0.0
  %1850 = vmatpush1.msra.mxu0 0.0
  %1851 = vmatprep.subr.mxu0 0.0
  %1852 = vmatpush1.msra.mxu0 0.0
  %1853 = vmatprep.subr.mxu0 0.0
  %1854 = vmatpush1.msra.mxu0 0.0
  %1855 = vmatprep.subr.mxu0 0.0
  %1856 = vmatpush1.msra.mxu0 0.0
  %1857 = vmatprep.subr.mxu0 0.0
  %1858 = vmatpush1.msra.mxu0 0.0
  %1859 = vmatprep.subr.mxu0 0.0
  %1860 = vmatpush1.msra.mxu0 0.0
  %1861 = vmatprep.subr.mxu0 0.0
  %1862 = vmatpush1.msra.mxu0 0.0
  %1863 = vmatprep.subr.mxu0 0.0
  %1864 = vmatpush1.msra.mxu0 0.0
  %1865 = vmatprep.subr.mxu0 0.0
  %1866 = vmatpush1.msra.mxu0 0.0
  %1867 = vmatprep.subr.mxu0 0.0
  %1868 = vmatpush1.msra.mxu0 0.0
  %1869 = vmatprep.subr.mxu0 0.0
  %1870 = vmatpush1.msra.mxu0 0.0
  %1871 = vmatprep.subr.mxu0 0.0
  %1872 = vmatpush1.msra.mxu0 0.0
  %1873 = vmatprep.subr.mxu0 0.0
  %1874 = vmatpush1.msra.mxu0 0.0
  %1875 = vmatprep.subr.mxu0 0.0
  %1876 = vmatpush1.msra.mxu0 0.0
  %1877 = vmatprep.subr.mxu0 0.0
  %1878 = vmatpush1.msra.mxu0 0.0
  %1879 = vmatprep.subr.mxu0 0.0
  %1880 = vmatpush1.msra.mxu0 0.0
  %1881 = vmatprep.subr.mxu0 0.0
  %1882 = vmatpush1.msra.mxu0 0.0
  %1883 = vmatprep.subr.mxu0 0.0
  %1884 = vmatpush1.msra.mxu0 0.0
  %1885 = vmatprep.subr.mxu0 0.0
  %1886 = vmatpush1.msra.mxu0 0.0
  %1887 = vmatprep.mubr.f32.mxu0 0.0
  %1888 = vmatmul.mubr.f32.gmra.mrb[0].mxu0 %v1821
  %v1889 = vpop.f32.mrb[0].mxu0
  %v1890 = vadd.f32 0.0, %v1889
  %v1891 = vpop.f32.mrb[0].mxu0
  %1892 = vdwg.mxu0
  %v1893 = vadd.f32 %v1820, %v1890
  %v1894 = vxor.u32 %v1893, 2147483648
  %v1895 = vmul.f32 %v1894, 1.442695
  %v1896 = vpow.pop %v1895
  %v1897 = vadd.f32 %v1896, 1.0
  %v1898 = vrcp.pop %v1897
  %v1899 = vmul.f32 1.0, %v1898
  %v1900 = vadd.f32 %v1890, %v431
  %1902 = vrot.lane.b32.xlu0 %v1900, 64
  %v1903 = vpop.permute.xlu0 %1902
  %v1905 = vmul.f32 %v1899, %v1903
  %1907 = vrot.lane.b32.xlu0 %v1905, 64
  %v1908 = vpop.permute.xlu0 %1907
  %v1910 = vadd.f32 %v1820, %v1908
  %v1911 = vtanh.pop %v1910
  %v1912 = vsub.f32 1.0, %v1899
  %1914 = vrot.lane.b32.xlu0 %v1911, 96
  %v1915 = vpop.permute.xlu0 %1914
  %v1917 = vmul.f32 %v1912, %v1915
  %v1918 = vmul.f32 %v1899, %v1710
  %v1919 = vadd.f32 %v1917, %v1918
  %v1920 = vld [vmem:[#allocation3] sm:$0xff]
  %1922 = vrot.lane.b32.xlu0 %v1813, 96
  %v1923 = vpop.permute.xlu0 %1922
  %v1924 = vsel %vm344, %v1923, 0
  %1926 = vmatprep.subr.mxu0 0.0
  %1927 = vmatpush1.msra.mxu0 %v337
  %1928 = vmatprep.subr.mxu0 0.0
  %1929 = vmatpush1.msra.mxu0 %v338
  %1930 = vmatprep.subr.mxu0 0.0
  %1931 = vmatpush1.msra.mxu0 %v339
  %1932 = vmatprep.subr.mxu0 0.0
  %1933 = vmatpush1.msra.mxu0 %v340
  %1934 = vmatprep.subr.mxu0 0.0
  %1935 = vmatpush1.msra.mxu0 0.0
  %1936 = vmatprep.subr.mxu0 0.0
  %1937 = vmatpush1.msra.mxu0 0.0
  %1938 = vmatprep.subr.mxu0 0.0
  %1939 = vmatpush1.msra.mxu0 0.0
  %1940 = vmatprep.subr.mxu0 0.0
  %1941 = vmatpush1.msra.mxu0 0.0
  %1942 = vmatprep.subr.mxu0 0.0
  %1943 = vmatpush1.msra.mxu0 0.0
  %1944 = vmatprep.subr.mxu0 0.0
  %1945 = vmatpush1.msra.mxu0 0.0
  %1946 = vmatprep.subr.mxu0 0.0
  %1947 = vmatpush1.msra.mxu0 0.0
  %1948 = vmatprep.subr.mxu0 0.0
  %1949 = vmatpush1.msra.mxu0 0.0
  %1950 = vmatprep.subr.mxu0 0.0
  %1951 = vmatpush1.msra.mxu0 0.0
  %1952 = vmatprep.subr.mxu0 0.0
  %1953 = vmatpush1.msra.mxu0 0.0
  %1954 = vmatprep.subr.mxu0 0.0
  %1955 = vmatpush1.msra.mxu0 0.0
  %1956 = vmatprep.subr.mxu0 0.0
  %1957 = vmatpush1.msra.mxu0 0.0
  %1958 = vmatprep.subr.mxu0 0.0
  %1959 = vmatpush1.msra.mxu0 0.0
  %1960 = vmatprep.subr.mxu0 0.0
  %1961 = vmatpush1.msra.mxu0 0.0
  %1962 = vmatprep.subr.mxu0 0.0
  %1963 = vmatpush1.msra.mxu0 0.0
  %1964 = vmatprep.subr.mxu0 0.0
  %1965 = vmatpush1.msra.mxu0 0.0
  %1966 = vmatprep.subr.mxu0 0.0
  %1967 = vmatpush1.msra.mxu0 0.0
  %1968 = vmatprep.subr.mxu0 0.0
  %1969 = vmatpush1.msra.mxu0 0.0
  %1970 = vmatprep.subr.mxu0 0.0
  %1971 = vmatpush1.msra.mxu0 0.0
  %1972 = vmatprep.subr.mxu0 0.0
  %1973 = vmatpush1.msra.mxu0 0.0
  %1974 = vmatprep.subr.mxu0 0.0
  %1975 = vmatpush1.msra.mxu0 0.0
  %1976 = vmatprep.subr.mxu0 0.0
  %1977 = vmatpush1.msra.mxu0 0.0
  %1978 = vmatprep.subr.mxu0 0.0
  %1979 = vmatpush1.msra.mxu0 0.0
  %1980 = vmatprep.subr.mxu0 0.0
  %1981 = vmatpush1.msra.mxu0 0.0
  %1982 = vmatprep.subr.mxu0 0.0
  %1983 = vmatpush1.msra.mxu0 0.0
  %1984 = vmatprep.subr.mxu0 0.0
  %1985 = vmatpush1.msra.mxu0 0.0
  %1986 = vmatprep.subr.mxu0 0.0
  %1987 = vmatpush1.msra.mxu0 0.0
  %1988 = vmatprep.subr.mxu0 0.0
  %1989 = vmatpush1.msra.mxu0 0.0
  %1990 = vmatprep.mubr.f32.mxu0 0.0
  %1991 = vmatmul.mubr.f32.gmra.mrb[0].mxu0 %v1924
  %v1992 = vpop.f32.mrb[0].mxu0
  %v1993 = vadd.f32 0.0, %v1992
  %v1994 = vpop.f32.mrb[0].mxu0
  %1995 = vdwg.mxu0
  %v1996 = vadd.f32 %v1920, %v1993
  %v1997 = vxor.u32 %v1996, 2147483648
  %v1998 = vmul.f32 %v1997, 1.442695
  %v1999 = vpow.pop %v1998
  %v2000 = vadd.f32 %v1999, 1.0
  %v2001 = vrcp.pop %v2000
  %v2002 = vmul.f32 1.0, %v2001
  %v2003 = vadd.f32 %v1993, %v537
  %2005 = vrot.lane.b32.xlu0 %v2003, 64
  %v2006 = vpop.permute.xlu0 %2005
  %v2008 = vmul.f32 %v2002, %v2006
  %2010 = vrot.lane.b32.xlu0 %v2008, 64
  %v2011 = vpop.permute.xlu0 %2010
  %v2013 = vadd.f32 %v1920, %v2011
  %v2014 = vtanh.pop %v2013
  %v2015 = vsub.f32 1.0, %v2002
  %2017 = vrot.lane.b32.xlu0 %v2014, 96
  %v2018 = vpop.permute.xlu0 %2017
  %v2020 = vmul.f32 %v2015, %v2018
  %v2021 = vmul.f32 %v2002, %v1813
  %v2022 = vadd.f32 %v2020, %v2021
  %2024 = vrot.lane.b32.xlu0 %v1919, 96
  %v2025 = vpop.permute.xlu0 %2024
  %2027 = vst.msk [vmem:[%s12 + $0x38] sm:$0xff] %vm344, %v2025
  %2028 = vst.msk [vmem:[%s12] sm:$0xff] %vm564, %v2022
  %v2029 = vld [vmem:[%s9] sm:$0xff]
  %v2030 = vld [vmem:[%s9 + $0x8] sm:$0xff]
  %v2031 = vld [vmem:[%s9 + $0x10] sm:$0xff]
  %v2032 = vld [vmem:[%s9 + $0x18] sm:$0xff]
  %v2033 = vld [vmem:[%s10] sm:$0xff]
  %v2034 = vld [vmem:[%s10 + $0x8] sm:$0xff]
  %v2035 = vld [vmem:[%s10 + $0x10] sm:$0xff]
  %v2036 = vld [vmem:[%s10 + $0x18] sm:$0xff]
  %2038 = vrot.lane.b32.xlu0 %v2022, 96
  %v2039 = vpop.permute.xlu0 %2038
  %v2040 = vsel %vm344, %v2039, 0
  %2042 = vmatprep.subr.mxu0 0.0
  %2043 = vmatpush1.msra.mxu0 %v2033
  %2044 = vmatprep.subr.mxu0 0.0
  %2045 = vmatpush1.msra.mxu0 %v2034
  %2046 = vmatprep.subr.mxu0 0.0
  %2047 = vmatpush1.msra.mxu0 %v2035
  %2048 = vmatprep.subr.mxu0 0.0
  %2049 = vmatpush1.msra.mxu0 %v2036
  %2050 = vmatprep.subr.mxu0 0.0
  %2051 = vmatpush1.msra.mxu0 0.0
  %2052 = vmatprep.subr.mxu0 0.0
  %2053 = vmatpush1.msra.mxu0 0.0
  %2054 = vmatprep.subr.mxu0 0.0
  %2055 = vmatpush1.msra.mxu0 0.0
  %2056 = vmatprep.subr.mxu0 0.0
  %2057 = vmatpush1.msra.mxu0 0.0
  %2058 = vmatprep.subr.mxu0 0.0
  %2059 = vmatpush1.msra.mxu0 0.0
  %2060 = vmatprep.subr.mxu0 0.0
  %2061 = vmatpush1.msra.mxu0 0.0
  %2062 = vmatprep.subr.mxu0 0.0
  %2063 = vmatpush1.msra.mxu0 0.0
  %2064 = vmatprep.subr.mxu0 0.0
  %2065 = vmatpush1.msra.mxu0 0.0
  %2066 = vmatprep.subr.mxu0 0.0
  %2067 = vmatpush1.msra.mxu0 0.0
  %2068 = vmatprep.subr.mxu0 0.0
  %2069 = vmatpush1.msra.mxu0 0.0
  %2070 = vmatprep.subr.mxu0 0.0
  %2071 = vmatpush1.msra.mxu0 0.0
  %2072 = vmatprep.subr.mxu0 0.0
  %2073 = vmatpush1.msra.mxu0 0.0
  %2074 = vmatprep.subr.mxu0 0.0
  %2075 = vmatpush1.msra.mxu0 0.0
  %2076 = vmatprep.subr.mxu0 0.0
  %2077 = vmatpush1.msra.mxu0 0.0
  %2078 = vmatprep.subr.mxu0 0.0
  %2079 = vmatpush1.msra.mxu0 0.0
  %2080 = vmatprep.subr.mxu0 0.0
  %2081 = vmatpush1.msra.mxu0 0.0
  %2082 = vmatprep.subr.mxu0 0.0
  %2083 = vmatpush1.msra.mxu0 0.0
  %2084 = vmatprep.subr.mxu0 0.0
  %2085 = vmatpush1.msra.mxu0 0.0
  %2086 = vmatprep.subr.mxu0 0.0
  %2087 = vmatpush1.msra.mxu0 0.0
  %2088 = vmatprep.subr.mxu0 0.0
  %2089 = vmatpush1.msra.mxu0 0.0
  %2090 = vmatprep.subr.mxu0 0.0
  %2091 = vmatpush1.msra.mxu0 0.0
  %2092 = vmatprep.subr.mxu0 0.0
  %2093 = vmatpush1.msra.mxu0 0.0
  %2094 = vmatprep.subr.mxu0 0.0
  %2095 = vmatpush1.msra.mxu0 0.0
  %2096 = vmatprep.subr.mxu0 0.0
  %2097 = vmatpush1.msra.mxu0 0.0
  %2098 = vmatprep.subr.mxu0 0.0
  %2099 = vmatpush1.msra.mxu0 0.0
  %2100 = vmatprep.subr.mxu0 0.0
  %2101 = vmatpush1.msra.mxu0 0.0
  %2102 = vmatprep.subr.mxu0 0.0
  %2103 = vmatpush1.msra.mxu0 0.0
  %2104 = vmatprep.subr.mxu0 0.0
  %2105 = vmatpush1.msra.mxu0 0.0
  %2106 = vmatprep.mubr.f32.mxu0 0.0
  %2107 = vmatmul.mubr.f32.gmra.mrb[0].mxu0 %v2040
  %v2108 = vpop.f32.mrb[0].mxu0
  %v2109 = vadd.f32 0.0, %v2108
  %v2110 = vpop.f32.mrb[0].mxu0
  %2111 = vdwg.mxu0
  %v2112 = vsel %vm344, %v2025, 0
  %2114 = vmatprep.subr.mxu0 0.0
  %2115 = vmatpush1.msra.mxu0 %v2029
  %2116 = vmatprep.subr.mxu0 0.0
  %2117 = vmatpush1.msra.mxu0 %v2030
  %2118 = vmatprep.subr.mxu0 0.0
  %2119 = vmatpush1.msra.mxu0 %v2031
  %2120 = vmatprep.subr.mxu0 0.0
  %2121 = vmatpush1.msra.mxu0 %v2032
  %2122 = vmatprep.subr.mxu0 0.0
  %2123 = vmatpush1.msra.mxu0 0.0
  %2124 = vmatprep.subr.mxu0 0.0
  %2125 = vmatpush1.msra.mxu0 0.0
  %2126 = vmatprep.subr.mxu0 0.0
  %2127 = vmatpush1.msra.mxu0 0.0
  %2128 = vmatprep.subr.mxu0 0.0
  %2129 = vmatpush1.msra.mxu0 0.0
  %2130 = vmatprep.subr.mxu0 0.0
  %2131 = vmatpush1.msra.mxu0 0.0
  %2132 = vmatprep.subr.mxu0 0.0
  %2133 = vmatpush1.msra.mxu0 0.0
  %2134 = vmatprep.subr.mxu0 0.0
  %2135 = vmatpush1.msra.mxu0 0.0
  %2136 = vmatprep.subr.mxu0 0.0
  %2137 = vmatpush1.msra.mxu0 0.0
  %2138 = vmatprep.subr.mxu0 0.0
  %2139 = vmatpush1.msra.mxu0 0.0
  %2140 = vmatprep.subr.mxu0 0.0
  %2141 = vmatpush1.msra.mxu0 0.0
  %2142 = vmatprep.subr.mxu0 0.0
  %2143 = vmatpush1.msra.mxu0 0.0
  %2144 = vmatprep.subr.mxu0 0.0
  %2145 = vmatpush1.msra.mxu0 0.0
  %2146 = vmatprep.subr.mxu0 0.0
  %2147 = vmatpush1.msra.mxu0 0.0
  %2148 = vmatprep.subr.mxu0 0.0
  %2149 = vmatpush1.msra.mxu0 0.0
  %2150 = vmatprep.subr.mxu0 0.0
  %2151 = vmatpush1.msra.mxu0 0.0
  %2152 = vmatprep.subr.mxu0 0.0
  %2153 = vmatpush1.msra.mxu0 0.0
  %2154 = vmatprep.subr.mxu0 0.0
  %2155 = vmatpush1.msra.mxu0 0.0
  %2156 = vmatprep.subr.mxu0 0.0
  %2157 = vmatpush1.msra.mxu0 0.0
  %2158 = vmatprep.subr.mxu0 0.0
  %2159 = vmatpush1.msra.mxu0 0.0
  %2160 = vmatprep.subr.mxu0 0.0
  %2161 = vmatpush1.msra.mxu0 0.0
  %2162 = vmatprep.subr.mxu0 0.0
  %2163 = vmatpush1.msra.mxu0 0.0
  %2164 = vmatprep.subr.mxu0 0.0
  %2165 = vmatpush1.msra.mxu0 0.0
  %2166 = vmatprep.subr.mxu0 0.0
  %2167 = vmatpush1.msra.mxu0 0.0
  %2168 = vmatprep.subr.mxu0 0.0
  %2169 = vmatpush1.msra.mxu0 0.0
  %2170 = vmatprep.subr.mxu0 0.0
  %2171 = vmatpush1.msra.mxu0 0.0
  %2172 = vmatprep.subr.mxu0 0.0
  %2173 = vmatpush1.msra.mxu0 0.0
  %2174 = vmatprep.subr.mxu0 0.0
  %2175 = vmatpush1.msra.mxu0 0.0
  %2176 = vmatprep.subr.mxu0 0.0
  %2177 = vmatpush1.msra.mxu0 0.0
  %2178 = vmatprep.mubr.f32.mxu0 0.0
  %2179 = vmatmul.mubr.f32.gmra.mrb[0].mxu0 %v2112
  %v2180 = vpop.f32.mrb[0].mxu0
  %v2181 = vadd.f32 %v2109, %v2180
  %v2182 = vpop.f32.mrb[0].mxu0
  %2183 = vdwg.mxu0
  %v2184 = vld [vmem:[%s11] sm:$0x1]
  %v2186 = vlaneseq
  %v2187 = vshrl.u32 %v2186, 7
  %v2188 = vsub.s32 0, %v2187
  %v2189 = vrot.slane %v2184, %v2188
  %v2191 = vadd.f32 %v2181, %v2189
  %v2192 = vtanh.pop %v2191
  %2193 = vst.msk [vmem:[%s13] sm:$0xff] %vm344, %v2192
  // Predicated region
  $region50: #{encoder_bigru_forward.3} parent=0 // pred_check
    _
  $region51: #{encoder_bigru_forward.3} parent=0 // pred_check_branch
    %2195 = sbr.rel (0) target = $region53
  $region52: #{encoder_bigru_forward.3} parent=0 // pred_region
    _
  $region53: #{encoder_bigru_forward.3} parent=0 // pred_fallthru
    _
  // Predicated region
  $region54: #{encoder_bigru_forward.3} parent=0 // pred_check
    _
  $region55: #{encoder_bigru_forward.3} parent=0 // pred_check_branch
    %2197 = sbr.rel (0) target = $region57
  $region56: #{encoder_bigru_forward.3} parent=0 // pred_region
    _
  $region57: #{encoder_bigru_forward.3} parent=0 // pred_fallthru
    _
  // Predicated region
  $region58: #{encoder_bigru_forward.3} parent=0 // pred_check
    _
  $region59: #{encoder_bigru_forward.3} parent=0 // pred_check_branch
    %2199 = sbr.rel (0) target = $region61
  $region60: #{encoder_bigru_forward.3} parent=0 // pred_region
    _
  $region61: #{encoder_bigru_forward.3} parent=0 // pred_fallthru
    _
  // Predicated region
  $region62: #{encoder_bigru_forward.3} parent=0 // pred_check
    _
  $region63: #{encoder_bigru_forward.3} parent=0 // pred_check_branch
    %2201 = sbr.rel (0) target = $region65
  $region64: #{encoder_bigru_forward.3} parent=0 // pred_region
    _
  $region65: #{encoder_bigru_forward.3} parent=0 // pred_fallthru
    _

// kernel: encoder_bigru_forward.2
$region0: #{encoder_bigru_forward.2}
  #allocation0 [shape = 'u32[]', space=smem, size = 0x4, offset = 0x4, fixed_abs, tag = 'smem constant byte address 0x4 - core index']
  #allocation1 [shape = 'u32[144,128]{1,0:T(1,128)}', space=vmem, size = 0x12000, scoped, tag = 'internal scratch']
  #allocation2 [shape = 'f32[64,96]{1,0:T(8,128)}', space=vmem, size = 0x8000, scoped, tag = 'scratch operand']
  #allocation3 [shape = 'f32[64,96]{1,0:T(8,128)}', space=vmem, size = 0x8000, scoped, tag = 'scratch operand']
  %s0 = inlined_call_operand.vmem [shape: f32[64,16], index: 0, kind: input, shape index: {}]
  %s1 = inlined_call_operand.vmem [shape: f32[16,96], index: 1, kind: input, shape index: {}]
  %s2 = inlined_call_operand.vmem [shape: f32[16,96], index: 2, kind: input, shape index: {}]
  %s3 = inlined_call_operand.vmem [shape: f32[1,96], index: 3, kind: input, shape index: {}]
  %s4 = inlined_call_operand.vmem [shape: f32[1,96], index: 4, kind: input, shape index: {}]
  %s5 = inlined_call_operand.vmem [shape: f32[32,96], index: 5, kind: input, shape index: {}]
  %s6 = inlined_call_operand.vmem [shape: f32[32,96], index: 6, kind: input, shape index: {}]
  %s7 = inlined_call_operand.vmem [shape: f32[1,32], index: 7, kind: input, shape index: {}]
  %s8 = inlined_call_operand.vmem [shape: f32[1,32], index: 8, kind: input, shape index: {}]
  %s9 = inlined_call_operand.vmem [shape: f32[64,64], index: 9, kind: output, shape index: {}]
  %s10 = sld [smem:[#allocation0]]
  $region46: #{encoder_bigru_forward.2} parent=0
    _
  %s12 = ssub.s32 1, %s10
  %s13 = scalar_select 0, %s12, %s10
  // Predicated region
  $region2: #{encoder_bigru_forward.2} parent=0 // pred_check
    _
  $region3: #{encoder_bigru_forward.2} parent=0 // pred_check_branch
    %15 = sbr.rel (0) target = $region5
  $region4: #{encoder_bigru_forward.2} parent=0 // pred_region
    _
  $region5: #{encoder_bigru_forward.2} parent=0 // pred_fallthru
    _
  // Predicated region
  $region6: #{encoder_bigru_forward.2} parent=0 // pred_check
    _
  $region7: #{encoder_bigru_forward.2} parent=0 // pred_check_branch
    %17 = sbr.rel (0) target = $region9
  $region8: #{encoder_bigru_forward.2} parent=0 // pred_region
    _
  $region9: #{encoder_bigru_forward.2} parent=0 // pred_fallthru
    _
  // Predicated region
  $region10: #{encoder_bigru_forward.2} parent=0 // pred_check
    _
  $region11: #{encoder_bigru_forward.2} parent=0 // pred_check_branch
    %19 = sbr.rel (0) target = $region13
  $region12: #{encoder_bigru_forward.2} parent=0 // pred_region
    _
  $region13: #{encoder_bigru_forward.2} parent=0 // pred_fallthru
    _
  // Predicated region
  $region14: #{encoder_bigru_forward.2} parent=0 // pred_check
    _
  $region15: #{encoder_bigru_forward.2} parent=0 // pred_check_branch
    %21 = sbr.rel (0) target = $region17
  $region16: #{encoder_bigru_forward.2} parent=0 // pred_region
    _
  $region17: #{encoder_bigru_forward.2} parent=0 // pred_fallthru
    _
  // Predicated region
  $region18: #{encoder_bigru_forward.2} parent=0 // pred_check
    _
  $region19: #{encoder_bigru_forward.2} parent=0 // pred_check_branch
    %23 = sbr.rel (0) target = $region21
  $region20: #{encoder_bigru_forward.2} parent=0 // pred_region
    _
  $region21: #{encoder_bigru_forward.2} parent=0 // pred_fallthru
    _
  // Predicated region
  $region22: #{encoder_bigru_forward.2} parent=0 // pred_check
    _
  $region23: #{encoder_bigru_forward.2} parent=0 // pred_check_branch
    %25 = sbr.rel (0) target = $region25
  $region24: #{encoder_bigru_forward.2} parent=0 // pred_region
    _
  $region25: #{encoder_bigru_forward.2} parent=0 // pred_fallthru
    _
  // Predicated region
  $region26: #{encoder_bigru_forward.2} parent=0 // pred_check
    _
  $region27: #{encoder_bigru_forward.2} parent=0 // pred_check_branch
    %27 = sbr.rel (0) target = $region29
  $region28: #{encoder_bigru_forward.2} parent=0 // pred_region
    _
  $region29: #{encoder_bigru_forward.2} parent=0 // pred_fallthru
    _
  // Predicated region
  $region30: #{encoder_bigru_forward.2} parent=0 // pred_check
    _
  $region31: #{encoder_bigru_forward.2} parent=0 // pred_check_branch
    %29 = sbr.rel (0) target = $region33
  $region32: #{encoder_bigru_forward.2} parent=0 // pred_region
    _
  $region33: #{encoder_bigru_forward.2} parent=0 // pred_fallthru
    _
  // Predicated region
  $region34: #{encoder_bigru_forward.2} parent=0 // pred_check
    _
  $region35: #{encoder_bigru_forward.2} parent=0 // pred_check_branch
    %31 = sbr.rel (0) target = $region37
  $region36: #{encoder_bigru_forward.2} parent=0 // pred_region
    _
  $region37: #{encoder_bigru_forward.2} parent=0 // pred_fallthru
    _
  %v32 = vld [vmem:[%s0] sm:$0xff]
  %v33 = vld [vmem:[%s0 + $0x8] sm:$0xff]
  %v34 = vld [vmem:[%s0 + $0x10] sm:$0xff]
  %v35 = vld [vmem:[%s0 + $0x18] sm:$0xff]
  %v36 = vld [vmem:[%s0 + $0x20] sm:$0xff]
  %v37 = vld [vmem:[%s0 + $0x28] sm:$0xff]
  %v38 = vld [vmem:[%s0 + $0x30] sm:$0xff]
  %v39 = vld [vmem:[%s0 + $0x38] sm:$0xff]
  %v40 = vld [vmem:[%s1] sm:$0xff]
  %v41 = vld [vmem:[%s1 + $0x8] sm:$0xff]
  %v42 = vld [vmem:[%s3] sm:$0x1]
  %v44 = vlaneseq
  %v45 = vshrl.u32 %v44, 7
  %v46 = vsub.s32 0, %v45
  %v47 = vrot.slane %v42, %v46
  %vm49 = vcmask 130048
  %v51 = vsel %vm49, %v32, 0
  %v54 = vsel %vm49, %v33, 0
  %v57 = vsel %vm49, %v34, 0
  %v60 = vsel %vm49, %v35, 0
  %v63 = vsel %vm49, %v36, 0
  %v66 = vsel %vm49, %v37, 0
  %v69 = vsel %vm49, %v38, 0
  %v72 = vsel %vm49, %v39, 0
  %74 = vmatprep.subr.mxu0 0.0
  %75 = vmatpush1.msra.mxu0 %v40
  %76 = vmatprep.subr.mxu0 0.0
  %77 = vmatpush1.msra.mxu0 %v41
  %78 = vmatprep.subr.mxu0 0.0
  %79 = vmatpush1.msra.mxu0 0.0
  %80 = vmatprep.subr.mxu0 0.0
  %81 = vmatpush1.msra.mxu0 0.0
  %82 = vmatprep.subr.mxu0 0.0
  %83 = vmatpush1.msra.mxu0 0.0
  %84 = vmatprep.subr.mxu0 0.0
  %85 = vmatpush1.msra.mxu0 0.0
  %86 = vmatprep.subr.mxu0 0.0
  %87 = vmatpush1.msra.mxu0 0.0
  %88 = vmatprep.subr.mxu0 0.0
  %89 = vmatpush1.msra.mxu0 0.0
  %90 = vmatprep.subr.mxu0 0.0
  %91 = vmatpush1.msra.mxu0 0.0
  %92 = vmatprep.subr.mxu0 0.0
  %93 = vmatpush1.msra.mxu0 0.0
  %94 = vmatprep.subr.mxu0 0.0
  %95 = vmatpush1.msra.mxu0 0.0
  %96 = vmatprep.subr.mxu0 0.0
  %97 = vmatpush1.msra.mxu0 0.0
  %98 = vmatprep.subr.mxu0 0.0
  %99 = vmatpush1.msra.mxu0 0.0
  %100 = vmatprep.subr.mxu0 0.0
  %101 = vmatpush1.msra.mxu0 0.0
  %102 = vmatprep.subr.mxu0 0.0
  %103 = vmatpush1.msra.mxu0 0.0
  %104 = vmatprep.subr.mxu0 0.0
  %105 = vmatpush1.msra.mxu0 0.0
  %106 = vmatprep.subr.mxu0 0.0
  %107 = vmatpush1.msra.mxu0 0.0
  %108 = vmatprep.subr.mxu0 0.0
  %109 = vmatpush1.msra.mxu0 0.0
  %110 = vmatprep.subr.mxu0 0.0
  %111 = vmatpush1.msra.mxu0 0.0
  %112 = vmatprep.subr.mxu0 0.0
  %113 = vmatpush1.msra.mxu0 0.0
  %114 = vmatprep.subr.mxu0 0.0
  %115 = vmatpush1.msra.mxu0 0.0
  %116 = vmatprep.subr.mxu0 0.0
  %117 = vmatpush1.msra.mxu0 0.0
  %118 = vmatprep.subr.mxu0 0.0
  %119 = vmatpush1.msra.mxu0 0.0
  %120 = vmatprep.subr.mxu0 0.0
  %121 = vmatpush1.msra.mxu0 0.0
  %122 = vmatprep.subr.mxu0 0.0
  %123 = vmatpush1.msra.mxu0 0.0
  %124 = vmatprep.subr.mxu0 0.0
  %125 = vmatpush1.msra.mxu0 0.0
  %126 = vmatprep.subr.mxu0 0.0
  %127 = vmatpush1.msra.mxu0 0.0
  %128 = vmatprep.subr.mxu0 0.0
  %129 = vmatpush1.msra.mxu0 0.0
  %130 = vmatprep.subr.mxu0 0.0
  %131 = vmatpush1.msra.mxu0 0.0
  %132 = vmatprep.subr.mxu0 0.0
  %133 = vmatpush1.msra.mxu0 0.0
  %134 = vmatprep.subr.mxu0 0.0
  %135 = vmatpush1.msra.mxu0 0.0
  %136 = vmatprep.subr.mxu0 0.0
  %137 = vmatpush1.msra.mxu0 0.0
  %138 = vmatprep.mubr.f32.mxu0 0.0
  %139 = vmatmul.mubr.f32.gmra.mrb[0].mxu0 %v51
  %v140 = vpop.f32.mrb[0].mxu0
  %v141 = vadd.f32 %v47, %v140
  %v142 = vpop.f32.mrb[0].mxu0
  %143 = vmatprep.mubr.f32.mxu0 0.0
  %144 = vmatmul.mubr.f32.gmra.mrb[0].mxu0 %v54
  %v145 = vpop.f32.mrb[0].mxu0
  %v146 = vadd.f32 %v47, %v145
  %v147 = vpop.f32.mrb[0].mxu0
  %148 = vmatprep.mubr.f32.mxu0 0.0
  %149 = vmatmul.mubr.f32.gmra.mrb[0].mxu0 %v57
  %v150 = vpop.f32.mrb[0].mxu0
  %v151 = vadd.f32 %v47, %v150
  %v152 = vpop.f32.mrb[0].mxu0
  %153 = vmatprep.mubr.f32.mxu0 0.0
  %154 = vmatmul.mubr.f32.gmra.mrb[0].mxu0 %v60
  %v155 = vpop.f32.mrb[0].mxu0
  %v156 = vadd.f32 %v47, %v155
  %v157 = vpop.f32.mrb[0].mxu0
  %158 = vmatprep.mubr.f32.mxu0 0.0
  %159 = vmatmul.mubr.f32.gmra.mrb[0].mxu0 %v63
  %v160 = vpop.f32.mrb[0].mxu0
  %v161 = vadd.f32 %v47, %v160
  %v162 = vpop.f32.mrb[0].mxu0
  %163 = vmatprep.mubr.f32.mxu0 0.0
  %164 = vmatmul.mubr.f32.gmra.mrb[0].mxu0 %v66
  %v165 = vpop.f32.mrb[0].mxu0
  %v166 = vadd.f32 %v47, %v165
  %v167 = vpop.f32.mrb[0].mxu0
  %168 = vmatprep.mubr.f32.mxu0 0.0
  %169 = vmatmul.mubr.f32.gmra.mrb[0].mxu0 %v69
  %v170 = vpop.f32.mrb[0].mxu0
  %v171 = vadd.f32 %v47, %v170
  %v172 = vpop.f32.mrb[0].mxu0
  %173 = vmatprep.mubr.f32.mxu0 0.0
  %174 = vmatmul.mubr.f32.gmra.mrb[0].mxu0 %v72
  %v175 = vpop.f32.mrb[0].mxu0
  %v176 = vadd.f32 %v47, %v175
  %v177 = vpop.f32.mrb[0].mxu0
  %178 = vdwg.mxu0
  %vm179 = vcmask 785408
  %180 = vst.msk [vmem:[#allocation2] sm:$0xff] %vm179, %v141
  %181 = vst.msk [vmem:[#allocation2 + $0x8] sm:$0xff] %vm179, %v146
  %182 = vst.msk [vmem:[#allocation2 + $0x10] sm:$0xff] %vm179, %v151
  %183 = vst.msk [vmem:[#allocation2 + $0x18] sm:$0xff] %vm179, %v156
  %184 = vst.msk [vmem:[#allocation2 + $0x20] sm:$0xff] %vm179, %v161
  %185 = vst.msk [vmem:[#allocation2 + $0x28] sm:$0xff] %vm179, %v166
  %186 = vst.msk [vmem:[#allocation2 + $0x30] sm:$0xff] %vm179, %v171
  %187 = vst.msk [vmem:[#allocation2 + $0x38] sm:$0xff] %vm179, %v176
  %v188 = vld [vmem:[%s2] sm:$0xff]
  %v189 = vld [vmem:[%s2 + $0x8] sm:$0xff]
  %v190 = vld [vmem:[%s4] sm:$0x1]
  %v192 = vlaneseq
  %v193 = vshrl.u32 %v192, 7
  %v194 = vsub.s32 0, %v193
  %v195 = vrot.slane %v190, %v194
  %197 = vmatprep.subr.mxu0 0.0
  %198 = vmatpush1.msra.mxu0 %v188
  %199 = vmatprep.subr.mxu0 0.0
  %200 = vmatpush1.msra.mxu0 %v189
  %201 = vmatprep.subr.mxu0 0.0
  %202 = vmatpush1.msra.mxu0 0.0
  %203 = vmatprep.subr.mxu0 0.0
  %204 = vmatpush1.msra.mxu0 0.0
  %205 = vmatprep.subr.mxu0 0.0
  %206 = vmatpush1.msra.mxu0 0.0
  %207 = vmatprep.subr.mxu0 0.0
  %208 = vmatpush1.msra.mxu0 0.0
  %209 = vmatprep.subr.mxu0 0.0
  %210 = vmatpush1.msra.mxu0 0.0
  %211 = vmatprep.subr.mxu0 0.0
  %212 = vmatpush1.msra.mxu0 0.0
  %213 = vmatprep.subr.mxu0 0.0
  %214 = vmatpush1.msra.mxu0 0.0
  %215 = vmatprep.subr.mxu0 0.0
  %216 = vmatpush1.msra.mxu0 0.0
  %217 = vmatprep.subr.mxu0 0.0
  %218 = vmatpush1.msra.mxu0 0.0
  %219 = vmatprep.subr.mxu0 0.0
  %220 = vmatpush1.msra.mxu0 0.0
  %221 = vmatprep.subr.mxu0 0.0
  %222 = vmatpush1.msra.mxu0 0.0
  %223 = vmatprep.subr.mxu0 0.0
  %224 = vmatpush1.msra.mxu0 0.0
  %225 = vmatprep.subr.mxu0 0.0
  %226 = vmatpush1.msra.mxu0 0.0
  %227 = vmatprep.subr.mxu0 0.0
  %228 = vmatpush1.msra.mxu0 0.0
  %229 = vmatprep.subr.mxu0 0.0
  %230 = vmatpush1.msra.mxu0 0.0
  %231 = vmatprep.subr.mxu0 0.0
  %232 = vmatpush1.msra.mxu0 0.0
  %233 = vmatprep.subr.mxu0 0.0
  %234 = vmatpush1.msra.mxu0 0.0
  %235 = vmatprep.subr.mxu0 0.0
  %236 = vmatpush1.msra.mxu0 0.0
  %237 = vmatprep.subr.mxu0 0.0
  %238 = vmatpush1.msra.mxu0 0.0
  %239 = vmatprep.subr.mxu0 0.0
  %240 = vmatpush1.msra.mxu0 0.0
  %241 = vmatprep.subr.mxu0 0.0
  %242 = vmatpush1.msra.mxu0 0.0
  %243 = vmatprep.subr.mxu0 0.0
  %244 = vmatpush1.msra.mxu0 0.0
  %245 = vmatprep.subr.mxu0 0.0
  %246 = vmatpush1.msra.mxu0 0.0
  %247 = vmatprep.subr.mxu0 0.0
  %248 = vmatpush1.msra.mxu0 0.0
  %249 = vmatprep.subr.mxu0 0.0
  %250 = vmatpush1.msra.mxu0 0.0
  %251 = vmatprep.subr.mxu0 0.0
  %252 = vmatpush1.msra.mxu0 0.0
  %253 = vmatprep.subr.mxu0 0.0
  %254 = vmatpush1.msra.mxu0 0.0
  %255 = vmatprep.subr.mxu0 0.0
  %256 = vmatpush1.msra.mxu0 0.0
  %257 = vmatprep.subr.mxu0 0.0
  %258 = vmatpush1.msra.mxu0 0.0
  %259 = vmatprep.subr.mxu0 0.0
  %260 = vmatpush1.msra.mxu0 0.0
  %261 = vmatprep.mubr.f32.mxu0 0.0
  %262 = vmatmul.mubr.f32.gmra.mrb[0].mxu0 %v51
  %v263 = vpop.f32.mrb[0].mxu0
  %v264 = vadd.f32 %v195, %v263
  %v265 = vpop.f32.mrb[0].mxu0
  %266 = vmatprep.mubr.f32.mxu0 0.0
  %267 = vmatmul.mubr.f32.gmra.mrb[0].mxu0 %v54
  %v268 = vpop.f32.mrb[0].mxu0
  %v269 = vadd.f32 %v195, %v268
  %v270 = vpop.f32.mrb[0].mxu0
  %271 = vmatprep.mubr.f32.mxu0 0.0
  %272 = vmatmul.mubr.f32.gmra.mrb[0].mxu0 %v57
  %v273 = vpop.f32.mrb[0].mxu0
  %v274 = vadd.f32 %v195, %v273
  %v275 = vpop.f32.mrb[0].mxu0
  %276 = vmatprep.mubr.f32.mxu0 0.0
  %277 = vmatmul.mubr.f32.gmra.mrb[0].mxu0 %v60
  %v278 = vpop.f32.mrb[0].mxu0
  %v279 = vadd.f32 %v195, %v278
  %v280 = vpop.f32.mrb[0].mxu0
  %281 = vmatprep.mubr.f32.mxu0 0.0
  %282 = vmatmul.mubr.f32.gmra.mrb[0].mxu0 %v63
  %v283 = vpop.f32.mrb[0].mxu0
  %v284 = vadd.f32 %v195, %v283
  %v285 = vpop.f32.mrb[0].mxu0
  %286 = vmatprep.mubr.f32.mxu0 0.0
  %287 = vmatmul.mubr.f32.gmra.mrb[0].mxu0 %v66
  %v288 = vpop.f32.mrb[0].mxu0
  %v289 = vadd.f32 %v195, %v288
  %v290 = vpop.f32.mrb[0].mxu0
  %291 = vmatprep.mubr.f32.mxu0 0.0
  %292 = vmatmul.mubr.f32.gmra.mrb[0].mxu0 %v69
  %v293 = vpop.f32.mrb[0].mxu0
  %v294 = vadd.f32 %v195, %v293
  %v295 = vpop.f32.mrb[0].mxu0
  %296 = vmatprep.mubr.f32.mxu0 0.0
  %297 = vmatmul.mubr.f32.gmra.mrb[0].mxu0 %v72
  %v298 = vpop.f32.mrb[0].mxu0
  %v299 = vadd.f32 %v195, %v298
  %v300 = vpop.f32.mrb[0].mxu0
  %301 = vdwg.mxu0
  %302 = vst.msk [vmem:[#allocation3] sm:$0xff] %vm179, %v264
  %303 = vst.msk [vmem:[#allocation3 + $0x8] sm:$0xff] %vm179, %v269
  %304 = vst.msk [vmem:[#allocation3 + $0x10] sm:$0xff] %vm179, %v274
  %305 = vst.msk [vmem:[#allocation3 + $0x18] sm:$0xff] %vm179, %v279
  %306 = vst.msk [vmem:[#allocation3 + $0x20] sm:$0xff] %vm179, %v284
  %307 = vst.msk [vmem:[#allocation3 + $0x28] sm:$0xff] %vm179, %v289
  %308 = vst.msk [vmem:[#allocation3 + $0x30] sm:$0xff] %vm179, %v294
  %309 = vst.msk [vmem:[#allocation3 + $0x38] sm:$0xff] %vm179, %v299
  %v310 = vld [vmem:[%s5] sm:$0xff]
  %v311 = vld [vmem:[%s5 + $0x8] sm:$0xff]
  %v312 = vld [vmem:[%s5 + $0x10] sm:$0xff]
  %v313 = vld [vmem:[%s5 + $0x18] sm:$0xff]
  %v314 = vld [vmem:[%s6] sm:$0xff]
  %v315 = vld [vmem:[%s6 + $0x8] sm:$0xff]
  %v316 = vld [vmem:[%s6 + $0x10] sm:$0xff]
  %v317 = vld [vmem:[%s6 + $0x18] sm:$0xff]
  %v318 = vld [vmem:[%s7] sm:$0x1]
  %v319 = vld [vmem:[%s8] sm:$0x1]
  %v320 = vld [vmem:[#allocation2] sm:$0xff]
  %vm321 = vcmask 261120
  %v323 = vsel %vm321, 0.0, 0
  %325 = vmatprep.subr.mxu0 0.0
  %326 = vmatpush1.msra.mxu0 %v310
  %327 = vmatprep.subr.mxu0 0.0
  %328 = vmatpush1.msra.mxu0 %v311
  %329 = vmatprep.subr.mxu0 0.0
  %330 = vmatpush1.msra.mxu0 %v312
  %331 = vmatprep.subr.mxu0 0.0
  %332 = vmatpush1.msra.mxu0 %v313
  %333 = vmatprep.subr.mxu0 0.0
  %334 = vmatpush1.msra.mxu0 0.0
  %335 = vmatprep.subr.mxu0 0.0
  %336 = vmatpush1.msra.mxu0 0.0
  %337 = vmatprep.subr.mxu0 0.0
  %338 = vmatpush1.msra.mxu0 0.0
  %339 = vmatprep.subr.mxu0 0.0
  %340 = vmatpush1.msra.mxu0 0.0
  %341 = vmatprep.subr.mxu0 0.0
  %342 = vmatpush1.msra.mxu0 0.0
  %343 = vmatprep.subr.mxu0 0.0
  %344 = vmatpush1.msra.mxu0 0.0
  %345 = vmatprep.subr.mxu0 0.0
  %346 = vmatpush1.msra.mxu0 0.0
  %347 = vmatprep.subr.mxu0 0.0
  %348 = vmatpush1.msra.mxu0 0.0
  %349 = vmatprep.subr.mxu0 0.0
  %350 = vmatpush1.msra.mxu0 0.0
  %351 = vmatprep.subr.mxu0 0.0
  %352 = vmatpush1.msra.mxu0 0.0
  %353 = vmatprep.subr.mxu0 0.0
  %354 = vmatpush1.msra.mxu0 0.0
  %355 = vmatprep.subr.mxu0 0.0
  %356 = vmatpush1.msra.mxu0 0.0
  %357 = vmatprep.subr.mxu0 0.0
  %358 = vmatpush1.msra.mxu0 0.0
  %359 = vmatprep.subr.mxu0 0.0
  %360 = vmatpush1.msra.mxu0 0.0
  %361 = vmatprep.subr.mxu0 0.0
  %362 = vmatpush1.msra.mxu0 0.0
  %363 = vmatprep.subr.mxu0 0.0
  %364 = vmatpush1.msra.mxu0 0.0
  %365 = vmatprep.subr.mxu0 0.0
  %366 = vmatpush1.msra.mxu0 0.0
  %367 = vmatprep.subr.mxu0 0.0
  %368 = vmatpush1.msra.mxu0 0.0
  %369 = vmatprep.subr.mxu0 0.0
  %370 = vmatpush1.msra.mxu0 0.0
  %371 = vmatprep.subr.mxu0 0.0
  %372 = vmatpush1.msra.mxu0 0.0
  %373 = vmatprep.subr.mxu0 0.0
  %374 = vmatpush1.msra.mxu0 0.0
  %375 = vmatprep.subr.mxu0 0.0
  %376 = vmatpush1.msra.mxu0 0.0
  %377 = vmatprep.subr.mxu0 0.0
  %378 = vmatpush1.msra.mxu0 0.0
  %379 = vmatprep.subr.mxu0 0.0
  %380 = vmatpush1.msra.mxu0 0.0
  %381 = vmatprep.subr.mxu0 0.0
  %382 = vmatpush1.msra.mxu0 0.0
  %383 = vmatprep.subr.mxu0 0.0
  %384 = vmatpush1.msra.mxu0 0.0
  %385 = vmatprep.subr.mxu0 0.0
  %386 = vmatpush1.msra.mxu0 0.0
  %387 = vmatprep.subr.mxu0 0.0
  %388 = vmatpush1.msra.mxu0 0.0
  %389 = vmatprep.mubr.f32.mxu0 0.0
  %390 = vmatmul.mubr.f32.gmra.mrb[0].mxu0 %v323
  %v391 = vpop.f32.mrb[0].mxu0
  %v392 = vadd.f32 0.0, %v391
  %v393 = vpop.f32.mrb[0].mxu0
  %394 = vdwg.mxu0
  %v395 = vadd.f32 %v320, %v392
  %v396 = vxor.u32 %v395, 2147483648
  %v397 = vmul.f32 %v396, 1.442695
  %v398 = vpow.pop %v397
  %v399 = vadd.f32 %v398, 1.0
  %v400 = vrcp.pop %v399
  %v401 = vmul.f32 1.0, %v400
  %v403 = vlaneseq
  %v404 = vshrl.u32 %v403, 7
  %v405 = vsub.s32 0, %v404
  %v406 = vrot.slane %v318, %v405
  %407 = vrot.lane.b32.xlu0 %v406, 64
  %v408 = vpop.permute.xlu0 %407
  %v410 = vadd.f32 %v392, %v408
  %412 = vrot.lane.b32.xlu0 %v410, 64
  %v413 = vpop.permute.xlu0 %412
  %v415 = vmul.f32 %v401, %v413
  %417 = vrot.lane.b32.xlu0 %v415, 64
  %v418 = vpop.permute.xlu0 %417
  %v420 = vadd.f32 %v320, %v418
  %v421 = vtanh.pop %v420
  %v422 = vsub.f32 1.0, %v401
  %424 = vrot.lane.b32.xlu0 %v421, 96
  %v425 = vpop.permute.xlu0 %424
  %v427 = vmul.f32 %v422, %v425
  %v428 = vmul.f32 %v401, 0.0
  %v429 = vadd.f32 %v427, %v428
  %v430 = vld [vmem:[#allocation3 + $0x38] sm:$0xff]
  %431 = vmatprep.subr.mxu0 0.0
  %432 = vmatpush1.msra.mxu0 %v314
  %433 = vmatprep.subr.mxu0 0.0
  %434 = vmatpush1.msra.mxu0 %v315
  %435 = vmatprep.subr.mxu0 0.0
  %436 = vmatpush1.msra.mxu0 %v316
  %437 = vmatprep.subr.mxu0 0.0
  %438 = vmatpush1.msra.mxu0 %v317
  %439 = vmatprep.subr.mxu0 0.0
  %440 = vmatpush1.msra.mxu0 0.0
  %441 = vmatprep.subr.mxu0 0.0
  %442 = vmatpush1.msra.mxu0 0.0
  %443 = vmatprep.subr.mxu0 0.0
  %444 = vmatpush1.msra.mxu0 0.0
  %445 = vmatprep.subr.mxu0 0.0
  %446 = vmatpush1.msra.mxu0 0.0
  %447 = vmatprep.subr.mxu0 0.0
  %448 = vmatpush1.msra.mxu0 0.0
  %449 = vmatprep.subr.mxu0 0.0
  %450 = vmatpush1.msra.mxu0 0.0
  %451 = vmatprep.subr.mxu0 0.0
  %452 = vmatpush1.msra.mxu0 0.0
  %453 = vmatprep.subr.mxu0 0.0
  %454 = vmatpush1.msra.mxu0 0.0
  %455 = vmatprep.subr.mxu0 0.0
  %456 = vmatpush1.msra.mxu0 0.0
  %457 = vmatprep.subr.mxu0 0.0
  %458 = vmatpush1.msra.mxu0 0.0
  %459 = vmatprep.subr.mxu0 0.0
  %460 = vmatpush1.msra.mxu0 0.0
  %461 = vmatprep.subr.mxu0 0.0
  %462 = vmatpush1.msra.mxu0 0.0
  %463 = vmatprep.subr.mxu0 0.0
  %464 = vmatpush1.msra.mxu0 0.0
  %465 = vmatprep.subr.mxu0 0.0
  %466 = vmatpush1.msra.mxu0 0.0
  %467 = vmatprep.subr.mxu0 0.0
  %468 = vmatpush1.msra.mxu0 0.0
  %469 = vmatprep.subr.mxu0 0.0
  %470 = vmatpush1.msra.mxu0 0.0
  %471 = vmatprep.subr.mxu0 0.0
  %472 = vmatpush1.msra.mxu0 0.0
  %473 = vmatprep.subr.mxu0 0.0
  %474 = vmatpush1.msra.mxu0 0.0
  %475 = vmatprep.subr.mxu0 0.0
  %476 = vmatpush1.msra.mxu0 0.0
  %477 = vmatprep.subr.mxu0 0.0
  %478 = vmatpush1.msra.mxu0 0.0
  %479 = vmatprep.subr.mxu0 0.0
  %480 = vmatpush1.msra.mxu0 0.0
  %481 = vmatprep.subr.mxu0 0.0
  %482 = vmatpush1.msra.mxu0 0.0
  %483 = vmatprep.subr.mxu0 0.0
  %484 = vmatpush1.msra.mxu0 0.0
  %485 = vmatprep.subr.mxu0 0.0
  %486 = vmatpush1.msra.mxu0 0.0
  %487 = vmatprep.subr.mxu0 0.0
  %488 = vmatpush1.msra.mxu0 0.0
  %489 = vmatprep.subr.mxu0 0.0
  %490 = vmatpush1.msra.mxu0 0.0
  %491 = vmatprep.subr.mxu0 0.0
  %492 = vmatpush1.msra.mxu0 0.0
  %493 = vmatprep.subr.mxu0 0.0
  %494 = vmatpush1.msra.mxu0 0.0
  %495 = vmatprep.mubr.f32.mxu0 0.0
  %496 = vmatmul.mubr.f32.gmra.mrb[0].mxu0 %v323
  %v497 = vpop.f32.mrb[0].mxu0
  %v498 = vadd.f32 0.0, %v497
  %v499 = vpop.f32.mrb[0].mxu0
  %500 = vdwg.mxu0
  %v501 = vadd.f32 %v430, %v498
  %v502 = vxor.u32 %v501, 2147483648
  %v503 = vmul.f32 %v502, 1.442695
  %v504 = vpow.pop %v503
  %v505 = vadd.f32 %v504, 1.0
  %v506 = vrcp.pop %v505
  %v507 = vmul.f32 1.0, %v506
  %v509 = vlaneseq
  %v510 = vshrl.u32 %v509, 7
  %v511 = vsub.s32 0, %v510
  %v512 = vrot.slane %v319, %v511
  %513 = vrot.lane.b32.xlu0 %v512, 64
  %v514 = vpop.permute.xlu0 %513
  %v516 = vadd.f32 %v498, %v514
  %518 = vrot.lane.b32.xlu0 %v516, 64
  %v519 = vpop.permute.xlu0 %518
  %v521 = vmul.f32 %v507, %v519
  %523 = vrot.lane.b32.xlu0 %v521, 64
  %v524 = vpop.permute.xlu0 %523
  %v526 = vadd.f32 %v430, %v524
  %v527 = vtanh.pop %v526
  %v528 = vsub.f32 1.0, %v507
  %530 = vrot.lane.b32.xlu0 %v527, 96
  %v531 = vpop.permute.xlu0 %530
  %v533 = vmul.f32 %v528, %v531
  %v534 = vmul.f32 %v507, 0.0
  %v535 = vadd.f32 %v533, %v534
  %537 = vrot.lane.b32.xlu0 %v429, 96
  %v538 = vpop.permute.xlu0 %537
  %540 = vst.msk [vmem:[%s9] sm:$0xff] %vm321, %v538
  %vm541 = vcmask 523520
  %542 = vst.msk [vmem:[%s9 + $0x38] sm:$0xff] %vm541, %v535
  %v543 = vld [vmem:[#allocation2 + $0x8] sm:$0xff]
  %v544 = vsel %vm321, %v538, 0
  %546 = vmatprep.subr.mxu0 0.0
  %547 = vmatpush1.msra.mxu0 %v310
  %548 = vmatprep.subr.mxu0 0.0
  %549 = vmatpush1.msra.mxu0 %v311
  %550 = vmatprep.subr.mxu0 0.0
  %551 = vmatpush1.msra.mxu0 %v312
  %552 = vmatprep.subr.mxu0 0.0
  %553 = vmatpush1.msra.mxu0 %v313
  %554 = vmatprep.subr.mxu0 0.0
  %555 = vmatpush1.msra.mxu0 0.0
  %556 = vmatprep.subr.mxu0 0.0
  %557 = vmatpush1.msra.mxu0 0.0
  %558 = vmatprep.subr.mxu0 0.0
  %559 = vmatpush1.msra.mxu0 0.0
  %560 = vmatprep.subr.mxu0 0.0
  %561 = vmatpush1.msra.mxu0 0.0
  %562 = vmatprep.subr.mxu0 0.0
  %563 = vmatpush1.msra.mxu0 0.0
  %564 = vmatprep.subr.mxu0 0.0
  %565 = vmatpush1.msra.mxu0 0.0
  %566 = vmatprep.subr.mxu0 0.0
  %567 = vmatpush1.msra.mxu0 0.0
  %568 = vmatprep.subr.mxu0 0.0
  %569 = vmatpush1.msra.mxu0 0.0
  %570 = vmatprep.subr.mxu0 0.0
  %571 = vmatpush1.msra.mxu0 0.0
  %572 = vmatprep.subr.mxu0 0.0
  %573 = vmatpush1.msra.mxu0 0.0
  %574 = vmatprep.subr.mxu0 0.0
  %575 = vmatpush1.msra.mxu0 0.0
  %576 = vmatprep.subr.mxu0 0.0
  %577 = vmatpush1.msra.mxu0 0.0
  %578 = vmatprep.subr.mxu0 0.0
  %579 = vmatpush1.msra.mxu0 0.0
  %580 = vmatprep.subr.mxu0 0.0
  %581 = vmatpush1.msra.mxu0 0.0
  %582 = vmatprep.subr.mxu0 0.0
  %583 = vmatpush1.msra.mxu0 0.0
  %584 = vmatprep.subr.mxu0 0.0
  %585 = vmatpush1.msra.mxu0 0.0
  %586 = vmatprep.subr.mxu0 0.0
  %587 = vmatpush1.msra.mxu0 0.0
  %588 = vmatprep.subr.mxu0 0.0
  %589 = vmatpush1.msra.mxu0 0.0
  %590 = vmatprep.subr.mxu0 0.0
  %591 = vmatpush1.msra.mxu0 0.0
  %592 = vmatprep.subr.mxu0 0.0
  %593 = vmatpush1.msra.mxu0 0.0
  %594 = vmatprep.subr.mxu0 0.0
  %595 = vmatpush1.msra.mxu0 0.0
  %596 = vmatprep.subr.mxu0 0.0
  %597 = vmatpush1.msra.mxu0 0.0
  %598 = vmatprep.subr.mxu0 0.0
  %599 = vmatpush1.msra.mxu0 0.0
  %600 = vmatprep.subr.mxu0 0.0
  %601 = vmatpush1.msra.mxu0 0.0
  %602 = vmatprep.subr.mxu0 0.0
  %603 = vmatpush1.msra.mxu0 0.0
  %604 = vmatprep.subr.mxu0 0.0
  %605 = vmatpush1.msra.mxu0 0.0
  %606 = vmatprep.subr.mxu0 0.0
  %607 = vmatpush1.msra.mxu0 0.0
  %608 = vmatprep.subr.mxu0 0.0
  %609 = vmatpush1.msra.mxu0 0.0
  %610 = vmatprep.mubr.f32.mxu0 0.0
  %611 = vmatmul.mubr.f32.gmra.mrb[0].mxu0 %v544
  %v612 = vpop.f32.mrb[0].mxu0
  %v613 = vadd.f32 0.0, %v612
  %v614 = vpop.f32.mrb[0].mxu0
  %615 = vdwg.mxu0
  %v616 = vadd.f32 %v543, %v613
  %v617 = vxor.u32 %v616, 2147483648
  %v618 = vmul.f32 %v617, 1.442695
  %v619 = vpow.pop %v618
  %v620 = vadd.f32 %v619, 1.0
  %v621 = vrcp.pop %v620
  %v622 = vmul.f32 1.0, %v621
  %v623 = vadd.f32 %v613, %v408
  %625 = vrot.lane.b32.xlu0 %v623, 64
  %v626 = vpop.permute.xlu0 %625
  %v628 = vmul.f32 %v622, %v626
  %630 = vrot.lane.b32.xlu0 %v628, 64
  %v631 = vpop.permute.xlu0 %630
  %v633 = vadd.f32 %v543, %v631
  %v634 = vtanh.pop %v633
  %v635 = vsub.f32 1.0, %v622
  %637 = vrot.lane.b32.xlu0 %v634, 96
  %v638 = vpop.permute.xlu0 %637
  %v640 = vmul.f32 %v635, %v638
  %v641 = vmul.f32 %v622, %v429
  %v642 = vadd.f32 %v640, %v641
  %v643 = vld [vmem:[#allocation3 + $0x30] sm:$0xff]
  %645 = vrot.lane.b32.xlu0 %v535, 96
  %v646 = vpop.permute.xlu0 %645
  %v647 = vsel %vm321, %v646, 0
  %649 = vmatprep.subr.mxu0 0.0
  %650 = vmatpush1.msra.mxu0 %v314
  %651 = vmatprep.subr.mxu0 0.0
  %652 = vmatpush1.msra.mxu0 %v315
  %653 = vmatprep.subr.mxu0 0.0
  %654 = vmatpush1.msra.mxu0 %v316
  %655 = vmatprep.subr.mxu0 0.0
  %656 = vmatpush1.msra.mxu0 %v317
  %657 = vmatprep.subr.mxu0 0.0
  %658 = vmatpush1.msra.mxu0 0.0
  %659 = vmatprep.subr.mxu0 0.0
  %660 = vmatpush1.msra.mxu0 0.0
  %661 = vmatprep.subr.mxu0 0.0
  %662 = vmatpush1.msra.mxu0 0.0
  %663 = vmatprep.subr.mxu0 0.0
  %664 = vmatpush1.msra.mxu0 0.0
  %665 = vmatprep.subr.mxu0 0.0
  %666 = vmatpush1.msra.mxu0 0.0
  %667 = vmatprep.subr.mxu0 0.0
  %668 = vmatpush1.msra.mxu0 0.0
  %669 = vmatprep.subr.mxu0 0.0
  %670 = vmatpush1.msra.mxu0 0.0
  %671 = vmatprep.subr.mxu0 0.0
  %672 = vmatpush1.msra.mxu0 0.0
  %673 = vmatprep.subr.mxu0 0.0
  %674 = vmatpush1.msra.mxu0 0.0
  %675 = vmatprep.subr.mxu0 0.0
  %676 = vmatpush1.msra.mxu0 0.0
  %677 = vmatprep.subr.mxu0 0.0
  %678 = vmatpush1.msra.mxu0 0.0
  %679 = vmatprep.subr.mxu0 0.0
  %680 = vmatpush1.msra.mxu0 0.0
  %681 = vmatprep.subr.mxu0 0.0
  %682 = vmatpush1.msra.mxu0 0.0
  %683 = vmatprep.subr.mxu0 0.0
  %684 = vmatpush1.msra.mxu0 0.0
  %685 = vmatprep.subr.mxu0 0.0
  %686 = vmatpush1.msra.mxu0 0.0
  %687 = vmatprep.subr.mxu0 0.0
  %688 = vmatpush1.msra.mxu0 0.0
  %689 = vmatprep.subr.mxu0 0.0
  %690 = vmatpush1.msra.mxu0 0.0
  %691 = vmatprep.subr.mxu0 0.0
  %692 = vmatpush1.msra.mxu0 0.0
  %693 = vmatprep.subr.mxu0 0.0
  %694 = vmatpush1.msra.mxu0 0.0
  %695 = vmatprep.subr.mxu0 0.0
  %696 = vmatpush1.msra.mxu0 0.0
  %697 = vmatprep.subr.mxu0 0.0
  %698 = vmatpush1.msra.mxu0 0.0
  %699 = vmatprep.subr.mxu0 0.0
  %700 = vmatpush1.msra.mxu0 0.0
  %701 = vmatprep.subr.mxu0 0.0
  %702 = vmatpush1.msra.mxu0 0.0
  %703 = vmatprep.subr.mxu0 0.0
  %704 = vmatpush1.msra.mxu0 0.0
  %705 = vmatprep.subr.mxu0 0.0
  %706 = vmatpush1.msra.mxu0 0.0
  %707 = vmatprep.subr.mxu0 0.0
  %708 = vmatpush1.msra.mxu0 0.0
  %709 = vmatprep.subr.mxu0 0.0
  %710 = vmatpush1.msra.mxu0 0.0
  %711 = vmatprep.subr.mxu0 0.0
  %712 = vmatpush1.msra.mxu0 0.0
  %713 = vmatprep.mubr.f32.mxu0 0.0
  %714 = vmatmul.mubr.f32.gmra.mrb[0].mxu0 %v647
  %v715 = vpop.f32.mrb[0].mxu0
  %v716 = vadd.f32 0.0, %v715
  %v717 = vpop.f32.mrb[0].mxu0
  %718 = vdwg.mxu0
  %v719 = vadd.f32 %v643, %v716
  %v720 = vxor.u32 %v719, 2147483648
  %v721 = vmul.f32 %v720, 1.442695
  %v722 = vpow.pop %v721
  %v723 = vadd.f32 %v722, 1.0
  %v724 = vrcp.pop %v723
  %v725 = vmul.f32 1.0, %v724
  %v726 = vadd.f32 %v716, %v514
  %728 = vrot.lane.b32.xlu0 %v726, 64
  %v729 = vpop.permute.xlu0 %728
  %v731 = vmul.f32 %v725, %v729
  %733 = vrot.lane.b32.xlu0 %v731, 64
  %v734 = vpop.permute.xlu0 %733
  %v736 = vadd.f32 %v643, %v734
  %v737 = vtanh.pop %v736
  %v738 = vsub.f32 1.0, %v725
  %740 = vrot.lane.b32.xlu0 %v737, 96
  %v741 = vpop.permute.xlu0 %740
  %v743 = vmul.f32 %v738, %v741
  %v744 = vmul.f32 %v725, %v535
  %v745 = vadd.f32 %v743, %v744
  %747 = vrot.lane.b32.xlu0 %v642, 96
  %v748 = vpop.permute.xlu0 %747
  %750 = vst.msk [vmem:[%s9 + $0x8] sm:$0xff] %vm321, %v748
  %751 = vst.msk [vmem:[%s9 + $0x30] sm:$0xff] %vm541, %v745
  %v752 = vld [vmem:[#allocation2 + $0x10] sm:$0xff]
  %v753 = vsel %vm321, %v748, 0
  %755 = vmatprep.subr.mxu0 0.0
  %756 = vmatpush1.msra.mxu0 %v310
  %757 = vmatprep.subr.mxu0 0.0
  %758 = vmatpush1.msra.mxu0 %v311
  %759 = vmatprep.subr.mxu0 0.0
  %760 = vmatpush1.msra.mxu0 %v312
  %761 = vmatprep.subr.mxu0 0.0
  %762 = vmatpush1.msra.mxu0 %v313
  %763 = vmatprep.subr.mxu0 0.0
  %764 = vmatpush1.msra.mxu0 0.0
  %765 = vmatprep.subr.mxu0 0.0
  %766 = vmatpush1.msra.mxu0 0.0
  %767 = vmatprep.subr.mxu0 0.0
  %768 = vmatpush1.msra.mxu0 0.0
  %769 = vmatprep.subr.mxu0 0.0
  %770 = vmatpush1.msra.mxu0 0.0
  %771 = vmatprep.subr.mxu0 0.0
  %772 = vmatpush1.msra.mxu0 0.0
  %773 = vmatprep.subr.mxu0 0.0
  %774 = vmatpush1.msra.mxu0 0.0
  %775 = vmatprep.subr.mxu0 0.0
  %776 = vmatpush1.msra.mxu0 0.0
  %777 = vmatprep.subr.mxu0 0.0
  %778 = vmatpush1.msra.mxu0 0.0
  %779 = vmatprep.subr.mxu0 0.0
  %780 = vmatpush1.msra.mxu0 0.0
  %781 = vmatprep.subr.mxu0 0.0
  %782 = vmatpush1.msra.mxu0 0.0
  %783 = vmatprep.subr.mxu0 0.0
  %784 = vmatpush1.msra.mxu0 0.0
  %785 = vmatprep.subr.mxu0 0.0
  %786 = vmatpush1.msra.mxu0 0.0
  %787 = vmatprep.subr.mxu0 0.0
  %788 = vmatpush1.msra.mxu0 0.0
  %789 = vmatprep.subr.mxu0 0.0
  %790 = vmatpush1.msra.mxu0 0.0
  %791 = vmatprep.subr.mxu0 0.0
  %792 = vmatpush1.msra.mxu0 0.0
  %793 = vmatprep.subr.mxu0 0.0
  %794 = vmatpush1.msra.mxu0 0.0
  %795 = vmatprep.subr.mxu0 0.0
  %796 = vmatpush1.msra.mxu0 0.0
  %797 = vmatprep.subr.mxu0 0.0
  %798 = vmatpush1.msra.mxu0 0.0
  %799 = vmatprep.subr.mxu0 0.0
  %800 = vmatpush1.msra.mxu0 0.0
  %801 = vmatprep.subr.mxu0 0.0
  %802 = vmatpush1.msra.mxu0 0.0
  %803 = vmatprep.subr.mxu0 0.0
  %804 = vmatpush1.msra.mxu0 0.0
  %805 = vmatprep.subr.mxu0 0.0
  %806 = vmatpush1.msra.mxu0 0.0
  %807 = vmatprep.subr.mxu0 0.0
  %808 = vmatpush1.msra.mxu0 0.0
  %809 = vmatprep.subr.mxu0 0.0
  %810 = vmatpush1.msra.mxu0 0.0
  %811 = vmatprep.subr.mxu0 0.0
  %812 = vmatpush1.msra.mxu0 0.0
  %813 = vmatprep.subr.mxu0 0.0
  %814 = vmatpush1.msra.mxu0 0.0
  %815 = vmatprep.subr.mxu0 0.0
  %816 = vmatpush1.msra.mxu0 0.0
  %817 = vmatprep.subr.mxu0 0.0
  %818 = vmatpush1.msra.mxu0 0.0
  %819 = vmatprep.mubr.f32.mxu0 0.0
  %820 = vmatmul.mubr.f32.gmra.mrb[0].mxu0 %v753
  %v821 = vpop.f32.mrb[0].mxu0
  %v822 = vadd.f32 0.0, %v821
  %v823 = vpop.f32.mrb[0].mxu0
  %824 = vdwg.mxu0
  %v825 = vadd.f32 %v752, %v822
  %v826 = vxor.u32 %v825, 2147483648
  %v827 = vmul.f32 %v826, 1.442695
  %v828 = vpow.pop %v827
  %v829 = vadd.f32 %v828, 1.0
  %v830 = vrcp.pop %v829
  %v831 = vmul.f32 1.0, %v830
  %v832 = vadd.f32 %v822, %v408
  %834 = vrot.lane.b32.xlu0 %v832, 64
  %v835 = vpop.permute.xlu0 %834
  %v837 = vmul.f32 %v831, %v835
  %839 = vrot.lane.b32.xlu0 %v837, 64
  %v840 = vpop.permute.xlu0 %839
  %v842 = vadd.f32 %v752, %v840
  %v843 = vtanh.pop %v842
  %v844 = vsub.f32 1.0, %v831
  %846 = vrot.lane.b32.xlu0 %v843, 96
  %v847 = vpop.permute.xlu0 %846
  %v849 = vmul.f32 %v844, %v847
  %v850 = vmul.f32 %v831, %v642
  %v851 = vadd.f32 %v849, %v850
  %v852 = vld [vmem:[#allocation3 + $0x28] sm:$0xff]
  %854 = vrot.lane.b32.xlu0 %v745, 96
  %v855 = vpop.permute.xlu0 %854
  %v856 = vsel %vm321, %v855, 0
  %858 = vmatprep.subr.mxu0 0.0
  %859 = vmatpush1.msra.mxu0 %v314
  %860 = vmatprep.subr.mxu0 0.0
  %861 = vmatpush1.msra.mxu0 %v315
  %862 = vmatprep.subr.mxu0 0.0
  %863 = vmatpush1.msra.mxu0 %v316
  %864 = vmatprep.subr.mxu0 0.0
  %865 = vmatpush1.msra.mxu0 %v317
  %866 = vmatprep.subr.mxu0 0.0
  %867 = vmatpush1.msra.mxu0 0.0
  %868 = vmatprep.subr.mxu0 0.0
  %869 = vmatpush1.msra.mxu0 0.0
  %870 = vmatprep.subr.mxu0 0.0
  %871 = vmatpush1.msra.mxu0 0.0
  %872 = vmatprep.subr.mxu0 0.0
  %873 = vmatpush1.msra.mxu0 0.0
  %874 = vmatprep.subr.mxu0 0.0
  %875 = vmatpush1.msra.mxu0 0.0
  %876 = vmatprep.subr.mxu0 0.0
  %877 = vmatpush1.msra.mxu0 0.0
  %878 = vmatprep.subr.mxu0 0.0
  %879 = vmatpush1.msra.mxu0 0.0
  %880 = vmatprep.subr.mxu0 0.0
  %881 = vmatpush1.msra.mxu0 0.0
  %882 = vmatprep.subr.mxu0 0.0
  %883 = vmatpush1.msra.mxu0 0.0
  %884 = vmatprep.subr.mxu0 0.0
  %885 = vmatpush1.msra.mxu0 0.0
  %886 = vmatprep.subr.mxu0 0.0
  %887 = vmatpush1.msra.mxu0 0.0
  %888 = vmatprep.subr.mxu0 0.0
  %889 = vmatpush1.msra.mxu0 0.0
  %890 = vmatprep.subr.mxu0 0.0
  %891 = vmatpush1.msra.mxu0 0.0
  %892 = vmatprep.subr.mxu0 0.0
  %893 = vmatpush1.msra.mxu0 0.0
  %894 = vmatprep.subr.mxu0 0.0
  %895 = vmatpush1.msra.mxu0 0.0
  %896 = vmatprep.subr.mxu0 0.0
  %897 = vmatpush1.msra.mxu0 0.0
  %898 = vmatprep.subr.mxu0 0.0
  %899 = vmatpush1.msra.mxu0 0.0
  %900 = vmatprep.subr.mxu0 0.0
  %901 = vmatpush1.msra.mxu0 0.0
  %902 = vmatprep.subr.mxu0 0.0
  %903 = vmatpush1.msra.mxu0 0.0
  %904 = vmatprep.subr.mxu0 0.0
  %905 = vmatpush1.msra.mxu0 0.0
  %906 = vmatprep.subr.mxu0 0.0
  %907 = vmatpush1.msra.mxu0 0.0
  %908 = vmatprep.subr.mxu0 0.0
  %909 = vmatpush1.msra.mxu0 0.0
  %910 = vmatprep.subr.mxu0 0.0
  %911 = vmatpush1.msra.mxu0 0.0
  %912 = vmatprep.subr.mxu0 0.0
  %913 = vmatpush1.msra.mxu0 0.0
  %914 = vmatprep.subr.mxu0 0.0
  %915 = vmatpush1.msra.mxu0 0.0
  %916 = vmatprep.subr.mxu0 0.0
  %917 = vmatpush1.msra.mxu0 0.0
  %918 = vmatprep.subr.mxu0 0.0
  %919 = vmatpush1.msra.mxu0 0.0
  %920 = vmatprep.subr.mxu0 0.0
  %921 = vmatpush1.msra.mxu0 0.0
  %922 = vmatprep.mubr.f32.mxu0 0.0
  %923 = vmatmul.mubr.f32.gmra.mrb[0].mxu0 %v856
  %v924 = vpop.f32.mrb[0].mxu0
  %v925 = vadd.f32 0.0, %v924
  %v926 = vpop.f32.mrb[0].mxu0
  %927 = vdwg.mxu0
  %v928 = vadd.f32 %v852, %v925
  %v929 = vxor.u32 %v928, 2147483648
  %v930 = vmul.f32 %v929, 1.442695
  %v931 = vpow.pop %v930
  %v932 = vadd.f32 %v931, 1.0
  %v933 = vrcp.pop %v932
  %v934 = vmul.f32 1.0, %v933
  %v935 = vadd.f32 %v925, %v514
  %937 = vrot.lane.b32.xlu0 %v935, 64
  %v938 = vpop.permute.xlu0 %937
  %v940 = vmul.f32 %v934, %v938
  %942 = vrot.lane.b32.xlu0 %v940, 64
  %v943 = vpop.permute.xlu0 %942
  %v945 = vadd.f32 %v852, %v943
  %v946 = vtanh.pop %v945
  %v947 = vsub.f32 1.0, %v934
  %949 = vrot.lane.b32.xlu0 %v946, 96
  %v950 = vpop.permute.xlu0 %949
  %v952 = vmul.f32 %v947, %v950
  %v953 = vmul.f32 %v934, %v745
  %v954 = vadd.f32 %v952, %v953
  %956 = vrot.lane.b32.xlu0 %v851, 96
  %v957 = vpop.permute.xlu0 %956
  %959 = vst.msk [vmem:[%s9 + $0x10] sm:$0xff] %vm321, %v957
  %960 = vst.msk [vmem:[%s9 + $0x28] sm:$0xff] %vm541, %v954
  %v961 = vld [vmem:[#allocation2 + $0x18] sm:$0xff]
  %v962 = vsel %vm321, %v957, 0
  %964 = vmatprep.subr.mxu0 0.0
  %965 = vmatpush1.msra.mxu0 %v310
  %966 = vmatprep.subr.mxu0 0.0
  %967 = vmatpush1.msra.mxu0 %v311
  %968 = vmatprep.subr.mxu0 0.0
  %969 = vmatpush1.msra.mxu0 %v312
  %970 = vmatprep.subr.mxu0 0.0
  %971 = vmatpush1.msra.mxu0 %v313
  %972 = vmatprep.subr.mxu0 0.0
  %973 = vmatpush1.msra.mxu0 0.0
  %974 = vmatprep.subr.mxu0 0.0
  %975 = vmatpush1.msra.mxu0 0.0
  %976 = vmatprep.subr.mxu0 0.0
  %977 = vmatpush1.msra.mxu0 0.0
  %978 = vmatprep.subr.mxu0 0.0
  %979 = vmatpush1.msra.mxu0 0.0
  %980 = vmatprep.subr.mxu0 0.0
  %981 = vmatpush1.msra.mxu0 0.0
  %982 = vmatprep.subr.mxu0 0.0
  %983 = vmatpush1.msra.mxu0 0.0
  %984 = vmatprep.subr.mxu0 0.0
  %985 = vmatpush1.msra.mxu0 0.0
  %986 = vmatprep.subr.mxu0 0.0
  %987 = vmatpush1.msra.mxu0 0.0
  %988 = vmatprep.subr.mxu0 0.0
  %989 = vmatpush1.msra.mxu0 0.0
  %990 = vmatprep.subr.mxu0 0.0
  %991 = vmatpush1.msra.mxu0 0.0
  %992 = vmatprep.subr.mxu0 0.0
  %993 = vmatpush1.msra.mxu0 0.0
  %994 = vmatprep.subr.mxu0 0.0
  %995 = vmatpush1.msra.mxu0 0.0
  %996 = vmatprep.subr.mxu0 0.0
  %997 = vmatpush1.msra.mxu0 0.0
  %998 = vmatprep.subr.mxu0 0.0
  %999 = vmatpush1.msra.mxu0 0.0
  %1000 = vmatprep.subr.mxu0 0.0
  %1001 = vmatpush1.msra.mxu0 0.0
  %1002 = vmatprep.subr.mxu0 0.0
  %1003 = vmatpush1.msra.mxu0 0.0
  %1004 = vmatprep.subr.mxu0 0.0
  %1005 = vmatpush1.msra.mxu0 0.0
  %1006 = vmatprep.subr.mxu0 0.0
  %1007 = vmatpush1.msra.mxu0 0.0
  %1008 = vmatprep.subr.mxu0 0.0
  %1009 = vmatpush1.msra.mxu0 0.0
  %1010 = vmatprep.subr.mxu0 0.0
  %1011 = vmatpush1.msra.mxu0 0.0
  %1012 = vmatprep.subr.mxu0 0.0
  %1013 = vmatpush1.msra.mxu0 0.0
  %1014 = vmatprep.subr.mxu0 0.0
  %1015 = vmatpush1.msra.mxu0 0.0
  %1016 = vmatprep.subr.mxu0 0.0
  %1017 = vmatpush1.msra.mxu0 0.0
  %1018 = vmatprep.subr.mxu0 0.0
  %1019 = vmatpush1.msra.mxu0 0.0
  %1020 = vmatprep.subr.mxu0 0.0
  %1021 = vmatpush1.msra.mxu0 0.0
  %1022 = vmatprep.subr.mxu0 0.0
  %1023 = vmatpush1.msra.mxu0 0.0
  %1024 = vmatprep.subr.mxu0 0.0
  %1025 = vmatpush1.msra.mxu0 0.0
  %1026 = vmatprep.subr.mxu0 0.0
  %1027 = vmatpush1.msra.mxu0 0.0
  %1028 = vmatprep.mubr.f32.mxu0 0.0
  %1029 = vmatmul.mubr.f32.gmra.mrb[0].mxu0 %v962
  %v1030 = vpop.f32.mrb[0].mxu0
  %v1031 = vadd.f32 0.0, %v1030
  %v1032 = vpop.f32.mrb[0].mxu0
  %1033 = vdwg.mxu0
  %v1034 = vadd.f32 %v961, %v1031
  %v1035 = vxor.u32 %v1034, 2147483648
  %v1036 = vmul.f32 %v1035, 1.442695
  %v1037 = vpow.pop %v1036
  %v1038 = vadd.f32 %v1037, 1.0
  %v1039 = vrcp.pop %v1038
  %v1040 = vmul.f32 1.0, %v1039
  %v1041 = vadd.f32 %v1031, %v408
  %1043 = vrot.lane.b32.xlu0 %v1041, 64
  %v1044 = vpop.permute.xlu0 %1043
  %v1046 = vmul.f32 %v1040, %v1044
  %1048 = vrot.lane.b32.xlu0 %v1046, 64
  %v1049 = vpop.permute.xlu0 %1048
  %v1051 = vadd.f32 %v961, %v1049
  %v1052 = vtanh.pop %v1051
  %v1053 = vsub.f32 1.0, %v1040
  %1055 = vrot.lane.b32.xlu0 %v1052, 96
  %v1056 = vpop.permute.xlu0 %1055
  %v1058 = vmul.f32 %v1053, %v1056
  %v1059 = vmul.f32 %v1040, %v851
  %v1060 = vadd.f32 %v1058, %v1059
  %v1061 = vld [vmem:[#allocation3 + $0x20] sm:$0xff]
  %1063 = vrot.lane.b32.xlu0 %v954, 96
  %v1064 = vpop.permute.xlu0 %1063
  %v1065 = vsel %vm321, %v1064, 0
  %1067 = vmatprep.subr.mxu0 0.0
  %1068 = vmatpush1.msra.mxu0 %v314
  %1069 = vmatprep.subr.mxu0 0.0
  %1070 = vmatpush1.msra.mxu0 %v315
  %1071 = vmatprep.subr.mxu0 0.0
  %1072 = vmatpush1.msra.mxu0 %v316
  %1073 = vmatprep.subr.mxu0 0.0
  %1074 = vmatpush1.msra.mxu0 %v317
  %1075 = vmatprep.subr.mxu0 0.0
  %1076 = vmatpush1.msra.mxu0 0.0
  %1077 = vmatprep.subr.mxu0 0.0
  %1078 = vmatpush1.msra.mxu0 0.0
  %1079 = vmatprep.subr.mxu0 0.0
  %1080 = vmatpush1.msra.mxu0 0.0
  %1081 = vmatprep.subr.mxu0 0.0
  %1082 = vmatpush1.msra.mxu0 0.0
  %1083 = vmatprep.subr.mxu0 0.0
  %1084 = vmatpush1.msra.mxu0 0.0
  %1085 = vmatprep.subr.mxu0 0.0
  %1086 = vmatpush1.msra.mxu0 0.0
  %1087 = vmatprep.subr.mxu0 0.0
  %1088 = vmatpush1.msra.mxu0 0.0
  %1089 = vmatprep.subr.mxu0 0.0
  %1090 = vmatpush1.msra.mxu0 0.0
  %1091 = vmatprep.subr.mxu0 0.0
  %1092 = vmatpush1.msra.mxu0 0.0
  %1093 = vmatprep.subr.mxu0 0.0
  %1094 = vmatpush1.msra.mxu0 0.0
  %1095 = vmatprep.subr.mxu0 0.0
  %1096 = vmatpush1.msra.mxu0 0.0
  %1097 = vmatprep.subr.mxu0 0.0
  %1098 = vmatpush1.msra.mxu0 0.0
  %1099 = vmatprep.subr.mxu0 0.0
  %1100 = vmatpush1.msra.mxu0 0.0
  %1101 = vmatprep.subr.mxu0 0.0
  %1102 = vmatpush1.msra.mxu0 0.0
  %1103 = vmatprep.subr.mxu0 0.0
  %1104 = vmatpush1.msra.mxu0 0.0
  %1105 = vmatprep.subr.mxu0 0.0
  %1106 = vmatpush1.msra.mxu0 0.0
  %1107 = vmatprep.subr.mxu0 0.0
  %1108 = vmatpush1.msra.mxu0 0.0
  %1109 = vmatprep.subr.mxu0 0.0
  %1110 = vmatpush1.msra.mxu0 0.0
  %1111 = vmatprep.subr.mxu0 0.0
  %1112 = vmatpush1.msra.mxu0 0.0
  %1113 = vmatprep.subr.mxu0 0.0
  %1114 = vmatpush1.msra.mxu0 0.0
  %1115 = vmatprep.subr.mxu0 0.0
  %1116 = vmatpush1.msra.mxu0 0.0
  %1117 = vmatprep.subr.mxu0 0.0
  %1118 = vmatpush1.msra.mxu0 0.0
  %1119 = vmatprep.subr.mxu0 0.0
  %1120 = vmatpush1.msra.mxu0 0.0
  %1121 = vmatprep.subr.mxu0 0.0
  %1122 = vmatpush1.msra.mxu0 0.0
  %1123 = vmatprep.subr.mxu0 0.0
  %1124 = vmatpush1.msra.mxu0 0.0
  %1125 = vmatprep.subr.mxu0 0.0
  %1126 = vmatpush1.msra.mxu0 0.0
  %1127 = vmatprep.subr.mxu0 0.0
  %1128 = vmatpush1.msra.mxu0 0.0
  %1129 = vmatprep.subr.mxu0 0.0
  %1130 = vmatpush1.msra.mxu0 0.0
  %1131 = vmatprep.mubr.f32.mxu0 0.0
  %1132 = vmatmul.mubr.f32.gmra.mrb[0].mxu0 %v1065
  %v1133 = vpop.f32.mrb[0].mxu0
  %v1134 = vadd.f32 0.0, %v1133
  %v1135 = vpop.f32.mrb[0].mxu0
  %1136 = vdwg.mxu0
  %v1137 = vadd.f32 %v1061, %v1134
  %v1138 = vxor.u32 %v1137, 2147483648
  %v1139 = vmul.f32 %v1138, 1.442695
  %v1140 = vpow.pop %v1139
  %v1141 = vadd.f32 %v1140, 1.0
  %v1142 = vrcp.pop %v1141
  %v1143 = vmul.f32 1.0, %v1142
  %v1144 = vadd.f32 %v1134, %v514
  %1146 = vrot.lane.b32.xlu0 %v1144, 64
  %v1147 = vpop.permute.xlu0 %1146
  %v1149 = vmul.f32 %v1143, %v1147
  %1151 = vrot.lane.b32.xlu0 %v1149, 64
  %v1152 = vpop.permute.xlu0 %1151
  %v1154 = vadd.f32 %v1061, %v1152
  %v1155 = vtanh.pop %v1154
  %v1156 = vsub.f32 1.0, %v1143
  %1158 = vrot.lane.b32.xlu0 %v1155, 96
  %v1159 = vpop.permute.xlu0 %1158
  %v1161 = vmul.f32 %v1156, %v1159
  %v1162 = vmul.f32 %v1143, %v954
  %v1163 = vadd.f32 %v1161, %v1162
  %1165 = vrot.lane.b32.xlu0 %v1060, 96
  %v1166 = vpop.permute.xlu0 %1165
  %1168 = vst.msk [vmem:[%s9 + $0x18] sm:$0xff] %vm321, %v1166
  %1169 = vst.msk [vmem:[%s9 + $0x20] sm:$0xff] %vm541, %v1163
  %v1170 = vld [vmem:[#allocation2 + $0x20] sm:$0xff]
  %v1171 = vsel %vm321, %v1166, 0
  %1173 = vmatprep.subr.mxu0 0.0
  %1174 = vmatpush1.msra.mxu0 %v310
  %1175 = vmatprep.subr.mxu0 0.0
  %1176 = vmatpush1.msra.mxu0 %v311
  %1177 = vmatprep.subr.mxu0 0.0
  %1178 = vmatpush1.msra.mxu0 %v312
  %1179 = vmatprep.subr.mxu0 0.0
  %1180 = vmatpush1.msra.mxu0 %v313
  %1181 = vmatprep.subr.mxu0 0.0
  %1182 = vmatpush1.msra.mxu0 0.0
  %1183 = vmatprep.subr.mxu0 0.0
  %1184 = vmatpush1.msra.mxu0 0.0
  %1185 = vmatprep.subr.mxu0 0.0
  %1186 = vmatpush1.msra.mxu0 0.0
  %1187 = vmatprep.subr.mxu0 0.0
  %1188 = vmatpush1.msra.mxu0 0.0
  %1189 = vmatprep.subr.mxu0 0.0
  %1190 = vmatpush1.msra.mxu0 0.0
  %1191 = vmatprep.subr.mxu0 0.0
  %1192 = vmatpush1.msra.mxu0 0.0
  %1193 = vmatprep.subr.mxu0 0.0
  %1194 = vmatpush1.msra.mxu0 0.0
  %1195 = vmatprep.subr.mxu0 0.0
  %1196 = vmatpush1.msra.mxu0 0.0
  %1197 = vmatprep.subr.mxu0 0.0
  %1198 = vmatpush1.msra.mxu0 0.0
  %1199 = vmatprep.subr.mxu0 0.0
  %1200 = vmatpush1.msra.mxu0 0.0
  %1201 = vmatprep.subr.mxu0 0.0
  %1202 = vmatpush1.msra.mxu0 0.0
  %1203 = vmatprep.subr.mxu0 0.0
  %1204 = vmatpush1.msra.mxu0 0.0
  %1205 = vmatprep.subr.mxu0 0.0
  %1206 = vmatpush1.msra.mxu0 0.0
  %1207 = vmatprep.subr.mxu0 0.0
  %1208 = vmatpush1.msra.mxu0 0.0
  %1209 = vmatprep.subr.mxu0 0.0
  %1210 = vmatpush1.msra.mxu0 0.0
  %1211 = vmatprep.subr.mxu0 0.0
  %1212 = vmatpush1.msra.mxu0 0.0
  %1213 = vmatprep.subr.mxu0 0.0
  %1214 = vmatpush1.msra.mxu0 0.0
  %1215 = vmatprep.subr.mxu0 0.0
  %1216 = vmatpush1.msra.mxu0 0.0
  %1217 = vmatprep.subr.mxu0 0.0
  %1218 = vmatpush1.msra.mxu0 0.0
  %1219 = vmatprep.subr.mxu0 0.0
  %1220 = vmatpush1.msra.mxu0 0.0
  %1221 = vmatprep.subr.mxu0 0.0
  %1222 = vmatpush1.msra.mxu0 0.0
  %1223 = vmatprep.subr.mxu0 0.0
  %1224 = vmatpush1.msra.mxu0 0.0
  %1225 = vmatprep.subr.mxu0 0.0
  %1226 = vmatpush1.msra.mxu0 0.0
  %1227 = vmatprep.subr.mxu0 0.0
  %1228 = vmatpush1.msra.mxu0 0.0
  %1229 = vmatprep.subr.mxu0 0.0
  %1230 = vmatpush1.msra.mxu0 0.0
  %1231 = vmatprep.subr.mxu0 0.0
  %1232 = vmatpush1.msra.mxu0 0.0
  %1233 = vmatprep.subr.mxu0 0.0
  %1234 = vmatpush1.msra.mxu0 0.0
  %1235 = vmatprep.subr.mxu0 0.0
  %1236 = vmatpush1.msra.mxu0 0.0
  %1237 = vmatprep.mubr.f32.mxu0 0.0
  %1238 = vmatmul.mubr.f32.gmra.mrb[0].mxu0 %v1171
  %v1239 = vpop.f32.mrb[0].mxu0
  %v1240 = vadd.f32 0.0, %v1239
  %v1241 = vpop.f32.mrb[0].mxu0
  %1242 = vdwg.mxu0
  %v1243 = vadd.f32 %v1170, %v1240
  %v1244 = vxor.u32 %v1243, 2147483648
  %v1245 = vmul.f32 %v1244, 1.442695
  %v1246 = vpow.pop %v1245
  %v1247 = vadd.f32 %v1246, 1.0
  %v1248 = vrcp.pop %v1247
  %v1249 = vmul.f32 1.0, %v1248
  %v1250 = vadd.f32 %v1240, %v408
  %1252 = vrot.lane.b32.xlu0 %v1250, 64
  %v1253 = vpop.permute.xlu0 %1252
  %v1255 = vmul.f32 %v1249, %v1253
  %1257 = vrot.lane.b32.xlu0 %v1255, 64
  %v1258 = vpop.permute.xlu0 %1257
  %v1260 = vadd.f32 %v1170, %v1258
  %v1261 = vtanh.pop %v1260
  %v1262 = vsub.f32 1.0, %v1249
  %1264 = vrot.lane.b32.xlu0 %v1261, 96
  %v1265 = vpop.permute.xlu0 %1264
  %v1267 = vmul.f32 %v1262, %v1265
  %v1268 = vmul.f32 %v1249, %v1060
  %v1269 = vadd.f32 %v1267, %v1268
  %v1270 = vld [vmem:[#allocation3 + $0x18] sm:$0xff]
  %1272 = vrot.lane.b32.xlu0 %v1163, 96
  %v1273 = vpop.permute.xlu0 %1272
  %v1274 = vsel %vm321, %v1273, 0
  %1276 = vmatprep.subr.mxu0 0.0
  %1277 = vmatpush1.msra.mxu0 %v314
  %1278 = vmatprep.subr.mxu0 0.0
  %1279 = vmatpush1.msra.mxu0 %v315
  %1280 = vmatprep.subr.mxu0 0.0
  %1281 = vmatpush1.msra.mxu0 %v316
  %1282 = vmatprep.subr.mxu0 0.0
  %1283 = vmatpush1.msra.mxu0 %v317
  %1284 = vmatprep.subr.mxu0 0.0
  %1285 = vmatpush1.msra.mxu0 0.0
  %1286 = vmatprep.subr.mxu0 0.0
  %1287 = vmatpush1.msra.mxu0 0.0
  %1288 = vmatprep.subr.mxu0 0.0
  %1289 = vmatpush1.msra.mxu0 0.0
  %1290 = vmatprep.subr.mxu0 0.0
  %1291 = vmatpush1.msra.mxu0 0.0
  %1292 = vmatprep.subr.mxu0 0.0
  %1293 = vmatpush1.msra.mxu0 0.0
  %1294 = vmatprep.subr.mxu0 0.0
  %1295 = vmatpush1.msra.mxu0 0.0
  %1296 = vmatprep.subr.mxu0 0.0
  %1297 = vmatpush1.msra.mxu0 0.0
  %1298 = vmatprep.subr.mxu0 0.0
  %1299 = vmatpush1.msra.mxu0 0.0
  %1300 = vmatprep.subr.mxu0 0.0
  %1301 = vmatpush1.msra.mxu0 0.0
  %1302 = vmatprep.subr.mxu0 0.0
  %1303 = vmatpush1.msra.mxu0 0.0
  %1304 = vmatprep.subr.mxu0 0.0
  %1305 = vmatpush1.msra.mxu0 0.0
  %1306 = vmatprep.subr.mxu0 0.0
  %1307 = vmatpush1.msra.mxu0 0.0
  %1308 = vmatprep.subr.mxu0 0.0
  %1309 = vmatpush1.msra.mxu0 0.0
  %1310 = vmatprep.subr.mxu0 0.0
  %1311 = vmatpush1.msra.mxu0 0.0
  %1312 = vmatprep.subr.mxu0 0.0
  %1313 = vmatpush1.msra.mxu0 0.0
  %1314 = vmatprep.subr.mxu0 0.0
  %1315 = vmatpush1.msra.mxu0 0.0
  %1316 = vmatprep.subr.mxu0 0.0
  %1317 = vmatpush1.msra.mxu0 0.0
  %1318 = vmatprep.subr.mxu0 0.0
  %1319 = vmatpush1.msra.mxu0 0.0
  %1320 = vmatprep.subr.mxu0 0.0
  %1321 = vmatpush1.msra.mxu0 0.0
  %1322 = vmatprep.subr.mxu0 0.0
  %1323 = vmatpush1.msra.mxu0 0.0
  %1324 = vmatprep.subr.mxu0 0.0
  %1325 = vmatpush1.msra.mxu0 0.0
  %1326 = vmatprep.subr.mxu0 0.0
  %1327 = vmatpush1.msra.mxu0 0.0
  %1328 = vmatprep.subr.mxu0 0.0
  %1329 = vmatpush1.msra.mxu0 0.0
  %1330 = vmatprep.subr.mxu0 0.0
  %1331 = vmatpush1.msra.mxu0 0.0
  %1332 = vmatprep.subr.mxu0 0.0
  %1333 = vmatpush1.msra.mxu0 0.0
  %1334 = vmatprep.subr.mxu0 0.0
  %1335 = vmatpush1.msra.mxu0 0.0
  %1336 = vmatprep.subr.mxu0 0.0
  %1337 = vmatpush1.msra.mxu0 0.0
  %1338 = vmatprep.subr.mxu0 0.0
  %1339 = vmatpush1.msra.mxu0 0.0
  %1340 = vmatprep.mubr.f32.mxu0 0.0
  %1341 = vmatmul.mubr.f32.gmra.mrb[0].mxu0 %v1274
  %v1342 = vpop.f32.mrb[0].mxu0
  %v1343 = vadd.f32 0.0, %v1342
  %v1344 = vpop.f32.mrb[0].mxu0
  %1345 = vdwg.mxu0
  %v1346 = vadd.f32 %v1270, %v1343
  %v1347 = vxor.u32 %v1346, 2147483648
  %v1348 = vmul.f32 %v1347, 1.442695
  %v1349 = vpow.pop %v1348
  %v1350 = vadd.f32 %v1349, 1.0
  %v1351 = vrcp.pop %v1350
  %v1352 = vmul.f32 1.0, %v1351
  %v1353 = vadd.f32 %v1343, %v514
  %1355 = vrot.lane.b32.xlu0 %v1353, 64
  %v1356 = vpop.permute.xlu0 %1355
  %v1358 = vmul.f32 %v1352, %v1356
  %1360 = vrot.lane.b32.xlu0 %v1358, 64
  %v1361 = vpop.permute.xlu0 %1360
  %v1363 = vadd.f32 %v1270, %v1361
  %v1364 = vtanh.pop %v1363
  %v1365 = vsub.f32 1.0, %v1352
  %1367 = vrot.lane.b32.xlu0 %v1364, 96
  %v1368 = vpop.permute.xlu0 %1367
  %v1370 = vmul.f32 %v1365, %v1368
  %v1371 = vmul.f32 %v1352, %v1163
  %v1372 = vadd.f32 %v1370, %v1371
  %1374 = vrot.lane.b32.xlu0 %v1269, 96
  %v1375 = vpop.permute.xlu0 %1374
  %1377 = vst.msk [vmem:[%s9 + $0x20] sm:$0xff] %vm321, %v1375
  %1378 = vst.msk [vmem:[%s9 + $0x18] sm:$0xff] %vm541, %v1372
  %v1379 = vld [vmem:[#allocation2 + $0x28] sm:$0xff]
  %v1380 = vsel %vm321, %v1375, 0
  %1382 = vmatprep.subr.mxu0 0.0
  %1383 = vmatpush1.msra.mxu0 %v310
  %1384 = vmatprep.subr.mxu0 0.0
  %1385 = vmatpush1.msra.mxu0 %v311
  %1386 = vmatprep.subr.mxu0 0.0
  %1387 = vmatpush1.msra.mxu0 %v312
  %1388 = vmatprep.subr.mxu0 0.0
  %1389 = vmatpush1.msra.mxu0 %v313
  %1390 = vmatprep.subr.mxu0 0.0
  %1391 = vmatpush1.msra.mxu0 0.0
  %1392 = vmatprep.subr.mxu0 0.0
  %1393 = vmatpush1.msra.mxu0 0.0
  %1394 = vmatprep.subr.mxu0 0.0
  %1395 = vmatpush1.msra.mxu0 0.0
  %1396 = vmatprep.subr.mxu0 0.0
  %1397 = vmatpush1.msra.mxu0 0.0
  %1398 = vmatprep.subr.mxu0 0.0
  %1399 = vmatpush1.msra.mxu0 0.0
  %1400 = vmatprep.subr.mxu0 0.0
  %1401 = vmatpush1.msra.mxu0 0.0
  %1402 = vmatprep.subr.mxu0 0.0
  %1403 = vmatpush1.msra.mxu0 0.0
  %1404 = vmatprep.subr.mxu0 0.0
  %1405 = vmatpush1.msra.mxu0 0.0
  %1406 = vmatprep.subr.mxu0 0.0
  %1407 = vmatpush1.msra.mxu0 0.0
  %1408 = vmatprep.subr.mxu0 0.0
  %1409 = vmatpush1.msra.mxu0 0.0
  %1410 = vmatprep.subr.mxu0 0.0
  %1411 = vmatpush1.msra.mxu0 0.0
  %1412 = vmatprep.subr.mxu0 0.0
  %1413 = vmatpush1.msra.mxu0 0.0
  %1414 = vmatprep.subr.mxu0 0.0
  %1415 = vmatpush1.msra.mxu0 0.0
  %1416 = vmatprep.subr.mxu0 0.0
  %1417 = vmatpush1.msra.mxu0 0.0
  %1418 = vmatprep.subr.mxu0 0.0
  %1419 = vmatpush1.msra.mxu0 0.0
  %1420 = vmatprep.subr.mxu0 0.0
  %1421 = vmatpush1.msra.mxu0 0.0
  %1422 = vmatprep.subr.mxu0 0.0
  %1423 = vmatpush1.msra.mxu0 0.0
  %1424 = vmatprep.subr.mxu0 0.0
  %1425 = vmatpush1.msra.mxu0 0.0
  %1426 = vmatprep.subr.mxu0 0.0
  %1427 = vmatpush1.msra.mxu0 0.0
  %1428 = vmatprep.subr.mxu0 0.0
  %1429 = vmatpush1.msra.mxu0 0.0
  %1430 = vmatprep.subr.mxu0 0.0
  %1431 = vmatpush1.msra.mxu0 0.0
  %1432 = vmatprep.subr.mxu0 0.0
  %1433 = vmatpush1.msra.mxu0 0.0
  %1434 = vmatprep.subr.mxu0 0.0
  %1435 = vmatpush1.msra.mxu0 0.0
  %1436 = vmatprep.subr.mxu0 0.0
  %1437 = vmatpush1.msra.mxu0 0.0
  %1438 = vmatprep.subr.mxu0 0.0
  %1439 = vmatpush1.msra.mxu0 0.0
  %1440 = vmatprep.subr.mxu0 0.0
  %1441 = vmatpush1.msra.mxu0 0.0
  %1442 = vmatprep.subr.mxu0 0.0
  %1443 = vmatpush1.msra.mxu0 0.0
  %1444 = vmatprep.subr.mxu0 0.0
  %1445 = vmatpush1.msra.mxu0 0.0
  %1446 = vmatprep.mubr.f32.mxu0 0.0
  %1447 = vmatmul.mubr.f32.gmra.mrb[0].mxu0 %v1380
  %v1448 = vpop.f32.mrb[0].mxu0
  %v1449 = vadd.f32 0.0, %v1448
  %v1450 = vpop.f32.mrb[0].mxu0
  %1451 = vdwg.mxu0
  %v1452 = vadd.f32 %v1379, %v1449
  %v1453 = vxor.u32 %v1452, 2147483648
  %v1454 = vmul.f32 %v1453, 1.442695
  %v1455 = vpow.pop %v1454
  %v1456 = vadd.f32 %v1455, 1.0
  %v1457 = vrcp.pop %v1456
  %v1458 = vmul.f32 1.0, %v1457
  %v1459 = vadd.f32 %v1449, %v408
  %1461 = vrot.lane.b32.xlu0 %v1459, 64
  %v1462 = vpop.permute.xlu0 %1461
  %v1464 = vmul.f32 %v1458, %v1462
  %1466 = vrot.lane.b32.xlu0 %v1464, 64
  %v1467 = vpop.permute.xlu0 %1466
  %v1469 = vadd.f32 %v1379, %v1467
  %v1470 = vtanh.pop %v1469
  %v1471 = vsub.f32 1.0, %v1458
  %1473 = vrot.lane.b32.xlu0 %v1470, 96
  %v1474 = vpop.permute.xlu0 %1473
  %v1476 = vmul.f32 %v1471, %v1474
  %v1477 = vmul.f32 %v1458, %v1269
  %v1478 = vadd.f32 %v1476, %v1477
  %v1479 = vld [vmem:[#allocation3 + $0x10] sm:$0xff]
  %1481 = vrot.lane.b32.xlu0 %v1372, 96
  %v1482 = vpop.permute.xlu0 %1481
  %v1483 = vsel %vm321, %v1482, 0
  %1485 = vmatprep.subr.mxu0 0.0
  %1486 = vmatpush1.msra.mxu0 %v314
  %1487 = vmatprep.subr.mxu0 0.0
  %1488 = vmatpush1.msra.mxu0 %v315
  %1489 = vmatprep.subr.mxu0 0.0
  %1490 = vmatpush1.msra.mxu0 %v316
  %1491 = vmatprep.subr.mxu0 0.0
  %1492 = vmatpush1.msra.mxu0 %v317
  %1493 = vmatprep.subr.mxu0 0.0
  %1494 = vmatpush1.msra.mxu0 0.0
  %1495 = vmatprep.subr.mxu0 0.0
  %1496 = vmatpush1.msra.mxu0 0.0
  %1497 = vmatprep.subr.mxu0 0.0
  %1498 = vmatpush1.msra.mxu0 0.0
  %1499 = vmatprep.subr.mxu0 0.0
  %1500 = vmatpush1.msra.mxu0 0.0
  %1501 = vmatprep.subr.mxu0 0.0
  %1502 = vmatpush1.msra.mxu0 0.0
  %1503 = vmatprep.subr.mxu0 0.0
  %1504 = vmatpush1.msra.mxu0 0.0
  %1505 = vmatprep.subr.mxu0 0.0
  %1506 = vmatpush1.msra.mxu0 0.0
  %1507 = vmatprep.subr.mxu0 0.0
  %1508 = vmatpush1.msra.mxu0 0.0
  %1509 = vmatprep.subr.mxu0 0.0
  %1510 = vmatpush1.msra.mxu0 0.0
  %1511 = vmatprep.subr.mxu0 0.0
  %1512 = vmatpush1.msra.mxu0 0.0
  %1513 = vmatprep.subr.mxu0 0.0
  %1514 = vmatpush1.msra.mxu0 0.0
  %1515 = vmatprep.subr.mxu0 0.0
  %1516 = vmatpush1.msra.mxu0 0.0
  %1517 = vmatprep.subr.mxu0 0.0
  %1518 = vmatpush1.msra.mxu0 0.0
  %1519 = vmatprep.subr.mxu0 0.0
  %1520 = vmatpush1.msra.mxu0 0.0
  %1521 = vmatprep.subr.mxu0 0.0
  %1522 = vmatpush1.msra.mxu0 0.0
  %1523 = vmatprep.subr.mxu0 0.0
  %1524 = vmatpush1.msra.mxu0 0.0
  %1525 = vmatprep.subr.mxu0 0.0
  %1526 = vmatpush1.msra.mxu0 0.0
  %1527 = vmatprep.subr.mxu0 0.0
  %1528 = vmatpush1.msra.mxu0 0.0
  %1529 = vmatprep.subr.mxu0 0.0
  %1530 = vmatpush1.msra.mxu0 0.0
  %1531 = vmatprep.subr.mxu0 0.0
  %1532 = vmatpush1.msra.mxu0 0.0
  %1533 = vmatprep.subr.mxu0 0.0
  %1534 = vmatpush1.msra.mxu0 0.0
  %1535 = vmatprep.subr.mxu0 0.0
  %1536 = vmatpush1.msra.mxu0 0.0
  %1537 = vmatprep.subr.mxu0 0.0
  %1538 = vmatpush1.msra.mxu0 0.0
  %1539 = vmatprep.subr.mxu0 0.0
  %1540 = vmatpush1.msra.mxu0 0.0
  %1541 = vmatprep.subr.mxu0 0.0
  %1542 = vmatpush1.msra.mxu0 0.0
  %1543 = vmatprep.subr.mxu0 0.0
  %1544 = vmatpush1.msra.mxu0 0.0
  %1545 = vmatprep.subr.mxu0 0.0
  %1546 = vmatpush1.msra.mxu0 0.0
  %1547 = vmatprep.subr.mxu0 0.0
  %1548 = vmatpush1.msra.mxu0 0.0
  %1549 = vmatprep.mubr.f32.mxu0 0.0
  %1550 = vmatmul.mubr.f32.gmra.mrb[0].mxu0 %v1483
  %v1551 = vpop.f32.mrb[0].mxu0
  %v1552 = vadd.f32 0.0, %v1551
  %v1553 = vpop.f32.mrb[0].mxu0
  %1554 = vdwg.mxu0
  %v1555 = vadd.f32 %v1479, %v1552
  %v1556 = vxor.u32 %v1555, 2147483648
  %v1557 = vmul.f32 %v1556, 1.442695
  %v1558 = vpow.pop %v1557
  %v1559 = vadd.f32 %v1558, 1.0
  %v1560 = vrcp.pop %v1559
  %v1561 = vmul.f32 1.0, %v1560
  %v1562 = vadd.f32 %v1552, %v514
  %1564 = vrot.lane.b32.xlu0 %v1562, 64
  %v1565 = vpop.permute.xlu0 %1564
  %v1567 = vmul.f32 %v1561, %v1565
  %1569 = vrot.lane.b32.xlu0 %v1567, 64
  %v1570 = vpop.permute.xlu0 %1569
  %v1572 = vadd.f32 %v1479, %v1570
  %v1573 = vtanh.pop %v1572
  %v1574 = vsub.f32 1.0, %v1561
  %1576 = vrot.lane.b32.xlu0 %v1573, 96
  %v1577 = vpop.permute.xlu0 %1576
  %v1579 = vmul.f32 %v1574, %v1577
  %v1580 = vmul.f32 %v1561, %v1372
  %v1581 = vadd.f32 %v1579, %v1580
  %1583 = vrot.lane.b32.xlu0 %v1478, 96
  %v1584 = vpop.permute.xlu0 %1583
  %1586 = vst.msk [vmem:[%s9 + $0x28] sm:$0xff] %vm321, %v1584
  %1587 = vst.msk [vmem:[%s9 + $0x10] sm:$0xff] %vm541, %v1581
  %v1588 = vld [vmem:[#allocation2 + $0x30] sm:$0xff]
  %v1589 = vsel %vm321, %v1584, 0
  %1591 = vmatprep.subr.mxu0 0.0
  %1592 = vmatpush1.msra.mxu0 %v310
  %1593 = vmatprep.subr.mxu0 0.0
  %1594 = vmatpush1.msra.mxu0 %v311
  %1595 = vmatprep.subr.mxu0 0.0
  %1596 = vmatpush1.msra.mxu0 %v312
  %1597 = vmatprep.subr.mxu0 0.0
  %1598 = vmatpush1.msra.mxu0 %v313
  %1599 = vmatprep.subr.mxu0 0.0
  %1600 = vmatpush1.msra.mxu0 0.0
  %1601 = vmatprep.subr.mxu0 0.0
  %1602 = vmatpush1.msra.mxu0 0.0
  %1603 = vmatprep.subr.mxu0 0.0
  %1604 = vmatpush1.msra.mxu0 0.0
  %1605 = vmatprep.subr.mxu0 0.0
  %1606 = vmatpush1.msra.mxu0 0.0
  %1607 = vmatprep.subr.mxu0 0.0
  %1608 = vmatpush1.msra.mxu0 0.0
  %1609 = vmatprep.subr.mxu0 0.0
  %1610 = vmatpush1.msra.mxu0 0.0
  %1611 = vmatprep.subr.mxu0 0.0
  %1612 = vmatpush1.msra.mxu0 0.0
  %1613 = vmatprep.subr.mxu0 0.0
  %1614 = vmatpush1.msra.mxu0 0.0
  %1615 = vmatprep.subr.mxu0 0.0
  %1616 = vmatpush1.msra.mxu0 0.0
  %1617 = vmatprep.subr.mxu0 0.0
  %1618 = vmatpush1.msra.mxu0 0.0
  %1619 = vmatprep.subr.mxu0 0.0
  %1620 = vmatpush1.msra.mxu0 0.0
  %1621 = vmatprep.subr.mxu0 0.0
  %1622 = vmatpush1.msra.mxu0 0.0
  %1623 = vmatprep.subr.mxu0 0.0
  %1624 = vmatpush1.msra.mxu0 0.0
  %1625 = vmatprep.subr.mxu0 0.0
  %1626 = vmatpush1.msra.mxu0 0.0
  %1627 = vmatprep.subr.mxu0 0.0
  %1628 = vmatpush1.msra.mxu0 0.0
  %1629 = vmatprep.subr.mxu0 0.0
  %1630 = vmatpush1.msra.mxu0 0.0
  %1631 = vmatprep.subr.mxu0 0.0
  %1632 = vmatpush1.msra.mxu0 0.0
  %1633 = vmatprep.subr.mxu0 0.0
  %1634 = vmatpush1.msra.mxu0 0.0
  %1635 = vmatprep.subr.mxu0 0.0
  %1636 = vmatpush1.msra.mxu0 0.0
  %1637 = vmatprep.subr.mxu0 0.0
  %1638 = vmatpush1.msra.mxu0 0.0
  %1639 = vmatprep.subr.mxu0 0.0
  %1640 = vmatpush1.msra.mxu0 0.0
  %1641 = vmatprep.subr.mxu0 0.0
  %1642 = vmatpush1.msra.mxu0 0.0
  %1643 = vmatprep.subr.mxu0 0.0
  %1644 = vmatpush1.msra.mxu0 0.0
  %1645 = vmatprep.subr.mxu0 0.0
  %1646 = vmatpush1.msra.mxu0 0.0
  %1647 = vmatprep.subr.mxu0 0.0
  %1648 = vmatpush1.msra.mxu0 0.0
  %1649 = vmatprep.subr.mxu0 0.0
  %1650 = vmatpush1.msra.mxu0 0.0
  %1651 = vmatprep.subr.mxu0 0.0
  %1652 = vmatpush1.msra.mxu0 0.0
  %1653 = vmatprep.subr.mxu0 0.0
  %1654 = vmatpush1.msra.mxu0 0.0
  %1655 = vmatprep.mubr.f32.mxu0 0.0
  %1656 = vmatmul.mubr.f32.gmra.mrb[0].mxu0 %v1589
  %v1657 = vpop.f32.mrb[0].mxu0
  %v1658 = vadd.f32 0.0, %v1657
  %v1659 = vpop.f32.mrb[0].mxu0
  %1660 = vdwg.mxu0
  %v1661 = vadd.f32 %v1588, %v1658
  %v1662 = vxor.u32 %v1661, 2147483648
  %v1663 = vmul.f32 %v1662, 1.442695
  %v1664 = vpow.pop %v1663
  %v1665 = vadd.f32 %v1664, 1.0
  %v1666 = vrcp.pop %v1665
  %v1667 = vmul.f32 1.0, %v1666
  %v1668 = vadd.f32 %v1658, %v408
  %1670 = vrot.lane.b32.xlu0 %v1668, 64
  %v1671 = vpop.permute.xlu0 %1670
  %v1673 = vmul.f32 %v1667, %v1671
  %1675 = vrot.lane.b32.xlu0 %v1673, 64
  %v1676 = vpop.permute.xlu0 %1675
  %v1678 = vadd.f32 %v1588, %v1676
  %v1679 = vtanh.pop %v1678
  %v1680 = vsub.f32 1.0, %v1667
  %1682 = vrot.lane.b32.xlu0 %v1679, 96
  %v1683 = vpop.permute.xlu0 %1682
  %v1685 = vmul.f32 %v1680, %v1683
  %v1686 = vmul.f32 %v1667, %v1478
  %v1687 = vadd.f32 %v1685, %v1686
  %v1688 = vld [vmem:[#allocation3 + $0x8] sm:$0xff]
  %1690 = vrot.lane.b32.xlu0 %v1581, 96
  %v1691 = vpop.permute.xlu0 %1690
  %v1692 = vsel %vm321, %v1691, 0
  %1694 = vmatprep.subr.mxu0 0.0
  %1695 = vmatpush1.msra.mxu0 %v314
  %1696 = vmatprep.subr.mxu0 0.0
  %1697 = vmatpush1.msra.mxu0 %v315
  %1698 = vmatprep.subr.mxu0 0.0
  %1699 = vmatpush1.msra.mxu0 %v316
  %1700 = vmatprep.subr.mxu0 0.0
  %1701 = vmatpush1.msra.mxu0 %v317
  %1702 = vmatprep.subr.mxu0 0.0
  %1703 = vmatpush1.msra.mxu0 0.0
  %1704 = vmatprep.subr.mxu0 0.0
  %1705 = vmatpush1.msra.mxu0 0.0
  %1706 = vmatprep.subr.mxu0 0.0
  %1707 = vmatpush1.msra.mxu0 0.0
  %1708 = vmatprep.subr.mxu0 0.0
  %1709 = vmatpush1.msra.mxu0 0.0
  %1710 = vmatprep.subr.mxu0 0.0
  %1711 = vmatpush1.msra.mxu0 0.0
  %1712 = vmatprep.subr.mxu0 0.0
  %1713 = vmatpush1.msra.mxu0 0.0
  %1714 = vmatprep.subr.mxu0 0.0
  %1715 = vmatpush1.msra.mxu0 0.0
  %1716 = vmatprep.subr.mxu0 0.0
  %1717 = vmatpush1.msra.mxu0 0.0
  %1718 = vmatprep.subr.mxu0 0.0
  %1719 = vmatpush1.msra.mxu0 0.0
  %1720 = vmatprep.subr.mxu0 0.0
  %1721 = vmatpush1.msra.mxu0 0.0
  %1722 = vmatprep.subr.mxu0 0.0
  %1723 = vmatpush1.msra.mxu0 0.0
  %1724 = vmatprep.subr.mxu0 0.0
  %1725 = vmatpush1.msra.mxu0 0.0
  %1726 = vmatprep.subr.mxu0 0.0
  %1727 = vmatpush1.msra.mxu0 0.0
  %1728 = vmatprep.subr.mxu0 0.0
  %1729 = vmatpush1.msra.mxu0 0.0
  %1730 = vmatprep.subr.mxu0 0.0
  %1731 = vmatpush1.msra.mxu0 0.0
  %1732 = vmatprep.subr.mxu0 0.0
  %1733 = vmatpush1.msra.mxu0 0.0
  %1734 = vmatprep.subr.mxu0 0.0
  %1735 = vmatpush1.msra.mxu0 0.0
  %1736 = vmatprep.subr.mxu0 0.0
  %1737 = vmatpush1.msra.mxu0 0.0
  %1738 = vmatprep.subr.mxu0 0.0
  %1739 = vmatpush1.msra.mxu0 0.0
  %1740 = vmatprep.subr.mxu0 0.0
  %1741 = vmatpush1.msra.mxu0 0.0
  %1742 = vmatprep.subr.mxu0 0.0
  %1743 = vmatpush1.msra.mxu0 0.0
  %1744 = vmatprep.subr.mxu0 0.0
  %1745 = vmatpush1.msra.mxu0 0.0
  %1746 = vmatprep.subr.mxu0 0.0
  %1747 = vmatpush1.msra.mxu0 0.0
  %1748 = vmatprep.subr.mxu0 0.0
  %1749 = vmatpush1.msra.mxu0 0.0
  %1750 = vmatprep.subr.mxu0 0.0
  %1751 = vmatpush1.msra.mxu0 0.0
  %1752 = vmatprep.subr.mxu0 0.0
  %1753 = vmatpush1.msra.mxu0 0.0
  %1754 = vmatprep.subr.mxu0 0.0
  %1755 = vmatpush1.msra.mxu0 0.0
  %1756 = vmatprep.subr.mxu0 0.0
  %1757 = vmatpush1.msra.mxu0 0.0
  %1758 = vmatprep.mubr.f32.mxu0 0.0
  %1759 = vmatmul.mubr.f32.gmra.mrb[0].mxu0 %v1692
  %v1760 = vpop.f32.mrb[0].mxu0
  %v1761 = vadd.f32 0.0, %v1760
  %v1762 = vpop.f32.mrb[0].mxu0
  %1763 = vdwg.mxu0
  %v1764 = vadd.f32 %v1688, %v1761
  %v1765 = vxor.u32 %v1764, 2147483648
  %v1766 = vmul.f32 %v1765, 1.442695
  %v1767 = vpow.pop %v1766
  %v1768 = vadd.f32 %v1767, 1.0
  %v1769 = vrcp.pop %v1768
  %v1770 = vmul.f32 1.0, %v1769
  %v1771 = vadd.f32 %v1761, %v514
  %1773 = vrot.lane.b32.xlu0 %v1771, 64
  %v1774 = vpop.permute.xlu0 %1773
  %v1776 = vmul.f32 %v1770, %v1774
  %1778 = vrot.lane.b32.xlu0 %v1776, 64
  %v1779 = vpop.permute.xlu0 %1778
  %v1781 = vadd.f32 %v1688, %v1779
  %v1782 = vtanh.pop %v1781
  %v1783 = vsub.f32 1.0, %v1770
  %1785 = vrot.lane.b32.xlu0 %v1782, 96
  %v1786 = vpop.permute.xlu0 %1785
  %v1788 = vmul.f32 %v1783, %v1786
  %v1789 = vmul.f32 %v1770, %v1581
  %v1790 = vadd.f32 %v1788, %v1789
  %1792 = vrot.lane.b32.xlu0 %v1687, 96
  %v1793 = vpop.permute.xlu0 %1792
  %1795 = vst.msk [vmem:[%s9 + $0x30] sm:$0xff] %vm321, %v1793
  %1796 = vst.msk [vmem:[%s9 + $0x8] sm:$0xff] %vm541, %v1790
  %v1797 = vld [vmem:[#allocation2 + $0x38] sm:$0xff]
  %v1798 = vsel %vm321, %v1793, 0
  %1800 = vmatprep.subr.mxu0 0.0
  %1801 = vmatpush1.msra.mxu0 %v310
  %1802 = vmatprep.subr.mxu0 0.0
  %1803 = vmatpush1.msra.mxu0 %v311
  %1804 = vmatprep.subr.mxu0 0.0
  %1805 = vmatpush1.msra.mxu0 %v312
  %1806 = vmatprep.subr.mxu0 0.0
  %1807 = vmatpush1.msra.mxu0 %v313
  %1808 = vmatprep.subr.mxu0 0.0
  %1809 = vmatpush1.msra.mxu0 0.0
  %1810 = vmatprep.subr.mxu0 0.0
  %1811 = vmatpush1.msra.mxu0 0.0
  %1812 = vmatprep.subr.mxu0 0.0
  %1813 = vmatpush1.msra.mxu0 0.0
  %1814 = vmatprep.subr.mxu0 0.0
  %1815 = vmatpush1.msra.mxu0 0.0
  %1816 = vmatprep.subr.mxu0 0.0
  %1817 = vmatpush1.msra.mxu0 0.0
  %1818 = vmatprep.subr.mxu0 0.0
  %1819 = vmatpush1.msra.mxu0 0.0
  %1820 = vmatprep.subr.mxu0 0.0
  %1821 = vmatpush1.msra.mxu0 0.0
  %1822 = vmatprep.subr.mxu0 0.0
  %1823 = vmatpush1.msra.mxu0 0.0
  %1824 = vmatprep.subr.mxu0 0.0
  %1825 = vmatpush1.msra.mxu0 0.0
  %1826 = vmatprep.subr.mxu0 0.0
  %1827 = vmatpush1.msra.mxu0 0.0
  %1828 = vmatprep.subr.mxu0 0.0
  %1829 = vmatpush1.msra.mxu0 0.0
  %1830 = vmatprep.subr.mxu0 0.0
  %1831 = vmatpush1.msra.mxu0 0.0
  %1832 = vmatprep.subr.mxu0 0.0
  %1833 = vmatpush1.msra.mxu0 0.0
  %1834 = vmatprep.subr.mxu0 0.0
  %1835 = vmatpush1.msra.mxu0 0.0
  %1836 = vmatprep.subr.mxu0 0.0
  %1837 = vmatpush1.msra.mxu0 0.0
  %1838 = vmatprep.subr.mxu0 0.0
  %1839 = vmatpush1.msra.mxu0 0.0
  %1840 = vmatprep.subr.mxu0 0.0
  %1841 = vmatpush1.msra.mxu0 0.0
  %1842 = vmatprep.subr.mxu0 0.0
  %1843 = vmatpush1.msra.mxu0 0.0
  %1844 = vmatprep.subr.mxu0 0.0
  %1845 = vmatpush1.msra.mxu0 0.0
  %1846 = vmatprep.subr.mxu0 0.0
  %1847 = vmatpush1.msra.mxu0 0.0
  %1848 = vmatprep.subr.mxu0 0.0
  %1849 = vmatpush1.msra.mxu0 0.0
  %1850 = vmatprep.subr.mxu0 0.0
  %1851 = vmatpush1.msra.mxu0 0.0
  %1852 = vmatprep.subr.mxu0 0.0
  %1853 = vmatpush1.msra.mxu0 0.0
  %1854 = vmatprep.subr.mxu0 0.0
  %1855 = vmatpush1.msra.mxu0 0.0
  %1856 = vmatprep.subr.mxu0 0.0
  %1857 = vmatpush1.msra.mxu0 0.0
  %1858 = vmatprep.subr.mxu0 0.0
  %1859 = vmatpush1.msra.mxu0 0.0
  %1860 = vmatprep.subr.mxu0 0.0
  %1861 = vmatpush1.msra.mxu0 0.0
  %1862 = vmatprep.subr.mxu0 0.0
  %1863 = vmatpush1.msra.mxu0 0.0
  %1864 = vmatprep.mubr.f32.mxu0 0.0
  %1865 = vmatmul.mubr.f32.gmra.mrb[0].mxu0 %v1798
  %v1866 = vpop.f32.mrb[0].mxu0
  %v1867 = vadd.f32 0.0, %v1866
  %v1868 = vpop.f32.mrb[0].mxu0
  %1869 = vdwg.mxu0
  %v1870 = vadd.f32 %v1797, %v1867
  %v1871 = vxor.u32 %v1870, 2147483648
  %v1872 = vmul.f32 %v1871, 1.442695
  %v1873 = vpow.pop %v1872
  %v1874 = vadd.f32 %v1873, 1.0
  %v1875 = vrcp.pop %v1874
  %v1876 = vmul.f32 1.0, %v1875
  %v1877 = vadd.f32 %v1867, %v408
  %1879 = vrot.lane.b32.xlu0 %v1877, 64
  %v1880 = vpop.permute.xlu0 %1879
  %v1882 = vmul.f32 %v1876, %v1880
  %1884 = vrot.lane.b32.xlu0 %v1882, 64
  %v1885 = vpop.permute.xlu0 %1884
  %v1887 = vadd.f32 %v1797, %v1885
  %v1888 = vtanh.pop %v1887
  %v1889 = vsub.f32 1.0, %v1876
  %1891 = vrot.lane.b32.xlu0 %v1888, 96
  %v1892 = vpop.permute.xlu0 %1891
  %v1894 = vmul.f32 %v1889, %v1892
  %v1895 = vmul.f32 %v1876, %v1687
  %v1896 = vadd.f32 %v1894, %v1895
  %v1897 = vld [vmem:[#allocation3] sm:$0xff]
  %1899 = vrot.lane.b32.xlu0 %v1790, 96
  %v1900 = vpop.permute.xlu0 %1899
  %v1901 = vsel %vm321, %v1900, 0
  %1903 = vmatprep.subr.mxu0 0.0
  %1904 = vmatpush1.msra.mxu0 %v314
  %1905 = vmatprep.subr.mxu0 0.0
  %1906 = vmatpush1.msra.mxu0 %v315
  %1907 = vmatprep.subr.mxu0 0.0
  %1908 = vmatpush1.msra.mxu0 %v316
  %1909 = vmatprep.subr.mxu0 0.0
  %1910 = vmatpush1.msra.mxu0 %v317
  %1911 = vmatprep.subr.mxu0 0.0
  %1912 = vmatpush1.msra.mxu0 0.0
  %1913 = vmatprep.subr.mxu0 0.0
  %1914 = vmatpush1.msra.mxu0 0.0
  %1915 = vmatprep.subr.mxu0 0.0
  %1916 = vmatpush1.msra.mxu0 0.0
  %1917 = vmatprep.subr.mxu0 0.0
  %1918 = vmatpush1.msra.mxu0 0.0
  %1919 = vmatprep.subr.mxu0 0.0
  %1920 = vmatpush1.msra.mxu0 0.0
  %1921 = vmatprep.subr.mxu0 0.0
  %1922 = vmatpush1.msra.mxu0 0.0
  %1923 = vmatprep.subr.mxu0 0.0
  %1924 = vmatpush1.msra.mxu0 0.0
  %1925 = vmatprep.subr.mxu0 0.0
  %1926 = vmatpush1.msra.mxu0 0.0
  %1927 = vmatprep.subr.mxu0 0.0
  %1928 = vmatpush1.msra.mxu0 0.0
  %1929 = vmatprep.subr.mxu0 0.0
  %1930 = vmatpush1.msra.mxu0 0.0
  %1931 = vmatprep.subr.mxu0 0.0
  %1932 = vmatpush1.msra.mxu0 0.0
  %1933 = vmatprep.subr.mxu0 0.0
  %1934 = vmatpush1.msra.mxu0 0.0
  %1935 = vmatprep.subr.mxu0 0.0
  %1936 = vmatpush1.msra.mxu0 0.0
  %1937 = vmatprep.subr.mxu0 0.0
  %1938 = vmatpush1.msra.mxu0 0.0
  %1939 = vmatprep.subr.mxu0 0.0
  %1940 = vmatpush1.msra.mxu0 0.0
  %1941 = vmatprep.subr.mxu0 0.0
  %1942 = vmatpush1.msra.mxu0 0.0
  %1943 = vmatprep.subr.mxu0 0.0
  %1944 = vmatpush1.msra.mxu0 0.0
  %1945 = vmatprep.subr.mxu0 0.0
  %1946 = vmatpush1.msra.mxu0 0.0
  %1947 = vmatprep.subr.mxu0 0.0
  %1948 = vmatpush1.msra.mxu0 0.0
  %1949 = vmatprep.subr.mxu0 0.0
  %1950 = vmatpush1.msra.mxu0 0.0
  %1951 = vmatprep.subr.mxu0 0.0
  %1952 = vmatpush1.msra.mxu0 0.0
  %1953 = vmatprep.subr.mxu0 0.0
  %1954 = vmatpush1.msra.mxu0 0.0
  %1955 = vmatprep.subr.mxu0 0.0
  %1956 = vmatpush1.msra.mxu0 0.0
  %1957 = vmatprep.subr.mxu0 0.0
  %1958 = vmatpush1.msra.mxu0 0.0
  %1959 = vmatprep.subr.mxu0 0.0
  %1960 = vmatpush1.msra.mxu0 0.0
  %1961 = vmatprep.subr.mxu0 0.0
  %1962 = vmatpush1.msra.mxu0 0.0
  %1963 = vmatprep.subr.mxu0 0.0
  %1964 = vmatpush1.msra.mxu0 0.0
  %1965 = vmatprep.subr.mxu0 0.0
  %1966 = vmatpush1.msra.mxu0 0.0
  %1967 = vmatprep.mubr.f32.mxu0 0.0
  %1968 = vmatmul.mubr.f32.gmra.mrb[0].mxu0 %v1901
  %v1969 = vpop.f32.mrb[0].mxu0
  %v1970 = vadd.f32 0.0, %v1969
  %v1971 = vpop.f32.mrb[0].mxu0
  %1972 = vdwg.mxu0
  %v1973 = vadd.f32 %v1897, %v1970
  %v1974 = vxor.u32 %v1973, 2147483648
  %v1975 = vmul.f32 %v1974, 1.442695
  %v1976 = vpow.pop %v1975
  %v1977 = vadd.f32 %v1976, 1.0
  %v1978 = vrcp.pop %v1977
  %v1979 = vmul.f32 1.0, %v1978
  %v1980 = vadd.f32 %v1970, %v514
  %1982 = vrot.lane.b32.xlu0 %v1980, 64
  %v1983 = vpop.permute.xlu0 %1982
  %v1985 = vmul.f32 %v1979, %v1983
  %1987 = vrot.lane.b32.xlu0 %v1985, 64
  %v1988 = vpop.permute.xlu0 %1987
  %v1990 = vadd.f32 %v1897, %v1988
  %v1991 = vtanh.pop %v1990
  %v1992 = vsub.f32 1.0, %v1979
  %1994 = vrot.lane.b32.xlu0 %v1991, 96
  %v1995 = vpop.permute.xlu0 %1994
  %v1997 = vmul.f32 %v1992, %v1995
  %v1998 = vmul.f32 %v1979, %v1790
  %v1999 = vadd.f32 %v1997, %v1998
  %2001 = vrot.lane.b32.xlu0 %v1896, 96
  %v2002 = vpop.permute.xlu0 %2001
  %2004 = vst.msk [vmem:[%s9 + $0x38] sm:$0xff] %vm321, %v2002
  %2005 = vst.msk [vmem:[%s9] sm:$0xff] %vm541, %v1999
  // Predicated region
  $region38: #{encoder_bigru_forward.2} parent=0 // pred_check
    _
  $region39: #{encoder_bigru_forward.2} parent=0 // pred_check_branch
    %2007 = sbr.rel (0) target = $region41
  $region40: #{encoder_bigru_forward.2} parent=0 // pred_region
    _
  $region41: #{encoder_bigru_forward.2} parent=0 // pred_fallthru
    _
  // Predicated region
  $region42: #{encoder_bigru_forward.2} parent=0 // pred_check
    _
  $region43: #{encoder_bigru_forward.2} parent=0 // pred_check_branch
    %2009 = sbr.rel (0) target = $region45
  $region44: #{encoder_bigru_forward.2} parent=0 // pred_region
    _
  $region45: #{encoder_bigru_forward.2} parent=0 // pred_fallthru
    _

</llo_original>
